<compile_context>
chip_gen: v7x
topology: tpu7x:2x2x1
jax: 0.10.0
libtpu: 0.0.40
codegen_flags: <defaults>
</compile_context>

<pallas_src>
import functools

import jax
import jax.numpy as jnp
import numpy as np
from jax import lax
from jax.experimental import pallas as pl
from jax.experimental.pallas import tpu as pltpu


# -----------------------------------------------------------------------------
# Pallas kernel.
# Grid = (nB batch tiles [parallel], nT time chunks [arbitrary, sequential]).
# Per grid step the kernel sees:
#   forward  x chunk  = time chunk  ti          (processed t = 0 .. Tt-1)
#   backward x chunk  = time chunk  nT-1-ti     (processed t = Tt-1 .. 0)
# so both recurrences advance one chunk per grid step; h/c state per direction
# is carried across grid steps in VMEM scratch and re-zeroed at ti == 0.
# -----------------------------------------------------------------------------
def _bilstm_kernel(x_f_ref, x_b_ref,                     # (Tt, Bb, D) each
                   wih_f_ref, b_f_ref, whh_f_ref,        # (D,4H), (1,4H), (H,4H)
                   wih_b_ref, b_b_ref, whh_b_ref,        # (D,4H), (1,4H), (H,4H)
                   out_f_ref, out_b_ref,                 # (Tt, Bb, H) each
                   gin_f_ref, gin_b_ref,                 # scratch (Tt, Bb, 4H) f32
                   h_f_ref, c_f_ref, h_b_ref, c_b_ref,   # scratch (Bb, H) f32
                   *, t_total, unroll):
    ti = pl.program_id(1)
    n_t = pl.num_programs(1)
    Tt, Bb, D = x_f_ref.shape
    H = whh_f_ref.shape[0]
    G = 4 * H
    cdt = whh_f_ref.dtype          # MXU compute dtype (f32 or bf16)

    # Reset recurrent state at the start of each batch tile's time sweep.
    @pl.when(ti == 0)
    def _init():
        h_f_ref[...] = jnp.zeros_like(h_f_ref)
        c_f_ref[...] = jnp.zeros_like(c_f_ref)
        h_b_ref[...] = jnp.zeros_like(h_b_ref)
        c_b_ref[...] = jnp.zeros_like(c_b_ref)

    # ---- Hoisted input projection: one large MXU matmul per chunk/direction,
    #      bias folded in here (no per-step bias broadcast on the serial path).
    xf2 = x_f_ref[...].reshape(Tt * Bb, D)
    xb2 = x_b_ref[...].reshape(Tt * Bb, D)
    gin_f_ref[...] = (jnp.dot(xf2, wih_f_ref[...], preferred_element_type=jnp.float32)
                      + b_f_ref[...]).reshape(Tt, Bb, G)
    gin_b_ref[...] = (jnp.dot(xb2, wih_b_ref[...], preferred_element_type=jnp.float32)
                      + b_b_ref[...]).reshape(Tt, Bb, G)

    whh_f = whh_f_ref[...]
    whh_b = whh_b_ref[...]

    def gate_math(pre, c):
        # NOTE: for production sizes (H a multiple of 128) these gate slices are
        # lane-tile aligned; PyTorch gate order (i, f, g, o).
        i = jax.nn.sigmoid(pre[:, 0 * H:1 * H])
        f = jax.nn.sigmoid(pre[:, 1 * H:2 * H])
        g = jnp.tanh(pre[:, 2 * H:3 * H])
        o = jax.nn.sigmoid(pre[:, 3 * H:4 * H])
        c_new = f * c + i * g
        h_new = o * jnp.tanh(c_new)
        return h_new, c_new

    # Global time offsets of this chunk (for masking padded timesteps).
    t0_f = ti * Tt
    t0_b = (n_t - 1 - ti) * Tt

    # ---- Fused forward+backward recurrence: both directions step in the same
    #      iteration so their MXU/EUP work interleaves on the serial path.
    def body(t, carry):
        h_f, c_f, h_b, c_b = carry
        tb = Tt - 1 - t
        pre_f = gin_f_ref[t] + jnp.dot(h_f.astype(cdt), whh_f,
                                       preferred_element_type=jnp.float32)
        pre_b = gin_b_ref[tb] + jnp.dot(h_b.astype(cdt), whh_b,
                                        preferred_element_type=jnp.float32)
        h_f_new, c_f_new = gate_math(pre_f, c_f)
        h_b_new, c_b_new = gate_math(pre_b, c_b)

        # Do not advance state on padded timesteps (keeps the backward initial
        # state exact when T is padded up to a chunk multiple).
        valid_f = (t0_f + t) < t_total
        valid_b = (t0_b + tb) < t_total
        h_f = jnp.where(valid_f, h_f_new, h_f)
        c_f = jnp.where(valid_f, c_f_new, c_f)
        h_b = jnp.where(valid_b, h_b_new, h_b)
        c_b = jnp.where(valid_b, c_b_new, c_b)

        out_f_ref[t] = h_f
        out_b_ref[tb] = h_b
        return (h_f, c_f, h_b, c_b)

    carry0 = (h_f_ref[...], c_f_ref[...], h_b_ref[...], c_b_ref[...])
    h_f, c_f, h_b, c_b = lax.fori_loop(0, Tt, body, carry0, unroll=unroll)

    h_f_ref[...] = h_f
    c_f_ref[...] = c_f
    h_b_ref[...] = h_b
    c_b_ref[...] = c_b


# -----------------------------------------------------------------------------
# Wrapper
# -----------------------------------------------------------------------------
@functools.partial(jax.jit, static_argnames=("hidden_size", "compute_dtype"))
def lstm_sequence_forward(x, params, hidden_size, compute_dtype=jnp.float32):
    """x: (B, T, D) float32 -> (B, T, 2*hidden_size) float32.

    compute_dtype: dtype used for the MXU dots (x / weights).  jnp.bfloat16 is
    recommended on v6e/v7x; gate math, h/c state and outputs stay float32.
    """
    B, T, D = x.shape
    H = hidden_size
    G = 4 * H

    # --- batch padding / tiling (sublane-multiple rows, full vreg utilization)
    Bp0 = -(-B // 8) * 8
    if Bp0 <= 64:
        Bb, Bp = Bp0, Bp0
    else:
        Bb = 64
        Bp = -(-B // 64) * 64
    nB = Bp // Bb

    # --- time chunking (streamed through VMEM, state carried across chunks)
    Tt = T if T <= 128 else 128
    Tp = -(-T // Tt) * Tt
    nT = Tp // Tt

    # Time-major layout so the recurrence indexes the leading axis.
    x_tm = jnp.transpose(x, (1, 0, 2)).astype(compute_dtype)          # (T, B, D)
    x_tm = jnp.pad(x_tm, ((0, Tp - T), (0, Bp - B), (0, 0)))          # (Tp, Bp, D)

    # Pre-transposed weights (hoists the per-step .T / relayout out of the loop).
    wih_f = params["wih_f"].T.astype(compute_dtype)                   # (D, 4H)
    wih_b = params["wih_b"].T.astype(compute_dtype)
    whh_f = params["whh_f"].T.astype(compute_dtype)                   # (H, 4H)
    whh_b = params["whh_b"].T.astype(compute_dtype)
    b_f = params["b_f"].astype(jnp.float32)                           # (1, 4H)
    b_b = params["b_b"].astype(jnp.float32)

    # Explicit VMEM budget (v5e's default scoped VMEM is only 16 MiB).
    itemsize = jnp.dtype(compute_dtype).itemsize
    vmem_est = (
        2 * 2 * Tt * Bb * D * itemsize                    # double-buffered x chunks
        + 2 * 2 * Tt * Bb * H * 4                         # double-buffered out chunks
        + 2 * (D * G + H * G) * itemsize + 2 * G * 4      # weights + biases
        + 2 * Tt * Bb * G * 4                             # gate-preactivation scratch
        + 4 * Bb * H * 4                                  # h/c state
    )
    vmem_limit = int(min(max(2 * vmem_est, 16 * 1024 * 1024), 64 * 1024 * 1024))

    kern = functools.partial(_bilstm_kernel, t_total=T, unroll=min(Tt, 8))

    out_f, out_b = pl.pallas_call(
        kern,
        grid=(nB, nT),
        in_specs=[
            # forward x chunk (ti), backward x chunk (nT-1-ti) — same array.
            pl.BlockSpec((Tt, Bb, D), lambda bi, ti: (ti, bi, 0)),
            pl.BlockSpec((Tt, Bb, D), lambda bi, ti: (nT - 1 - ti, bi, 0)),
            # weights / biases stay VMEM-resident (constant block index).
            pl.BlockSpec((D, G), lambda bi, ti: (0, 0)),
            pl.BlockSpec((1, G), lambda bi, ti: (0, 0)),
            pl.BlockSpec((H, G), lambda bi, ti: (0, 0)),
            pl.BlockSpec((D, G), lambda bi, ti: (0, 0)),
            pl.BlockSpec((1, G), lambda bi, ti: (0, 0)),
            pl.BlockSpec((H, G), lambda bi, ti: (0, 0)),
        ],
        out_specs=(
            pl.BlockSpec((Tt, Bb, H), lambda bi, ti: (ti, bi, 0)),
            pl.BlockSpec((Tt, Bb, H), lambda bi, ti: (nT - 1 - ti, bi, 0)),
        ),
        out_shape=(
            jax.ShapeDtypeStruct((Tp, Bp, H), jnp.float32),
            jax.ShapeDtypeStruct((Tp, Bp, H), jnp.float32),
        ),
        scratch_shapes=[
            pltpu.VMEM((Tt, Bb, G), jnp.float32),   # precomputed input-gates (fwd)
            pltpu.VMEM((Tt, Bb, G), jnp.float32),   # precomputed input-gates (bwd)
            pltpu.VMEM((Bb, H), jnp.float32),       # h forward
            pltpu.VMEM((Bb, H), jnp.float32),       # c forward
            pltpu.VMEM((Bb, H), jnp.float32),       # h backward
            pltpu.VMEM((Bb, H), jnp.float32),       # c backward
        ],
        compiler_params=pltpu.CompilerParams(
            dimension_semantics=("parallel", "arbitrary"),
            vmem_limit_bytes=vmem_limit,
        ),
    )(x_tm, x_tm, wih_f, b_f, whh_f, wih_b, b_b, whh_b)

    # Final layout glue: concat directions, back to batch-first, strip padding.
    out = jnp.concatenate([out_f, out_b], axis=-1)        # (Tp, Bp, 2H)
    out = jnp.transpose(out, (1, 0, 2))[:B, :T]           # (B, T, 2H)
    return out


# -----------------------------------------------------------------------------
# Deterministic parameter init (matches reset_params of the PyTorch module)
# -----------------------------------------------------------------------------
def init_params(key, input_size, hidden_size):
    D, H = input_size, hidden_size

    def kaiming_normal(k, shape):
        fan_in = shape[1]
        std = jnp.sqrt(2.0 / fan_in)
        return std * jax.random.normal(k, shape, jnp.float32)

    def orthogonal(k, shape):
        a = jax.random.normal(k, shape, jnp.float32)
        q, r = jnp.linalg.qr(a)
        q = q * jnp.sign(jnp.diagonal(r))[None, :]
        return q.astype(jnp.float32)

    ks = jax.random.split(key, 4)
    return {
        "wih_f": kaiming_normal(ks[0], (4 * H, D)),
        "whh_f": orthogonal(ks[1], (4 * H, H)),
        "b_f": jnp.zeros((1, 4 * H), jnp.float32),   # bias_ih + bias_hh = 0
        "wih_b": kaiming_normal(ks[2], (4 * H, D)),
        "whh_b": orthogonal(ks[3], (4 * H, H)),
        "b_b": jnp.zeros((1, 4 * H), jnp.float32),
    }


# -----------------------------------------------------------------------------
# Pure-JAX reference (same math, lax.scan) for a correctness check
# -----------------------------------------------------------------------------
def reference_forward(x, params, H):
    def cell(carry, x_t, wih, whh, b):
        h, c = carry
        gates = x_t @ wih.T + h @ whh.T + b
        i = jax.nn.sigmoid(gates[:, 0 * H:1 * H])
        f = jax.nn.sigmoid(gates[:, 1 * H:2 * H])
        g = jnp.tanh(gates[:, 2 * H:3 * H])
        o = jax.nn.sigmoid(gates[:, 3 * H:4 * H])
        c_new = f * c + i * g
        h_new = o * jnp.tanh(c_new)
        return (h_new, c_new), h_new

    B, T, D = x.shape
    x_tm = jnp.transpose(x, (1, 0, 2))
    h0 = jnp.zeros((B, H), jnp.float32)
    c0 = jnp.zeros((B, H), jnp.float32)

    _, out_f = lax.scan(
        lambda cr, xt: cell(cr, xt, params["wih_f"], params["whh_f"], params["b_f"]),
        (h0, c0), x_tm)
    _, out_b = lax.scan(
        lambda cr, xt: cell(cr, xt, params["wih_b"], params["whh_b"], params["b_b"]),
        (h0, c0), x_tm[::-1])
    out_b = out_b[::-1]
    return jnp.concatenate(
        [jnp.transpose(out_f, (1, 0, 2)), jnp.transpose(out_b, (1, 0, 2))], axis=-1)


if __name__ == "__main__":
    B, T, D, H = 2, 8, 16, 32

    key = jax.random.PRNGKey(0)
    k_x, k_p = jax.random.split(key)
    x = jax.random.normal(k_x, (B, T, D), jnp.float32)
    params = init_params(k_p, D, H)

    # f32 path: bit-for-practical-purposes identical to the PyTorch eval forward.
    out = jax.block_until_ready(lstm_sequence_forward(x, params, hidden_size=H))
    assert out.shape == (B, T, 2 * H), out.shape

    ref = jax.block_until_ready(reference_forward(x, params, H))
    np.testing.assert_allclose(np.asarray(out), np.asarray(ref), rtol=1e-5, atol=1e-5)

    # bf16 MXU path (recommended on v6e/v7x): sanity-check it compiles & is close.
    out_bf16 = jax.block_until_ready(
        lstm_sequence_forward(x, params, hidden_size=H, compute_dtype=jnp.bfloat16))
    assert out_bf16.shape == (B, T, 2 * H)
    assert bool(jnp.all(jnp.isfinite(out_bf16)))
    assert float(jnp.max(jnp.abs(out_bf16 - ref))) < 0.25

    print("KERNEL_OK")
</pallas_src>

<mosaic_0001>
module attributes {stable_mosaic.version = 11 : i64} {
  func.func @_bilstm_kernel(%arg0: i32, %arg1: i32, %arg2: memref<8x8x16xf32, #tpu.memory_space<vmem>>, %arg3: memref<8x8x16xf32, #tpu.memory_space<vmem>>, %arg4: memref<16x128xf32, #tpu.memory_space<vmem>>, %arg5: memref<1x128xf32, #tpu.memory_space<vmem>>, %arg6: memref<32x128xf32, #tpu.memory_space<vmem>>, %arg7: memref<16x128xf32, #tpu.memory_space<vmem>>, %arg8: memref<1x128xf32, #tpu.memory_space<vmem>>, %arg9: memref<32x128xf32, #tpu.memory_space<vmem>>, %arg10: memref<8x8x32xf32, #tpu.memory_space<vmem>>, %arg11: memref<8x8x32xf32, #tpu.memory_space<vmem>>, %arg12: memref<8x8x128xf32, #tpu.memory_space<vmem>>, %arg13: memref<8x8x128xf32, #tpu.memory_space<vmem>>, %arg14: memref<8x32xf32, #tpu.memory_space<vmem>>, %arg15: memref<8x32xf32, #tpu.memory_space<vmem>>, %arg16: memref<8x32xf32, #tpu.memory_space<vmem>>, %arg17: memref<8x32xf32, #tpu.memory_space<vmem>>) attributes {dimension_semantics = [#tpu.dimension_semantics<parallel>, #tpu.dimension_semantics<arbitrary>], iteration_bounds = array<i64: 1, 1>, scalar_prefetch = 0 : i64, scratch_operands = 6 : i64, tpu.core_type = #tpu.core_type<tc>, window_params = [{transform_indices = @transform_0, window_bounds = array<i64: 8, 8, 16>}, {transform_indices = @transform_1, window_bounds = array<i64: 8, 8, 16>}, {pipeline_mode = #tpu.pipeline_mode<synchronous>, transform_indices = @transform_2, window_bounds = array<i64: 16, 128>}, {pipeline_mode = #tpu.pipeline_mode<synchronous>, transform_indices = @transform_3, window_bounds = array<i64: 1, 128>}, {pipeline_mode = #tpu.pipeline_mode<synchronous>, transform_indices = @transform_4, window_bounds = array<i64: 32, 128>}, {pipeline_mode = #tpu.pipeline_mode<synchronous>, transform_indices = @transform_5, window_bounds = array<i64: 16, 128>}, {pipeline_mode = #tpu.pipeline_mode<synchronous>, transform_indices = @transform_6, window_bounds = array<i64: 1, 128>}, {pipeline_mode = #tpu.pipeline_mode<synchronous>, transform_indices = @transform_7, window_bounds = array<i64: 32, 128>}, {transform_indices = @transform_8, window_bounds = array<i64: 8, 8, 32>}, {transform_indices = @transform_9, window_bounds = array<i64: 8, 8, 32>}]} {
    %c0_i32 = arith.constant 0 : i32
    %0 = arith.cmpi eq, %arg1, %c0_i32 : i32
    %1 = arith.extui %0 : i1 to i32
    %c0_i32_0 = arith.constant 0 : i32
    %2 = arith.cmpi ne, %1, %c0_i32_0 : i32
    scf.if %2 {
      %cst_197 = arith.constant 0.000000e+00 : f32
      %650 = vector.broadcast %cst_197 : f32 to vector<8x32xf32>
      %c0_198 = arith.constant 0 : index
      %c0_199 = arith.constant 0 : index
      %651 = vector.load %arg14[%c0_198, %c0_199] : memref<8x32xf32, #tpu.memory_space<vmem>>, vector<8x32xf32>
      tpu.vector_store %arg14[%c0_198, %c0_199], %650 {strides = array<i32>} : memref<8x32xf32, #tpu.memory_space<vmem>>, vector<8x32xf32>,
      %cst_200 = arith.constant 0.000000e+00 : f32
      %652 = vector.broadcast %cst_200 : f32 to vector<8x32xf32>
      %c0_201 = arith.constant 0 : index
      %c0_202 = arith.constant 0 : index
      %653 = vector.load %arg15[%c0_201, %c0_202] : memref<8x32xf32, #tpu.memory_space<vmem>>, vector<8x32xf32>
      tpu.vector_store %arg15[%c0_201, %c0_202], %652 {strides = array<i32>} : memref<8x32xf32, #tpu.memory_space<vmem>>, vector<8x32xf32>,
      %cst_203 = arith.constant 0.000000e+00 : f32
      %654 = vector.broadcast %cst_203 : f32 to vector<8x32xf32>
      %c0_204 = arith.constant 0 : index
      %c0_205 = arith.constant 0 : index
      %655 = vector.load %arg16[%c0_204, %c0_205] : memref<8x32xf32, #tpu.memory_space<vmem>>, vector<8x32xf32>
      tpu.vector_store %arg16[%c0_204, %c0_205], %654 {strides = array<i32>} : memref<8x32xf32, #tpu.memory_space<vmem>>, vector<8x32xf32>,
      %cst_206 = arith.constant 0.000000e+00 : f32
      %656 = vector.broadcast %cst_206 : f32 to vector<8x32xf32>
      %c0_207 = arith.constant 0 : index
      %c0_208 = arith.constant 0 : index
      %657 = vector.load %arg17[%c0_207, %c0_208] : memref<8x32xf32, #tpu.memory_space<vmem>>, vector<8x32xf32>
      tpu.vector_store %arg17[%c0_207, %c0_208], %656 {strides = array<i32>} : memref<8x32xf32, #tpu.memory_space<vmem>>, vector<8x32xf32>,
    } else {
    }
    %c0 = arith.constant 0 : index
    %c0_1 = arith.constant 0 : index
    %c0_2 = arith.constant 0 : index
    %3 = vector.load %arg2[%c0, %c0_1, %c0_2] : memref<8x8x16xf32, #tpu.memory_space<vmem>>, vector<8x8x16xf32>
    %4 = vector.shape_cast %3 : vector<8x8x16xf32> to vector<64x16xf32>
    %c0_3 = arith.constant 0 : index
    %c0_4 = arith.constant 0 : index
    %c0_5 = arith.constant 0 : index
    %5 = vector.load %arg3[%c0_3, %c0_4, %c0_5] : memref<8x8x16xf32, #tpu.memory_space<vmem>>, vector<8x8x16xf32>
    %6 = vector.shape_cast %5 : vector<8x8x16xf32> to vector<64x16xf32>
    %c0_6 = arith.constant 0 : index
    %c0_7 = arith.constant 0 : index
    %7 = vector.load %arg4[%c0_6, %c0_7] : memref<16x128xf32, #tpu.memory_space<vmem>>, vector<16x128xf32>
    %cst = arith.constant dense<0.000000e+00> : vector<64x128xf32>
    %8 = tpu.matmul %4, %7, %cst {dimension_numbers = #tpu.dot_dimension_numbers<[1], [0], [0], [1], [0, 0, 1, 1], [], []>} : vector<64x16xf32>, vector<16x128xf32>, vector<64x128xf32> -> vector<64x128xf32>
    %c0_8 = arith.constant 0 : index
    %c0_9 = arith.constant 0 : index
    %9 = vector.load %arg5[%c0_8, %c0_9] : memref<1x128xf32, #tpu.memory_space<vmem>>, vector<1x128xf32>
    %10 = vector.broadcast %9 : vector<1x128xf32> to vector<64x128xf32>
    %11 = arith.addf %8, %10 : vector<64x128xf32>
    %12 = vector.shape_cast %11 : vector<64x128xf32> to vector<8x8x128xf32>
    %c0_10 = arith.constant 0 : index
    %c0_11 = arith.constant 0 : index
    %c0_12 = arith.constant 0 : index
    %13 = vector.load %arg12[%c0_10, %c0_11, %c0_12] : memref<8x8x128xf32, #tpu.memory_space<vmem>>, vector<8x8x128xf32>
    tpu.vector_store %arg12[%c0_10, %c0_11, %c0_12], %12 {strides = array<i32>} : memref<8x8x128xf32, #tpu.memory_space<vmem>>, vector<8x8x128xf32>,
    %c0_13 = arith.constant 0 : index
    %c0_14 = arith.constant 0 : index
    %14 = vector.load %arg7[%c0_13, %c0_14] : memref<16x128xf32, #tpu.memory_space<vmem>>, vector<16x128xf32>
    %cst_15 = arith.constant dense<0.000000e+00> : vector<64x128xf32>
    %15 = tpu.matmul %6, %14, %cst_15 {dimension_numbers = #tpu.dot_dimension_numbers<[1], [0], [0], [1], [0, 0, 1, 1], [], []>} : vector<64x16xf32>, vector<16x128xf32>, vector<64x128xf32> -> vector<64x128xf32>
    %c0_16 = arith.constant 0 : index
    %c0_17 = arith.constant 0 : index
    %16 = vector.load %arg8[%c0_16, %c0_17] : memref<1x128xf32, #tpu.memory_space<vmem>>, vector<1x128xf32>
    %17 = vector.broadcast %16 : vector<1x128xf32> to vector<64x128xf32>
    %18 = arith.addf %15, %17 : vector<64x128xf32>
    %19 = vector.shape_cast %18 : vector<64x128xf32> to vector<8x8x128xf32>
    %c0_18 = arith.constant 0 : index
    %c0_19 = arith.constant 0 : index
    %c0_20 = arith.constant 0 : index
    %20 = vector.load %arg13[%c0_18, %c0_19, %c0_20] : memref<8x8x128xf32, #tpu.memory_space<vmem>>, vector<8x8x128xf32>
    tpu.vector_store %arg13[%c0_18, %c0_19, %c0_20], %19 {strides = array<i32>} : memref<8x8x128xf32, #tpu.memory_space<vmem>>, vector<8x8x128xf32>,
    %c0_21 = arith.constant 0 : index
    %c0_22 = arith.constant 0 : index
    %21 = vector.load %arg6[%c0_21, %c0_22] : memref<32x128xf32, #tpu.memory_space<vmem>>, vector<32x128xf32>
    %c0_23 = arith.constant 0 : index
    %c0_24 = arith.constant 0 : index
    %22 = vector.load %arg9[%c0_23, %c0_24] : memref<32x128xf32, #tpu.memory_space<vmem>>, vector<32x128xf32>
    %c8_i32 = arith.constant 8 : i32
    %23 = arith.muli %arg1, %c8_i32 : i32
    %c0_i32_25 = arith.constant 0 : i32
    %24 = arith.subi %c0_i32_25, %arg1 : i32
    %c8_i32_26 = arith.constant 8 : i32
    %25 = arith.muli %24, %c8_i32_26 : i32
    %c0_27 = arith.constant 0 : index
    %c0_28 = arith.constant 0 : index
    %26 = vector.load %arg14[%c0_27, %c0_28] : memref<8x32xf32, #tpu.memory_space<vmem>>, vector<8x32xf32>
    %c0_29 = arith.constant 0 : index
    %c0_30 = arith.constant 0 : index
    %27 = vector.load %arg15[%c0_29, %c0_30] : memref<8x32xf32, #tpu.memory_space<vmem>>, vector<8x32xf32>
    %c0_31 = arith.constant 0 : index
    %c0_32 = arith.constant 0 : index
    %28 = vector.load %arg16[%c0_31, %c0_32] : memref<8x32xf32, #tpu.memory_space<vmem>>, vector<8x32xf32>
    %c0_33 = arith.constant 0 : index
    %c0_34 = arith.constant 0 : index
    %29 = vector.load %arg17[%c0_33, %c0_34] : memref<8x32xf32, #tpu.memory_space<vmem>>, vector<8x32xf32>
    %c0_i32_35 = arith.constant 0 : i32
    %c7_i32 = arith.constant 7 : i32
    %30 = arith.subi %c7_i32, %c0_i32_35 : i32
    %31 = arith.index_cast %c0_i32_35 : i32 to index
    %c0_36 = arith.constant 0 : index
    %c0_37 = arith.constant 0 : index
    %32 = vector.load %arg12[%31, %c0_36, %c0_37] : memref<8x8x128xf32, #tpu.memory_space<vmem>>, vector<1x8x128xf32>
    %33 = vector.shape_cast %32 : vector<1x8x128xf32> to vector<8x128xf32>
    %cst_38 = arith.constant dense<0.000000e+00> : vector<8x128xf32>
    %34 = tpu.matmul %26, %21, %cst_38 {dimension_numbers = #tpu.dot_dimension_numbers<[1], [0], [0], [1], [0, 0, 1, 1], [], []>} : vector<8x32xf32>, vector<32x128xf32>, vector<8x128xf32> -> vector<8x128xf32>
    %35 = arith.addf %33, %34 : vector<8x128xf32>
    %36 = arith.index_cast %30 : i32 to index
    %c0_39 = arith.constant 0 : index
    %c0_40 = arith.constant 0 : index
    %37 = vector.load %arg13[%36, %c0_39, %c0_40] : memref<8x8x128xf32, #tpu.memory_space<vmem>>, vector<1x8x128xf32>
    %38 = vector.shape_cast %37 : vector<1x8x128xf32> to vector<8x128xf32>
    %cst_41 = arith.constant dense<0.000000e+00> : vector<8x128xf32>
    %39 = tpu.matmul %28, %22, %cst_41 {dimension_numbers = #tpu.dot_dimension_numbers<[1], [0], [0], [1], [0, 0, 1, 1], [], []>} : vector<8x32xf32>, vector<32x128xf32>, vector<8x128xf32> -> vector<8x128xf32>
    %40 = arith.addf %38, %39 : vector<8x128xf32>
    %41 = vector.extract_strided_slice %35 {offsets = [0, 0], sizes = [8, 32], strides = [1, 1]} : vector<8x128xf32> to vector<8x32xf32>
    %42 = arith.negf %41 : vector<8x32xf32>
    %43 = math.exp %42 : vector<8x32xf32>
    %cst_42 = arith.constant 1.000000e+00 : f32
    %44 = vector.broadcast %cst_42 : f32 to vector<8x32xf32>
    %45 = arith.addf %44, %43 : vector<8x32xf32>
    %46 = arith.divf %44, %45 : vector<8x32xf32>
    %47 = vector.extract_strided_slice %35 {offsets = [0, 32], sizes = [8, 32], strides = [1, 1]} : vector<8x128xf32> to vector<8x32xf32>
    %48 = arith.negf %47 : vector<8x32xf32>
    %49 = math.exp %48 : vector<8x32xf32>
    %cst_43 = arith.constant 1.000000e+00 : f32
    %50 = vector.broadcast %cst_43 : f32 to vector<8x32xf32>
    %51 = arith.addf %50, %49 : vector<8x32xf32>
    %52 = arith.divf %50, %51 : vector<8x32xf32>
    %53 = vector.extract_strided_slice %35 {offsets = [0, 64], sizes = [8, 32], strides = [1, 1]} : vector<8x128xf32> to vector<8x32xf32>
    %54 = math.tanh %53 : vector<8x32xf32>
    %55 = vector.extract_strided_slice %35 {offsets = [0, 96], sizes = [8, 32], strides = [1, 1]} : vector<8x128xf32> to vector<8x32xf32>
    %56 = arith.negf %55 : vector<8x32xf32>
    %57 = math.exp %56 : vector<8x32xf32>
    %cst_44 = arith.constant 1.000000e+00 : f32
    %58 = vector.broadcast %cst_44 : f32 to vector<8x32xf32>
    %59 = arith.addf %58, %57 : vector<8x32xf32>
    %60 = arith.divf %58, %59 : vector<8x32xf32>
    %61 = arith.mulf %52, %27 : vector<8x32xf32>
    %62 = arith.mulf %46, %54 : vector<8x32xf32>
    %63 = arith.addf %61, %62 : vector<8x32xf32>
    %64 = math.tanh %63 : vector<8x32xf32>
    %65 = arith.mulf %60, %64 : vector<8x32xf32>
    %66 = vector.extract_strided_slice %40 {offsets = [0, 0], sizes = [8, 32], strides = [1, 1]} : vector<8x128xf32> to vector<8x32xf32>
    %67 = arith.negf %66 : vector<8x32xf32>
    %68 = math.exp %67 : vector<8x32xf32>
    %cst_45 = arith.constant 1.000000e+00 : f32
    %69 = vector.broadcast %cst_45 : f32 to vector<8x32xf32>
    %70 = arith.addf %69, %68 : vector<8x32xf32>
    %71 = arith.divf %69, %70 : vector<8x32xf32>
    %72 = vector.extract_strided_slice %40 {offsets = [0, 32], sizes = [8, 32], strides = [1, 1]} : vector<8x128xf32> to vector<8x32xf32>
    %73 = arith.negf %72 : vector<8x32xf32>
    %74 = math.exp %73 : vector<8x32xf32>
    %cst_46 = arith.constant 1.000000e+00 : f32
    %75 = vector.broadcast %cst_46 : f32 to vector<8x32xf32>
    %76 = arith.addf %75, %74 : vector<8x32xf32>
    %77 = arith.divf %75, %76 : vector<8x32xf32>
    %78 = vector.extract_strided_slice %40 {offsets = [0, 64], sizes = [8, 32], strides = [1, 1]} : vector<8x128xf32> to vector<8x32xf32>
    %79 = math.tanh %78 : vector<8x32xf32>
    %80 = vector.extract_strided_slice %40 {offsets = [0, 96], sizes = [8, 32], strides = [1, 1]} : vector<8x128xf32> to vector<8x32xf32>
    %81 = arith.negf %80 : vector<8x32xf32>
    %82 = math.exp %81 : vector<8x32xf32>
    %cst_47 = arith.constant 1.000000e+00 : f32
    %83 = vector.broadcast %cst_47 : f32 to vector<8x32xf32>
    %84 = arith.addf %83, %82 : vector<8x32xf32>
    %85 = arith.divf %83, %84 : vector<8x32xf32>
    %86 = arith.mulf %77, %29 : vector<8x32xf32>
    %87 = arith.mulf %71, %79 : vector<8x32xf32>
    %88 = arith.addf %86, %87 : vector<8x32xf32>
    %89 = math.tanh %88 : vector<8x32xf32>
    %90 = arith.mulf %85, %89 : vector<8x32xf32>
    %91 = arith.addi %23, %c0_i32_35 : i32
    %c8_i32_48 = arith.constant 8 : i32
    %92 = arith.cmpi slt, %91, %c8_i32_48 : i32
    %93 = arith.addi %25, %30 : i32
    %c8_i32_49 = arith.constant 8 : i32
    %94 = arith.cmpi slt, %93, %c8_i32_49 : i32
    %95 = arith.select %92, %65, %26 : vector<8x32xf32>
    %96 = arith.select %92, %63, %27 : vector<8x32xf32>
    %97 = arith.select %94, %90, %28 : vector<8x32xf32>
    %98 = arith.select %94, %88, %29 : vector<8x32xf32>
    %99 = arith.index_cast %c0_i32_35 : i32 to index
    %c0_50 = arith.constant 0 : index
    %c0_51 = arith.constant 0 : index
    %100 = vector.load %arg10[%99, %c0_50, %c0_51] : memref<8x8x32xf32, #tpu.memory_space<vmem>>, vector<1x8x32xf32>
    %101 = vector.shape_cast %100 : vector<1x8x32xf32> to vector<8x32xf32>
    %102 = vector.shape_cast %95 : vector<8x32xf32> to vector<1x8x32xf32>
    tpu.vector_store %arg10[%99, %c0_50, %c0_51], %102 {strides = array<i32>} : memref<8x8x32xf32, #tpu.memory_space<vmem>>, vector<1x8x32xf32>,
    %103 = arith.index_cast %30 : i32 to index
    %c0_52 = arith.constant 0 : index
    %c0_53 = arith.constant 0 : index
    %104 = vector.load %arg11[%103, %c0_52, %c0_53] : memref<8x8x32xf32, #tpu.memory_space<vmem>>, vector<1x8x32xf32>
    %105 = vector.shape_cast %104 : vector<1x8x32xf32> to vector<8x32xf32>
    %106 = vector.shape_cast %97 : vector<8x32xf32> to vector<1x8x32xf32>
    tpu.vector_store %arg11[%103, %c0_52, %c0_53], %106 {strides = array<i32>} : memref<8x8x32xf32, #tpu.memory_space<vmem>>, vector<1x8x32xf32>,
    %c1_i32 = arith.constant 1 : i32
    %c7_i32_54 = arith.constant 7 : i32
    %107 = arith.subi %c7_i32_54, %c1_i32 : i32
    %108 = arith.index_cast %c1_i32 : i32 to index
    %c0_55 = arith.constant 0 : index
    %c0_56 = arith.constant 0 : index
    %109 = vector.load %arg12[%108, %c0_55, %c0_56] : memref<8x8x128xf32, #tpu.memory_space<vmem>>, vector<1x8x128xf32>
    %110 = vector.shape_cast %109 : vector<1x8x128xf32> to vector<8x128xf32>
    %cst_57 = arith.constant dense<0.000000e+00> : vector<8x128xf32>
    %111 = tpu.matmul %95, %21, %cst_57 {dimension_numbers = #tpu.dot_dimension_numbers<[1], [0], [0], [1], [0, 0, 1, 1], [], []>} : vector<8x32xf32>, vector<32x128xf32>, vector<8x128xf32> -> vector<8x128xf32>
    %112 = arith.addf %110, %111 : vector<8x128xf32>
    %113 = arith.index_cast %107 : i32 to index
    %c0_58 = arith.constant 0 : index
    %c0_59 = arith.constant 0 : index
    %114 = vector.load %arg13[%113, %c0_58, %c0_59] : memref<8x8x128xf32, #tpu.memory_space<vmem>>, vector<1x8x128xf32>
    %115 = vector.shape_cast %114 : vector<1x8x128xf32> to vector<8x128xf32>
    %cst_60 = arith.constant dense<0.000000e+00> : vector<8x128xf32>
    %116 = tpu.matmul %97, %22, %cst_60 {dimension_numbers = #tpu.dot_dimension_numbers<[1], [0], [0], [1], [0, 0, 1, 1], [], []>} : vector<8x32xf32>, vector<32x128xf32>, vector<8x128xf32> -> vector<8x128xf32>
    %117 = arith.addf %115, %116 : vector<8x128xf32>
    %118 = vector.extract_strided_slice %112 {offsets = [0, 0], sizes = [8, 32], strides = [1, 1]} : vector<8x128xf32> to vector<8x32xf32>
    %119 = arith.negf %118 : vector<8x32xf32>
    %120 = math.exp %119 : vector<8x32xf32>
    %cst_61 = arith.constant 1.000000e+00 : f32
    %121 = vector.broadcast %cst_61 : f32 to vector<8x32xf32>
    %122 = arith.addf %121, %120 : vector<8x32xf32>
    %123 = arith.divf %121, %122 : vector<8x32xf32>
    %124 = vector.extract_strided_slice %112 {offsets = [0, 32], sizes = [8, 32], strides = [1, 1]} : vector<8x128xf32> to vector<8x32xf32>
    %125 = arith.negf %124 : vector<8x32xf32>
    %126 = math.exp %125 : vector<8x32xf32>
    %cst_62 = arith.constant 1.000000e+00 : f32
    %127 = vector.broadcast %cst_62 : f32 to vector<8x32xf32>
    %128 = arith.addf %127, %126 : vector<8x32xf32>
    %129 = arith.divf %127, %128 : vector<8x32xf32>
    %130 = vector.extract_strided_slice %112 {offsets = [0, 64], sizes = [8, 32], strides = [1, 1]} : vector<8x128xf32> to vector<8x32xf32>
    %131 = math.tanh %130 : vector<8x32xf32>
    %132 = vector.extract_strided_slice %112 {offsets = [0, 96], sizes = [8, 32], strides = [1, 1]} : vector<8x128xf32> to vector<8x32xf32>
    %133 = arith.negf %132 : vector<8x32xf32>
    %134 = math.exp %133 : vector<8x32xf32>
    %cst_63 = arith.constant 1.000000e+00 : f32
    %135 = vector.broadcast %cst_63 : f32 to vector<8x32xf32>
    %136 = arith.addf %135, %134 : vector<8x32xf32>
    %137 = arith.divf %135, %136 : vector<8x32xf32>
    %138 = arith.mulf %129, %96 : vector<8x32xf32>
    %139 = arith.mulf %123, %131 : vector<8x32xf32>
    %140 = arith.addf %138, %139 : vector<8x32xf32>
    %141 = math.tanh %140 : vector<8x32xf32>
    %142 = arith.mulf %137, %141 : vector<8x32xf32>
    %143 = vector.extract_strided_slice %117 {offsets = [0, 0], sizes = [8, 32], strides = [1, 1]} : vector<8x128xf32> to vector<8x32xf32>
    %144 = arith.negf %143 : vector<8x32xf32>
    %145 = math.exp %144 : vector<8x32xf32>
    %cst_64 = arith.constant 1.000000e+00 : f32
    %146 = vector.broadcast %cst_64 : f32 to vector<8x32xf32>
    %147 = arith.addf %146, %145 : vector<8x32xf32>
    %148 = arith.divf %146, %147 : vector<8x32xf32>
    %149 = vector.extract_strided_slice %117 {offsets = [0, 32], sizes = [8, 32], strides = [1, 1]} : vector<8x128xf32> to vector<8x32xf32>
    %150 = arith.negf %149 : vector<8x32xf32>
    %151 = math.exp %150 : vector<8x32xf32>
    %cst_65 = arith.constant 1.000000e+00 : f32
    %152 = vector.broadcast %cst_65 : f32 to vector<8x32xf32>
    %153 = arith.addf %152, %151 : vector<8x32xf32>
    %154 = arith.divf %152, %153 : vector<8x32xf32>
    %155 = vector.extract_strided_slice %117 {offsets = [0, 64], sizes = [8, 32], strides = [1, 1]} : vector<8x128xf32> to vector<8x32xf32>
    %156 = math.tanh %155 : vector<8x32xf32>
    %157 = vector.extract_strided_slice %117 {offsets = [0, 96], sizes = [8, 32], strides = [1, 1]} : vector<8x128xf32> to vector<8x32xf32>
    %158 = arith.negf %157 : vector<8x32xf32>
    %159 = math.exp %158 : vector<8x32xf32>
    %cst_66 = arith.constant 1.000000e+00 : f32
    %160 = vector.broadcast %cst_66 : f32 to vector<8x32xf32>
    %161 = arith.addf %160, %159 : vector<8x32xf32>
    %162 = arith.divf %160, %161 : vector<8x32xf32>
    %163 = arith.mulf %154, %98 : vector<8x32xf32>
    %164 = arith.mulf %148, %156 : vector<8x32xf32>
    %165 = arith.addf %163, %164 : vector<8x32xf32>
    %166 = math.tanh %165 : vector<8x32xf32>
    %167 = arith.mulf %162, %166 : vector<8x32xf32>
    %168 = arith.addi %23, %c1_i32 : i32
    %c8_i32_67 = arith.constant 8 : i32
    %169 = arith.cmpi slt, %168, %c8_i32_67 : i32
    %170 = arith.addi %25, %107 : i32
    %c8_i32_68 = arith.constant 8 : i32
    %171 = arith.cmpi slt, %170, %c8_i32_68 : i32
    %172 = arith.select %169, %142, %95 : vector<8x32xf32>
    %173 = arith.select %169, %140, %96 : vector<8x32xf32>
    %174 = arith.select %171, %167, %97 : vector<8x32xf32>
    %175 = arith.select %171, %165, %98 : vector<8x32xf32>
    %176 = arith.index_cast %c1_i32 : i32 to index
    %c0_69 = arith.constant 0 : index
    %c0_70 = arith.constant 0 : index
    %177 = vector.load %arg10[%176, %c0_69, %c0_70] : memref<8x8x32xf32, #tpu.memory_space<vmem>>, vector<1x8x32xf32>
    %178 = vector.shape_cast %177 : vector<1x8x32xf32> to vector<8x32xf32>
    %179 = vector.shape_cast %172 : vector<8x32xf32> to vector<1x8x32xf32>
    tpu.vector_store %arg10[%176, %c0_69, %c0_70], %179 {strides = array<i32>} : memref<8x8x32xf32, #tpu.memory_space<vmem>>, vector<1x8x32xf32>,
    %180 = arith.index_cast %107 : i32 to index
    %c0_71 = arith.constant 0 : index
    %c0_72 = arith.constant 0 : index
    %181 = vector.load %arg11[%180, %c0_71, %c0_72] : memref<8x8x32xf32, #tpu.memory_space<vmem>>, vector<1x8x32xf32>
    %182 = vector.shape_cast %181 : vector<1x8x32xf32> to vector<8x32xf32>
    %183 = vector.shape_cast %174 : vector<8x32xf32> to vector<1x8x32xf32>
    tpu.vector_store %arg11[%180, %c0_71, %c0_72], %183 {strides = array<i32>} : memref<8x8x32xf32, #tpu.memory_space<vmem>>, vector<1x8x32xf32>,
    %c2_i32 = arith.constant 2 : i32
    %c7_i32_73 = arith.constant 7 : i32
    %184 = arith.subi %c7_i32_73, %c2_i32 : i32
    %185 = arith.index_cast %c2_i32 : i32 to index
    %c0_74 = arith.constant 0 : index
    %c0_75 = arith.constant 0 : index
    %186 = vector.load %arg12[%185, %c0_74, %c0_75] : memref<8x8x128xf32, #tpu.memory_space<vmem>>, vector<1x8x128xf32>
    %187 = vector.shape_cast %186 : vector<1x8x128xf32> to vector<8x128xf32>
    %cst_76 = arith.constant dense<0.000000e+00> : vector<8x128xf32>
    %188 = tpu.matmul %172, %21, %cst_76 {dimension_numbers = #tpu.dot_dimension_numbers<[1], [0], [0], [1], [0, 0, 1, 1], [], []>} : vector<8x32xf32>, vector<32x128xf32>, vector<8x128xf32> -> vector<8x128xf32>
    %189 = arith.addf %187, %188 : vector<8x128xf32>
    %190 = arith.index_cast %184 : i32 to index
    %c0_77 = arith.constant 0 : index
    %c0_78 = arith.constant 0 : index
    %191 = vector.load %arg13[%190, %c0_77, %c0_78] : memref<8x8x128xf32, #tpu.memory_space<vmem>>, vector<1x8x128xf32>
    %192 = vector.shape_cast %191 : vector<1x8x128xf32> to vector<8x128xf32>
    %cst_79 = arith.constant dense<0.000000e+00> : vector<8x128xf32>
    %193 = tpu.matmul %174, %22, %cst_79 {dimension_numbers = #tpu.dot_dimension_numbers<[1], [0], [0], [1], [0, 0, 1, 1], [], []>} : vector<8x32xf32>, vector<32x128xf32>, vector<8x128xf32> -> vector<8x128xf32>
    %194 = arith.addf %192, %193 : vector<8x128xf32>
    %195 = vector.extract_strided_slice %189 {offsets = [0, 0], sizes = [8, 32], strides = [1, 1]} : vector<8x128xf32> to vector<8x32xf32>
    %196 = arith.negf %195 : vector<8x32xf32>
    %197 = math.exp %196 : vector<8x32xf32>
    %cst_80 = arith.constant 1.000000e+00 : f32
    %198 = vector.broadcast %cst_80 : f32 to vector<8x32xf32>
    %199 = arith.addf %198, %197 : vector<8x32xf32>
    %200 = arith.divf %198, %199 : vector<8x32xf32>
    %201 = vector.extract_strided_slice %189 {offsets = [0, 32], sizes = [8, 32], strides = [1, 1]} : vector<8x128xf32> to vector<8x32xf32>
    %202 = arith.negf %201 : vector<8x32xf32>
    %203 = math.exp %202 : vector<8x32xf32>
    %cst_81 = arith.constant 1.000000e+00 : f32
    %204 = vector.broadcast %cst_81 : f32 to vector<8x32xf32>
    %205 = arith.addf %204, %203 : vector<8x32xf32>
    %206 = arith.divf %204, %205 : vector<8x32xf32>
    %207 = vector.extract_strided_slice %189 {offsets = [0, 64], sizes = [8, 32], strides = [1, 1]} : vector<8x128xf32> to vector<8x32xf32>
    %208 = math.tanh %207 : vector<8x32xf32>
    %209 = vector.extract_strided_slice %189 {offsets = [0, 96], sizes = [8, 32], strides = [1, 1]} : vector<8x128xf32> to vector<8x32xf32>
    %210 = arith.negf %209 : vector<8x32xf32>
    %211 = math.exp %210 : vector<8x32xf32>
    %cst_82 = arith.constant 1.000000e+00 : f32
    %212 = vector.broadcast %cst_82 : f32 to vector<8x32xf32>
    %213 = arith.addf %212, %211 : vector<8x32xf32>
    %214 = arith.divf %212, %213 : vector<8x32xf32>
    %215 = arith.mulf %206, %173 : vector<8x32xf32>
    %216 = arith.mulf %200, %208 : vector<8x32xf32>
    %217 = arith.addf %215, %216 : vector<8x32xf32>
    %218 = math.tanh %217 : vector<8x32xf32>
    %219 = arith.mulf %214, %218 : vector<8x32xf32>
    %220 = vector.extract_strided_slice %194 {offsets = [0, 0], sizes = [8, 32], strides = [1, 1]} : vector<8x128xf32> to vector<8x32xf32>
    %221 = arith.negf %220 : vector<8x32xf32>
    %222 = math.exp %221 : vector<8x32xf32>
    %cst_83 = arith.constant 1.000000e+00 : f32
    %223 = vector.broadcast %cst_83 : f32 to vector<8x32xf32>
    %224 = arith.addf %223, %222 : vector<8x32xf32>
    %225 = arith.divf %223, %224 : vector<8x32xf32>
    %226 = vector.extract_strided_slice %194 {offsets = [0, 32], sizes = [8, 32], strides = [1, 1]} : vector<8x128xf32> to vector<8x32xf32>
    %227 = arith.negf %226 : vector<8x32xf32>
    %228 = math.exp %227 : vector<8x32xf32>
    %cst_84 = arith.constant 1.000000e+00 : f32
    %229 = vector.broadcast %cst_84 : f32 to vector<8x32xf32>
    %230 = arith.addf %229, %228 : vector<8x32xf32>
    %231 = arith.divf %229, %230 : vector<8x32xf32>
    %232 = vector.extract_strided_slice %194 {offsets = [0, 64], sizes = [8, 32], strides = [1, 1]} : vector<8x128xf32> to vector<8x32xf32>
    %233 = math.tanh %232 : vector<8x32xf32>
    %234 = vector.extract_strided_slice %194 {offsets = [0, 96], sizes = [8, 32], strides = [1, 1]} : vector<8x128xf32> to vector<8x32xf32>
    %235 = arith.negf %234 : vector<8x32xf32>
    %236 = math.exp %235 : vector<8x32xf32>
    %cst_85 = arith.constant 1.000000e+00 : f32
    %237 = vector.broadcast %cst_85 : f32 to vector<8x32xf32>
    %238 = arith.addf %237, %236 : vector<8x32xf32>
    %239 = arith.divf %237, %238 : vector<8x32xf32>
    %240 = arith.mulf %231, %175 : vector<8x32xf32>
    %241 = arith.mulf %225, %233 : vector<8x32xf32>
    %242 = arith.addf %240, %241 : vector<8x32xf32>
    %243 = math.tanh %242 : vector<8x32xf32>
    %244 = arith.mulf %239, %243 : vector<8x32xf32>
    %245 = arith.addi %23, %c2_i32 : i32
    %c8_i32_86 = arith.constant 8 : i32
    %246 = arith.cmpi slt, %245, %c8_i32_86 : i32
    %247 = arith.addi %25, %184 : i32
    %c8_i32_87 = arith.constant 8 : i32
    %248 = arith.cmpi slt, %247, %c8_i32_87 : i32
    %249 = arith.select %246, %219, %172 : vector<8x32xf32>
    %250 = arith.select %246, %217, %173 : vector<8x32xf32>
    %251 = arith.select %248, %244, %174 : vector<8x32xf32>
    %252 = arith.select %248, %242, %175 : vector<8x32xf32>
    %253 = arith.index_cast %c2_i32 : i32 to index
    %c0_88 = arith.constant 0 : index
    %c0_89 = arith.constant 0 : index
    %254 = vector.load %arg10[%253, %c0_88, %c0_89] : memref<8x8x32xf32, #tpu.memory_space<vmem>>, vector<1x8x32xf32>
    %255 = vector.shape_cast %254 : vector<1x8x32xf32> to vector<8x32xf32>
    %256 = vector.shape_cast %249 : vector<8x32xf32> to vector<1x8x32xf32>
    tpu.vector_store %arg10[%253, %c0_88, %c0_89], %256 {strides = array<i32>} : memref<8x8x32xf32, #tpu.memory_space<vmem>>, vector<1x8x32xf32>,
    %257 = arith.index_cast %184 : i32 to index
    %c0_90 = arith.constant 0 : index
    %c0_91 = arith.constant 0 : index
    %258 = vector.load %arg11[%257, %c0_90, %c0_91] : memref<8x8x32xf32, #tpu.memory_space<vmem>>, vector<1x8x32xf32>
    %259 = vector.shape_cast %258 : vector<1x8x32xf32> to vector<8x32xf32>
    %260 = vector.shape_cast %251 : vector<8x32xf32> to vector<1x8x32xf32>
    tpu.vector_store %arg11[%257, %c0_90, %c0_91], %260 {strides = array<i32>} : memref<8x8x32xf32, #tpu.memory_space<vmem>>, vector<1x8x32xf32>,
    %c3_i32 = arith.constant 3 : i32
    %c7_i32_92 = arith.constant 7 : i32
    %261 = arith.subi %c7_i32_92, %c3_i32 : i32
    %262 = arith.index_cast %c3_i32 : i32 to index
    %c0_93 = arith.constant 0 : index
    %c0_94 = arith.constant 0 : index
    %263 = vector.load %arg12[%262, %c0_93, %c0_94] : memref<8x8x128xf32, #tpu.memory_space<vmem>>, vector<1x8x128xf32>
    %264 = vector.shape_cast %263 : vector<1x8x128xf32> to vector<8x128xf32>
    %cst_95 = arith.constant dense<0.000000e+00> : vector<8x128xf32>
    %265 = tpu.matmul %249, %21, %cst_95 {dimension_numbers = #tpu.dot_dimension_numbers<[1], [0], [0], [1], [0, 0, 1, 1], [], []>} : vector<8x32xf32>, vector<32x128xf32>, vector<8x128xf32> -> vector<8x128xf32>
    %266 = arith.addf %264, %265 : vector<8x128xf32>
    %267 = arith.index_cast %261 : i32 to index
    %c0_96 = arith.constant 0 : index
    %c0_97 = arith.constant 0 : index
    %268 = vector.load %arg13[%267, %c0_96, %c0_97] : memref<8x8x128xf32, #tpu.memory_space<vmem>>, vector<1x8x128xf32>
    %269 = vector.shape_cast %268 : vector<1x8x128xf32> to vector<8x128xf32>
    %cst_98 = arith.constant dense<0.000000e+00> : vector<8x128xf32>
    %270 = tpu.matmul %251, %22, %cst_98 {dimension_numbers = #tpu.dot_dimension_numbers<[1], [0], [0], [1], [0, 0, 1, 1], [], []>} : vector<8x32xf32>, vector<32x128xf32>, vector<8x128xf32> -> vector<8x128xf32>
    %271 = arith.addf %269, %270 : vector<8x128xf32>
    %272 = vector.extract_strided_slice %266 {offsets = [0, 0], sizes = [8, 32], strides = [1, 1]} : vector<8x128xf32> to vector<8x32xf32>
    %273 = arith.negf %272 : vector<8x32xf32>
    %274 = math.exp %273 : vector<8x32xf32>
    %cst_99 = arith.constant 1.000000e+00 : f32
    %275 = vector.broadcast %cst_99 : f32 to vector<8x32xf32>
    %276 = arith.addf %275, %274 : vector<8x32xf32>
    %277 = arith.divf %275, %276 : vector<8x32xf32>
    %278 = vector.extract_strided_slice %266 {offsets = [0, 32], sizes = [8, 32], strides = [1, 1]} : vector<8x128xf32> to vector<8x32xf32>
    %279 = arith.negf %278 : vector<8x32xf32>
    %280 = math.exp %279 : vector<8x32xf32>
    %cst_100 = arith.constant 1.000000e+00 : f32
    %281 = vector.broadcast %cst_100 : f32 to vector<8x32xf32>
    %282 = arith.addf %281, %280 : vector<8x32xf32>
    %283 = arith.divf %281, %282 : vector<8x32xf32>
    %284 = vector.extract_strided_slice %266 {offsets = [0, 64], sizes = [8, 32], strides = [1, 1]} : vector<8x128xf32> to vector<8x32xf32>
    %285 = math.tanh %284 : vector<8x32xf32>
    %286 = vector.extract_strided_slice %266 {offsets = [0, 96], sizes = [8, 32], strides = [1, 1]} : vector<8x128xf32> to vector<8x32xf32>
    %287 = arith.negf %286 : vector<8x32xf32>
    %288 = math.exp %287 : vector<8x32xf32>
    %cst_101 = arith.constant 1.000000e+00 : f32
    %289 = vector.broadcast %cst_101 : f32 to vector<8x32xf32>
    %290 = arith.addf %289, %288 : vector<8x32xf32>
    %291 = arith.divf %289, %290 : vector<8x32xf32>
    %292 = arith.mulf %283, %250 : vector<8x32xf32>
    %293 = arith.mulf %277, %285 : vector<8x32xf32>
    %294 = arith.addf %292, %293 : vector<8x32xf32>
    %295 = math.tanh %294 : vector<8x32xf32>
    %296 = arith.mulf %291, %295 : vector<8x32xf32>
    %297 = vector.extract_strided_slice %271 {offsets = [0, 0], sizes = [8, 32], strides = [1, 1]} : vector<8x128xf32> to vector<8x32xf32>
    %298 = arith.negf %297 : vector<8x32xf32>
    %299 = math.exp %298 : vector<8x32xf32>
    %cst_102 = arith.constant 1.000000e+00 : f32
    %300 = vector.broadcast %cst_102 : f32 to vector<8x32xf32>
    %301 = arith.addf %300, %299 : vector<8x32xf32>
    %302 = arith.divf %300, %301 : vector<8x32xf32>
    %303 = vector.extract_strided_slice %271 {offsets = [0, 32], sizes = [8, 32], strides = [1, 1]} : vector<8x128xf32> to vector<8x32xf32>
    %304 = arith.negf %303 : vector<8x32xf32>
    %305 = math.exp %304 : vector<8x32xf32>
    %cst_103 = arith.constant 1.000000e+00 : f32
    %306 = vector.broadcast %cst_103 : f32 to vector<8x32xf32>
    %307 = arith.addf %306, %305 : vector<8x32xf32>
    %308 = arith.divf %306, %307 : vector<8x32xf32>
    %309 = vector.extract_strided_slice %271 {offsets = [0, 64], sizes = [8, 32], strides = [1, 1]} : vector<8x128xf32> to vector<8x32xf32>
    %310 = math.tanh %309 : vector<8x32xf32>
    %311 = vector.extract_strided_slice %271 {offsets = [0, 96], sizes = [8, 32], strides = [1, 1]} : vector<8x128xf32> to vector<8x32xf32>
    %312 = arith.negf %311 : vector<8x32xf32>
    %313 = math.exp %312 : vector<8x32xf32>
    %cst_104 = arith.constant 1.000000e+00 : f32
    %314 = vector.broadcast %cst_104 : f32 to vector<8x32xf32>
    %315 = arith.addf %314, %313 : vector<8x32xf32>
    %316 = arith.divf %314, %315 : vector<8x32xf32>
    %317 = arith.mulf %308, %252 : vector<8x32xf32>
    %318 = arith.mulf %302, %310 : vector<8x32xf32>
    %319 = arith.addf %317, %318 : vector<8x32xf32>
    %320 = math.tanh %319 : vector<8x32xf32>
    %321 = arith.mulf %316, %320 : vector<8x32xf32>
    %322 = arith.addi %23, %c3_i32 : i32
    %c8_i32_105 = arith.constant 8 : i32
    %323 = arith.cmpi slt, %322, %c8_i32_105 : i32
    %324 = arith.addi %25, %261 : i32
    %c8_i32_106 = arith.constant 8 : i32
    %325 = arith.cmpi slt, %324, %c8_i32_106 : i32
    %326 = arith.select %323, %296, %249 : vector<8x32xf32>
    %327 = arith.select %323, %294, %250 : vector<8x32xf32>
    %328 = arith.select %325, %321, %251 : vector<8x32xf32>
    %329 = arith.select %325, %319, %252 : vector<8x32xf32>
    %330 = arith.index_cast %c3_i32 : i32 to index
    %c0_107 = arith.constant 0 : index
    %c0_108 = arith.constant 0 : index
    %331 = vector.load %arg10[%330, %c0_107, %c0_108] : memref<8x8x32xf32, #tpu.memory_space<vmem>>, vector<1x8x32xf32>
    %332 = vector.shape_cast %331 : vector<1x8x32xf32> to vector<8x32xf32>
    %333 = vector.shape_cast %326 : vector<8x32xf32> to vector<1x8x32xf32>
    tpu.vector_store %arg10[%330, %c0_107, %c0_108], %333 {strides = array<i32>} : memref<8x8x32xf32, #tpu.memory_space<vmem>>, vector<1x8x32xf32>,
    %334 = arith.index_cast %261 : i32 to index
    %c0_109 = arith.constant 0 : index
    %c0_110 = arith.constant 0 : index
    %335 = vector.load %arg11[%334, %c0_109, %c0_110] : memref<8x8x32xf32, #tpu.memory_space<vmem>>, vector<1x8x32xf32>
    %336 = vector.shape_cast %335 : vector<1x8x32xf32> to vector<8x32xf32>
    %337 = vector.shape_cast %328 : vector<8x32xf32> to vector<1x8x32xf32>
    tpu.vector_store %arg11[%334, %c0_109, %c0_110], %337 {strides = array<i32>} : memref<8x8x32xf32, #tpu.memory_space<vmem>>, vector<1x8x32xf32>,
    %c4_i32 = arith.constant 4 : i32
    %c7_i32_111 = arith.constant 7 : i32
    %338 = arith.subi %c7_i32_111, %c4_i32 : i32
    %339 = arith.index_cast %c4_i32 : i32 to index
    %c0_112 = arith.constant 0 : index
    %c0_113 = arith.constant 0 : index
    %340 = vector.load %arg12[%339, %c0_112, %c0_113] : memref<8x8x128xf32, #tpu.memory_space<vmem>>, vector<1x8x128xf32>
    %341 = vector.shape_cast %340 : vector<1x8x128xf32> to vector<8x128xf32>
    %cst_114 = arith.constant dense<0.000000e+00> : vector<8x128xf32>
    %342 = tpu.matmul %326, %21, %cst_114 {dimension_numbers = #tpu.dot_dimension_numbers<[1], [0], [0], [1], [0, 0, 1, 1], [], []>} : vector<8x32xf32>, vector<32x128xf32>, vector<8x128xf32> -> vector<8x128xf32>
    %343 = arith.addf %341, %342 : vector<8x128xf32>
    %344 = arith.index_cast %338 : i32 to index
    %c0_115 = arith.constant 0 : index
    %c0_116 = arith.constant 0 : index
    %345 = vector.load %arg13[%344, %c0_115, %c0_116] : memref<8x8x128xf32, #tpu.memory_space<vmem>>, vector<1x8x128xf32>
    %346 = vector.shape_cast %345 : vector<1x8x128xf32> to vector<8x128xf32>
    %cst_117 = arith.constant dense<0.000000e+00> : vector<8x128xf32>
    %347 = tpu.matmul %328, %22, %cst_117 {dimension_numbers = #tpu.dot_dimension_numbers<[1], [0], [0], [1], [0, 0, 1, 1], [], []>} : vector<8x32xf32>, vector<32x128xf32>, vector<8x128xf32> -> vector<8x128xf32>
    %348 = arith.addf %346, %347 : vector<8x128xf32>
    %349 = vector.extract_strided_slice %343 {offsets = [0, 0], sizes = [8, 32], strides = [1, 1]} : vector<8x128xf32> to vector<8x32xf32>
    %350 = arith.negf %349 : vector<8x32xf32>
    %351 = math.exp %350 : vector<8x32xf32>
    %cst_118 = arith.constant 1.000000e+00 : f32
    %352 = vector.broadcast %cst_118 : f32 to vector<8x32xf32>
    %353 = arith.addf %352, %351 : vector<8x32xf32>
    %354 = arith.divf %352, %353 : vector<8x32xf32>
    %355 = vector.extract_strided_slice %343 {offsets = [0, 32], sizes = [8, 32], strides = [1, 1]} : vector<8x128xf32> to vector<8x32xf32>
    %356 = arith.negf %355 : vector<8x32xf32>
    %357 = math.exp %356 : vector<8x32xf32>
    %cst_119 = arith.constant 1.000000e+00 : f32
    %358 = vector.broadcast %cst_119 : f32 to vector<8x32xf32>
    %359 = arith.addf %358, %357 : vector<8x32xf32>
    %360 = arith.divf %358, %359 : vector<8x32xf32>
    %361 = vector.extract_strided_slice %343 {offsets = [0, 64], sizes = [8, 32], strides = [1, 1]} : vector<8x128xf32> to vector<8x32xf32>
    %362 = math.tanh %361 : vector<8x32xf32>
    %363 = vector.extract_strided_slice %343 {offsets = [0, 96], sizes = [8, 32], strides = [1, 1]} : vector<8x128xf32> to vector<8x32xf32>
    %364 = arith.negf %363 : vector<8x32xf32>
    %365 = math.exp %364 : vector<8x32xf32>
    %cst_120 = arith.constant 1.000000e+00 : f32
    %366 = vector.broadcast %cst_120 : f32 to vector<8x32xf32>
    %367 = arith.addf %366, %365 : vector<8x32xf32>
    %368 = arith.divf %366, %367 : vector<8x32xf32>
    %369 = arith.mulf %360, %327 : vector<8x32xf32>
    %370 = arith.mulf %354, %362 : vector<8x32xf32>
    %371 = arith.addf %369, %370 : vector<8x32xf32>
    %372 = math.tanh %371 : vector<8x32xf32>
    %373 = arith.mulf %368, %372 : vector<8x32xf32>
    %374 = vector.extract_strided_slice %348 {offsets = [0, 0], sizes = [8, 32], strides = [1, 1]} : vector<8x128xf32> to vector<8x32xf32>
    %375 = arith.negf %374 : vector<8x32xf32>
    %376 = math.exp %375 : vector<8x32xf32>
    %cst_121 = arith.constant 1.000000e+00 : f32
    %377 = vector.broadcast %cst_121 : f32 to vector<8x32xf32>
    %378 = arith.addf %377, %376 : vector<8x32xf32>
    %379 = arith.divf %377, %378 : vector<8x32xf32>
    %380 = vector.extract_strided_slice %348 {offsets = [0, 32], sizes = [8, 32], strides = [1, 1]} : vector<8x128xf32> to vector<8x32xf32>
    %381 = arith.negf %380 : vector<8x32xf32>
    %382 = math.exp %381 : vector<8x32xf32>
    %cst_122 = arith.constant 1.000000e+00 : f32
    %383 = vector.broadcast %cst_122 : f32 to vector<8x32xf32>
    %384 = arith.addf %383, %382 : vector<8x32xf32>
    %385 = arith.divf %383, %384 : vector<8x32xf32>
    %386 = vector.extract_strided_slice %348 {offsets = [0, 64], sizes = [8, 32], strides = [1, 1]} : vector<8x128xf32> to vector<8x32xf32>
    %387 = math.tanh %386 : vector<8x32xf32>
    %388 = vector.extract_strided_slice %348 {offsets = [0, 96], sizes = [8, 32], strides = [1, 1]} : vector<8x128xf32> to vector<8x32xf32>
    %389 = arith.negf %388 : vector<8x32xf32>
    %390 = math.exp %389 : vector<8x32xf32>
    %cst_123 = arith.constant 1.000000e+00 : f32
    %391 = vector.broadcast %cst_123 : f32 to vector<8x32xf32>
    %392 = arith.addf %391, %390 : vector<8x32xf32>
    %393 = arith.divf %391, %392 : vector<8x32xf32>
    %394 = arith.mulf %385, %329 : vector<8x32xf32>
    %395 = arith.mulf %379, %387 : vector<8x32xf32>
    %396 = arith.addf %394, %395 : vector<8x32xf32>
    %397 = math.tanh %396 : vector<8x32xf32>
    %398 = arith.mulf %393, %397 : vector<8x32xf32>
    %399 = arith.addi %23, %c4_i32 : i32
    %c8_i32_124 = arith.constant 8 : i32
    %400 = arith.cmpi slt, %399, %c8_i32_124 : i32
    %401 = arith.addi %25, %338 : i32
    %c8_i32_125 = arith.constant 8 : i32
    %402 = arith.cmpi slt, %401, %c8_i32_125 : i32
    %403 = arith.select %400, %373, %326 : vector<8x32xf32>
    %404 = arith.select %400, %371, %327 : vector<8x32xf32>
    %405 = arith.select %402, %398, %328 : vector<8x32xf32>
    %406 = arith.select %402, %396, %329 : vector<8x32xf32>
    %407 = arith.index_cast %c4_i32 : i32 to index
    %c0_126 = arith.constant 0 : index
    %c0_127 = arith.constant 0 : index
    %408 = vector.load %arg10[%407, %c0_126, %c0_127] : memref<8x8x32xf32, #tpu.memory_space<vmem>>, vector<1x8x32xf32>
    %409 = vector.shape_cast %408 : vector<1x8x32xf32> to vector<8x32xf32>
    %410 = vector.shape_cast %403 : vector<8x32xf32> to vector<1x8x32xf32>
    tpu.vector_store %arg10[%407, %c0_126, %c0_127], %410 {strides = array<i32>} : memref<8x8x32xf32, #tpu.memory_space<vmem>>, vector<1x8x32xf32>,
    %411 = arith.index_cast %338 : i32 to index
    %c0_128 = arith.constant 0 : index
    %c0_129 = arith.constant 0 : index
    %412 = vector.load %arg11[%411, %c0_128, %c0_129] : memref<8x8x32xf32, #tpu.memory_space<vmem>>, vector<1x8x32xf32>
    %413 = vector.shape_cast %412 : vector<1x8x32xf32> to vector<8x32xf32>
    %414 = vector.shape_cast %405 : vector<8x32xf32> to vector<1x8x32xf32>
    tpu.vector_store %arg11[%411, %c0_128, %c0_129], %414 {strides = array<i32>} : memref<8x8x32xf32, #tpu.memory_space<vmem>>, vector<1x8x32xf32>,
    %c5_i32 = arith.constant 5 : i32
    %c7_i32_130 = arith.constant 7 : i32
    %415 = arith.subi %c7_i32_130, %c5_i32 : i32
    %416 = arith.index_cast %c5_i32 : i32 to index
    %c0_131 = arith.constant 0 : index
    %c0_132 = arith.constant 0 : index
    %417 = vector.load %arg12[%416, %c0_131, %c0_132] : memref<8x8x128xf32, #tpu.memory_space<vmem>>, vector<1x8x128xf32>
    %418 = vector.shape_cast %417 : vector<1x8x128xf32> to vector<8x128xf32>
    %cst_133 = arith.constant dense<0.000000e+00> : vector<8x128xf32>
    %419 = tpu.matmul %403, %21, %cst_133 {dimension_numbers = #tpu.dot_dimension_numbers<[1], [0], [0], [1], [0, 0, 1, 1], [], []>} : vector<8x32xf32>, vector<32x128xf32>, vector<8x128xf32> -> vector<8x128xf32>
    %420 = arith.addf %418, %419 : vector<8x128xf32>
    %421 = arith.index_cast %415 : i32 to index
    %c0_134 = arith.constant 0 : index
    %c0_135 = arith.constant 0 : index
    %422 = vector.load %arg13[%421, %c0_134, %c0_135] : memref<8x8x128xf32, #tpu.memory_space<vmem>>, vector<1x8x128xf32>
    %423 = vector.shape_cast %422 : vector<1x8x128xf32> to vector<8x128xf32>
    %cst_136 = arith.constant dense<0.000000e+00> : vector<8x128xf32>
    %424 = tpu.matmul %405, %22, %cst_136 {dimension_numbers = #tpu.dot_dimension_numbers<[1], [0], [0], [1], [0, 0, 1, 1], [], []>} : vector<8x32xf32>, vector<32x128xf32>, vector<8x128xf32> -> vector<8x128xf32>
    %425 = arith.addf %423, %424 : vector<8x128xf32>
    %426 = vector.extract_strided_slice %420 {offsets = [0, 0], sizes = [8, 32], strides = [1, 1]} : vector<8x128xf32> to vector<8x32xf32>
    %427 = arith.negf %426 : vector<8x32xf32>
    %428 = math.exp %427 : vector<8x32xf32>
    %cst_137 = arith.constant 1.000000e+00 : f32
    %429 = vector.broadcast %cst_137 : f32 to vector<8x32xf32>
    %430 = arith.addf %429, %428 : vector<8x32xf32>
    %431 = arith.divf %429, %430 : vector<8x32xf32>
    %432 = vector.extract_strided_slice %420 {offsets = [0, 32], sizes = [8, 32], strides = [1, 1]} : vector<8x128xf32> to vector<8x32xf32>
    %433 = arith.negf %432 : vector<8x32xf32>
    %434 = math.exp %433 : vector<8x32xf32>
    %cst_138 = arith.constant 1.000000e+00 : f32
    %435 = vector.broadcast %cst_138 : f32 to vector<8x32xf32>
    %436 = arith.addf %435, %434 : vector<8x32xf32>
    %437 = arith.divf %435, %436 : vector<8x32xf32>
    %438 = vector.extract_strided_slice %420 {offsets = [0, 64], sizes = [8, 32], strides = [1, 1]} : vector<8x128xf32> to vector<8x32xf32>
    %439 = math.tanh %438 : vector<8x32xf32>
    %440 = vector.extract_strided_slice %420 {offsets = [0, 96], sizes = [8, 32], strides = [1, 1]} : vector<8x128xf32> to vector<8x32xf32>
    %441 = arith.negf %440 : vector<8x32xf32>
    %442 = math.exp %441 : vector<8x32xf32>
    %cst_139 = arith.constant 1.000000e+00 : f32
    %443 = vector.broadcast %cst_139 : f32 to vector<8x32xf32>
    %444 = arith.addf %443, %442 : vector<8x32xf32>
    %445 = arith.divf %443, %444 : vector<8x32xf32>
    %446 = arith.mulf %437, %404 : vector<8x32xf32>
    %447 = arith.mulf %431, %439 : vector<8x32xf32>
    %448 = arith.addf %446, %447 : vector<8x32xf32>
    %449 = math.tanh %448 : vector<8x32xf32>
    %450 = arith.mulf %445, %449 : vector<8x32xf32>
    %451 = vector.extract_strided_slice %425 {offsets = [0, 0], sizes = [8, 32], strides = [1, 1]} : vector<8x128xf32> to vector<8x32xf32>
    %452 = arith.negf %451 : vector<8x32xf32>
    %453 = math.exp %452 : vector<8x32xf32>
    %cst_140 = arith.constant 1.000000e+00 : f32
    %454 = vector.broadcast %cst_140 : f32 to vector<8x32xf32>
    %455 = arith.addf %454, %453 : vector<8x32xf32>
    %456 = arith.divf %454, %455 : vector<8x32xf32>
    %457 = vector.extract_strided_slice %425 {offsets = [0, 32], sizes = [8, 32], strides = [1, 1]} : vector<8x128xf32> to vector<8x32xf32>
    %458 = arith.negf %457 : vector<8x32xf32>
    %459 = math.exp %458 : vector<8x32xf32>
    %cst_141 = arith.constant 1.000000e+00 : f32
    %460 = vector.broadcast %cst_141 : f32 to vector<8x32xf32>
    %461 = arith.addf %460, %459 : vector<8x32xf32>
    %462 = arith.divf %460, %461 : vector<8x32xf32>
    %463 = vector.extract_strided_slice %425 {offsets = [0, 64], sizes = [8, 32], strides = [1, 1]} : vector<8x128xf32> to vector<8x32xf32>
    %464 = math.tanh %463 : vector<8x32xf32>
    %465 = vector.extract_strided_slice %425 {offsets = [0, 96], sizes = [8, 32], strides = [1, 1]} : vector<8x128xf32> to vector<8x32xf32>
    %466 = arith.negf %465 : vector<8x32xf32>
    %467 = math.exp %466 : vector<8x32xf32>
    %cst_142 = arith.constant 1.000000e+00 : f32
    %468 = vector.broadcast %cst_142 : f32 to vector<8x32xf32>
    %469 = arith.addf %468, %467 : vector<8x32xf32>
    %470 = arith.divf %468, %469 : vector<8x32xf32>
    %471 = arith.mulf %462, %406 : vector<8x32xf32>
    %472 = arith.mulf %456, %464 : vector<8x32xf32>
    %473 = arith.addf %471, %472 : vector<8x32xf32>
    %474 = math.tanh %473 : vector<8x32xf32>
    %475 = arith.mulf %470, %474 : vector<8x32xf32>
    %476 = arith.addi %23, %c5_i32 : i32
    %c8_i32_143 = arith.constant 8 : i32
    %477 = arith.cmpi slt, %476, %c8_i32_143 : i32
    %478 = arith.addi %25, %415 : i32
    %c8_i32_144 = arith.constant 8 : i32
    %479 = arith.cmpi slt, %478, %c8_i32_144 : i32
    %480 = arith.select %477, %450, %403 : vector<8x32xf32>
    %481 = arith.select %477, %448, %404 : vector<8x32xf32>
    %482 = arith.select %479, %475, %405 : vector<8x32xf32>
    %483 = arith.select %479, %473, %406 : vector<8x32xf32>
    %484 = arith.index_cast %c5_i32 : i32 to index
    %c0_145 = arith.constant 0 : index
    %c0_146 = arith.constant 0 : index
    %485 = vector.load %arg10[%484, %c0_145, %c0_146] : memref<8x8x32xf32, #tpu.memory_space<vmem>>, vector<1x8x32xf32>
    %486 = vector.shape_cast %485 : vector<1x8x32xf32> to vector<8x32xf32>
    %487 = vector.shape_cast %480 : vector<8x32xf32> to vector<1x8x32xf32>
    tpu.vector_store %arg10[%484, %c0_145, %c0_146], %487 {strides = array<i32>} : memref<8x8x32xf32, #tpu.memory_space<vmem>>, vector<1x8x32xf32>,
    %488 = arith.index_cast %415 : i32 to index
    %c0_147 = arith.constant 0 : index
    %c0_148 = arith.constant 0 : index
    %489 = vector.load %arg11[%488, %c0_147, %c0_148] : memref<8x8x32xf32, #tpu.memory_space<vmem>>, vector<1x8x32xf32>
    %490 = vector.shape_cast %489 : vector<1x8x32xf32> to vector<8x32xf32>
    %491 = vector.shape_cast %482 : vector<8x32xf32> to vector<1x8x32xf32>
    tpu.vector_store %arg11[%488, %c0_147, %c0_148], %491 {strides = array<i32>} : memref<8x8x32xf32, #tpu.memory_space<vmem>>, vector<1x8x32xf32>,
    %c6_i32 = arith.constant 6 : i32
    %c7_i32_149 = arith.constant 7 : i32
    %492 = arith.subi %c7_i32_149, %c6_i32 : i32
    %493 = arith.index_cast %c6_i32 : i32 to index
    %c0_150 = arith.constant 0 : index
    %c0_151 = arith.constant 0 : index
    %494 = vector.load %arg12[%493, %c0_150, %c0_151] : memref<8x8x128xf32, #tpu.memory_space<vmem>>, vector<1x8x128xf32>
    %495 = vector.shape_cast %494 : vector<1x8x128xf32> to vector<8x128xf32>
    %cst_152 = arith.constant dense<0.000000e+00> : vector<8x128xf32>
    %496 = tpu.matmul %480, %21, %cst_152 {dimension_numbers = #tpu.dot_dimension_numbers<[1], [0], [0], [1], [0, 0, 1, 1], [], []>} : vector<8x32xf32>, vector<32x128xf32>, vector<8x128xf32> -> vector<8x128xf32>
    %497 = arith.addf %495, %496 : vector<8x128xf32>
    %498 = arith.index_cast %492 : i32 to index
    %c0_153 = arith.constant 0 : index
    %c0_154 = arith.constant 0 : index
    %499 = vector.load %arg13[%498, %c0_153, %c0_154] : memref<8x8x128xf32, #tpu.memory_space<vmem>>, vector<1x8x128xf32>
    %500 = vector.shape_cast %499 : vector<1x8x128xf32> to vector<8x128xf32>
    %cst_155 = arith.constant dense<0.000000e+00> : vector<8x128xf32>
    %501 = tpu.matmul %482, %22, %cst_155 {dimension_numbers = #tpu.dot_dimension_numbers<[1], [0], [0], [1], [0, 0, 1, 1], [], []>} : vector<8x32xf32>, vector<32x128xf32>, vector<8x128xf32> -> vector<8x128xf32>
    %502 = arith.addf %500, %501 : vector<8x128xf32>
    %503 = vector.extract_strided_slice %497 {offsets = [0, 0], sizes = [8, 32], strides = [1, 1]} : vector<8x128xf32> to vector<8x32xf32>
    %504 = arith.negf %503 : vector<8x32xf32>
    %505 = math.exp %504 : vector<8x32xf32>
    %cst_156 = arith.constant 1.000000e+00 : f32
    %506 = vector.broadcast %cst_156 : f32 to vector<8x32xf32>
    %507 = arith.addf %506, %505 : vector<8x32xf32>
    %508 = arith.divf %506, %507 : vector<8x32xf32>
    %509 = vector.extract_strided_slice %497 {offsets = [0, 32], sizes = [8, 32], strides = [1, 1]} : vector<8x128xf32> to vector<8x32xf32>
    %510 = arith.negf %509 : vector<8x32xf32>
    %511 = math.exp %510 : vector<8x32xf32>
    %cst_157 = arith.constant 1.000000e+00 : f32
    %512 = vector.broadcast %cst_157 : f32 to vector<8x32xf32>
    %513 = arith.addf %512, %511 : vector<8x32xf32>
    %514 = arith.divf %512, %513 : vector<8x32xf32>
    %515 = vector.extract_strided_slice %497 {offsets = [0, 64], sizes = [8, 32], strides = [1, 1]} : vector<8x128xf32> to vector<8x32xf32>
    %516 = math.tanh %515 : vector<8x32xf32>
    %517 = vector.extract_strided_slice %497 {offsets = [0, 96], sizes = [8, 32], strides = [1, 1]} : vector<8x128xf32> to vector<8x32xf32>
    %518 = arith.negf %517 : vector<8x32xf32>
    %519 = math.exp %518 : vector<8x32xf32>
    %cst_158 = arith.constant 1.000000e+00 : f32
    %520 = vector.broadcast %cst_158 : f32 to vector<8x32xf32>
    %521 = arith.addf %520, %519 : vector<8x32xf32>
    %522 = arith.divf %520, %521 : vector<8x32xf32>
    %523 = arith.mulf %514, %481 : vector<8x32xf32>
    %524 = arith.mulf %508, %516 : vector<8x32xf32>
    %525 = arith.addf %523, %524 : vector<8x32xf32>
    %526 = math.tanh %525 : vector<8x32xf32>
    %527 = arith.mulf %522, %526 : vector<8x32xf32>
    %528 = vector.extract_strided_slice %502 {offsets = [0, 0], sizes = [8, 32], strides = [1, 1]} : vector<8x128xf32> to vector<8x32xf32>
    %529 = arith.negf %528 : vector<8x32xf32>
    %530 = math.exp %529 : vector<8x32xf32>
    %cst_159 = arith.constant 1.000000e+00 : f32
    %531 = vector.broadcast %cst_159 : f32 to vector<8x32xf32>
    %532 = arith.addf %531, %530 : vector<8x32xf32>
    %533 = arith.divf %531, %532 : vector<8x32xf32>
    %534 = vector.extract_strided_slice %502 {offsets = [0, 32], sizes = [8, 32], strides = [1, 1]} : vector<8x128xf32> to vector<8x32xf32>
    %535 = arith.negf %534 : vector<8x32xf32>
    %536 = math.exp %535 : vector<8x32xf32>
    %cst_160 = arith.constant 1.000000e+00 : f32
    %537 = vector.broadcast %cst_160 : f32 to vector<8x32xf32>
    %538 = arith.addf %537, %536 : vector<8x32xf32>
    %539 = arith.divf %537, %538 : vector<8x32xf32>
    %540 = vector.extract_strided_slice %502 {offsets = [0, 64], sizes = [8, 32], strides = [1, 1]} : vector<8x128xf32> to vector<8x32xf32>
    %541 = math.tanh %540 : vector<8x32xf32>
    %542 = vector.extract_strided_slice %502 {offsets = [0, 96], sizes = [8, 32], strides = [1, 1]} : vector<8x128xf32> to vector<8x32xf32>
    %543 = arith.negf %542 : vector<8x32xf32>
    %544 = math.exp %543 : vector<8x32xf32>
    %cst_161 = arith.constant 1.000000e+00 : f32
    %545 = vector.broadcast %cst_161 : f32 to vector<8x32xf32>
    %546 = arith.addf %545, %544 : vector<8x32xf32>
    %547 = arith.divf %545, %546 : vector<8x32xf32>
    %548 = arith.mulf %539, %483 : vector<8x32xf32>
    %549 = arith.mulf %533, %541 : vector<8x32xf32>
    %550 = arith.addf %548, %549 : vector<8x32xf32>
    %551 = math.tanh %550 : vector<8x32xf32>
    %552 = arith.mulf %547, %551 : vector<8x32xf32>
    %553 = arith.addi %23, %c6_i32 : i32
    %c8_i32_162 = arith.constant 8 : i32
    %554 = arith.cmpi slt, %553, %c8_i32_162 : i32
    %555 = arith.addi %25, %492 : i32
    %c8_i32_163 = arith.constant 8 : i32
    %556 = arith.cmpi slt, %555, %c8_i32_163 : i32
    %557 = arith.select %554, %527, %480 : vector<8x32xf32>
    %558 = arith.select %554, %525, %481 : vector<8x32xf32>
    %559 = arith.select %556, %552, %482 : vector<8x32xf32>
    %560 = arith.select %556, %550, %483 : vector<8x32xf32>
    %561 = arith.index_cast %c6_i32 : i32 to index
    %c0_164 = arith.constant 0 : index
    %c0_165 = arith.constant 0 : index
    %562 = vector.load %arg10[%561, %c0_164, %c0_165] : memref<8x8x32xf32, #tpu.memory_space<vmem>>, vector<1x8x32xf32>
    %563 = vector.shape_cast %562 : vector<1x8x32xf32> to vector<8x32xf32>
    %564 = vector.shape_cast %557 : vector<8x32xf32> to vector<1x8x32xf32>
    tpu.vector_store %arg10[%561, %c0_164, %c0_165], %564 {strides = array<i32>} : memref<8x8x32xf32, #tpu.memory_space<vmem>>, vector<1x8x32xf32>,
    %565 = arith.index_cast %492 : i32 to index
    %c0_166 = arith.constant 0 : index
    %c0_167 = arith.constant 0 : index
    %566 = vector.load %arg11[%565, %c0_166, %c0_167] : memref<8x8x32xf32, #tpu.memory_space<vmem>>, vector<1x8x32xf32>
    %567 = vector.shape_cast %566 : vector<1x8x32xf32> to vector<8x32xf32>
    %568 = vector.shape_cast %559 : vector<8x32xf32> to vector<1x8x32xf32>
    tpu.vector_store %arg11[%565, %c0_166, %c0_167], %568 {strides = array<i32>} : memref<8x8x32xf32, #tpu.memory_space<vmem>>, vector<1x8x32xf32>,
    %c7_i32_168 = arith.constant 7 : i32
    %c7_i32_169 = arith.constant 7 : i32
    %569 = arith.subi %c7_i32_169, %c7_i32_168 : i32
    %570 = arith.index_cast %c7_i32_168 : i32 to index
    %c0_170 = arith.constant 0 : index
    %c0_171 = arith.constant 0 : index
    %571 = vector.load %arg12[%570, %c0_170, %c0_171] : memref<8x8x128xf32, #tpu.memory_space<vmem>>, vector<1x8x128xf32>
    %572 = vector.shape_cast %571 : vector<1x8x128xf32> to vector<8x128xf32>
    %cst_172 = arith.constant dense<0.000000e+00> : vector<8x128xf32>
    %573 = tpu.matmul %557, %21, %cst_172 {dimension_numbers = #tpu.dot_dimension_numbers<[1], [0], [0], [1], [0, 0, 1, 1], [], []>} : vector<8x32xf32>, vector<32x128xf32>, vector<8x128xf32> -> vector<8x128xf32>
    %574 = arith.addf %572, %573 : vector<8x128xf32>
    %575 = arith.index_cast %569 : i32 to index
    %c0_173 = arith.constant 0 : index
    %c0_174 = arith.constant 0 : index
    %576 = vector.load %arg13[%575, %c0_173, %c0_174] : memref<8x8x128xf32, #tpu.memory_space<vmem>>, vector<1x8x128xf32>
    %577 = vector.shape_cast %576 : vector<1x8x128xf32> to vector<8x128xf32>
    %cst_175 = arith.constant dense<0.000000e+00> : vector<8x128xf32>
    %578 = tpu.matmul %559, %22, %cst_175 {dimension_numbers = #tpu.dot_dimension_numbers<[1], [0], [0], [1], [0, 0, 1, 1], [], []>} : vector<8x32xf32>, vector<32x128xf32>, vector<8x128xf32> -> vector<8x128xf32>
    %579 = arith.addf %577, %578 : vector<8x128xf32>
    %580 = vector.extract_strided_slice %574 {offsets = [0, 0], sizes = [8, 32], strides = [1, 1]} : vector<8x128xf32> to vector<8x32xf32>
    %581 = arith.negf %580 : vector<8x32xf32>
    %582 = math.exp %581 : vector<8x32xf32>
    %cst_176 = arith.constant 1.000000e+00 : f32
    %583 = vector.broadcast %cst_176 : f32 to vector<8x32xf32>
    %584 = arith.addf %583, %582 : vector<8x32xf32>
    %585 = arith.divf %583, %584 : vector<8x32xf32>
    %586 = vector.extract_strided_slice %574 {offsets = [0, 32], sizes = [8, 32], strides = [1, 1]} : vector<8x128xf32> to vector<8x32xf32>
    %587 = arith.negf %586 : vector<8x32xf32>
    %588 = math.exp %587 : vector<8x32xf32>
    %cst_177 = arith.constant 1.000000e+00 : f32
    %589 = vector.broadcast %cst_177 : f32 to vector<8x32xf32>
    %590 = arith.addf %589, %588 : vector<8x32xf32>
    %591 = arith.divf %589, %590 : vector<8x32xf32>
    %592 = vector.extract_strided_slice %574 {offsets = [0, 64], sizes = [8, 32], strides = [1, 1]} : vector<8x128xf32> to vector<8x32xf32>
    %593 = math.tanh %592 : vector<8x32xf32>
    %594 = vector.extract_strided_slice %574 {offsets = [0, 96], sizes = [8, 32], strides = [1, 1]} : vector<8x128xf32> to vector<8x32xf32>
    %595 = arith.negf %594 : vector<8x32xf32>
    %596 = math.exp %595 : vector<8x32xf32>
    %cst_178 = arith.constant 1.000000e+00 : f32
    %597 = vector.broadcast %cst_178 : f32 to vector<8x32xf32>
    %598 = arith.addf %597, %596 : vector<8x32xf32>
    %599 = arith.divf %597, %598 : vector<8x32xf32>
    %600 = arith.mulf %591, %558 : vector<8x32xf32>
    %601 = arith.mulf %585, %593 : vector<8x32xf32>
    %602 = arith.addf %600, %601 : vector<8x32xf32>
    %603 = math.tanh %602 : vector<8x32xf32>
    %604 = arith.mulf %599, %603 : vector<8x32xf32>
    %605 = vector.extract_strided_slice %579 {offsets = [0, 0], sizes = [8, 32], strides = [1, 1]} : vector<8x128xf32> to vector<8x32xf32>
    %606 = arith.negf %605 : vector<8x32xf32>
    %607 = math.exp %606 : vector<8x32xf32>
    %cst_179 = arith.constant 1.000000e+00 : f32
    %608 = vector.broadcast %cst_179 : f32 to vector<8x32xf32>
    %609 = arith.addf %608, %607 : vector<8x32xf32>
    %610 = arith.divf %608, %609 : vector<8x32xf32>
    %611 = vector.extract_strided_slice %579 {offsets = [0, 32], sizes = [8, 32], strides = [1, 1]} : vector<8x128xf32> to vector<8x32xf32>
    %612 = arith.negf %611 : vector<8x32xf32>
    %613 = math.exp %612 : vector<8x32xf32>
    %cst_180 = arith.constant 1.000000e+00 : f32
    %614 = vector.broadcast %cst_180 : f32 to vector<8x32xf32>
    %615 = arith.addf %614, %613 : vector<8x32xf32>
    %616 = arith.divf %614, %615 : vector<8x32xf32>
    %617 = vector.extract_strided_slice %579 {offsets = [0, 64], sizes = [8, 32], strides = [1, 1]} : vector<8x128xf32> to vector<8x32xf32>
    %618 = math.tanh %617 : vector<8x32xf32>
    %619 = vector.extract_strided_slice %579 {offsets = [0, 96], sizes = [8, 32], strides = [1, 1]} : vector<8x128xf32> to vector<8x32xf32>
    %620 = arith.negf %619 : vector<8x32xf32>
    %621 = math.exp %620 : vector<8x32xf32>
    %cst_181 = arith.constant 1.000000e+00 : f32
    %622 = vector.broadcast %cst_181 : f32 to vector<8x32xf32>
    %623 = arith.addf %622, %621 : vector<8x32xf32>
    %624 = arith.divf %622, %623 : vector<8x32xf32>
    %625 = arith.mulf %616, %560 : vector<8x32xf32>
    %626 = arith.mulf %610, %618 : vector<8x32xf32>
    %627 = arith.addf %625, %626 : vector<8x32xf32>
    %628 = math.tanh %627 : vector<8x32xf32>
    %629 = arith.mulf %624, %628 : vector<8x32xf32>
    %630 = arith.addi %23, %c7_i32_168 : i32
    %c8_i32_182 = arith.constant 8 : i32
    %631 = arith.cmpi slt, %630, %c8_i32_182 : i32
    %632 = arith.addi %25, %569 : i32
    %c8_i32_183 = arith.constant 8 : i32
    %633 = arith.cmpi slt, %632, %c8_i32_183 : i32
    %634 = arith.select %631, %604, %557 : vector<8x32xf32>
    %635 = arith.select %631, %602, %558 : vector<8x32xf32>
    %636 = arith.select %633, %629, %559 : vector<8x32xf32>
    %637 = arith.select %633, %627, %560 : vector<8x32xf32>
    %638 = arith.index_cast %c7_i32_168 : i32 to index
    %c0_184 = arith.constant 0 : index
    %c0_185 = arith.constant 0 : index
    %639 = vector.load %arg10[%638, %c0_184, %c0_185] : memref<8x8x32xf32, #tpu.memory_space<vmem>>, vector<1x8x32xf32>
    %640 = vector.shape_cast %639 : vector<1x8x32xf32> to vector<8x32xf32>
    %641 = vector.shape_cast %634 : vector<8x32xf32> to vector<1x8x32xf32>
    tpu.vector_store %arg10[%638, %c0_184, %c0_185], %641 {strides = array<i32>} : memref<8x8x32xf32, #tpu.memory_space<vmem>>, vector<1x8x32xf32>,
    %642 = arith.index_cast %569 : i32 to index
    %c0_186 = arith.constant 0 : index
    %c0_187 = arith.constant 0 : index
    %643 = vector.load %arg11[%642, %c0_186, %c0_187] : memref<8x8x32xf32, #tpu.memory_space<vmem>>, vector<1x8x32xf32>
    %644 = vector.shape_cast %643 : vector<1x8x32xf32> to vector<8x32xf32>
    %645 = vector.shape_cast %636 : vector<8x32xf32> to vector<1x8x32xf32>
    tpu.vector_store %arg11[%642, %c0_186, %c0_187], %645 {strides = array<i32>} : memref<8x8x32xf32, #tpu.memory_space<vmem>>, vector<1x8x32xf32>,
    %c8_i32_188 = arith.constant 8 : i32
    %c0_189 = arith.constant 0 : index
    %c0_190 = arith.constant 0 : index
    %646 = vector.load %arg14[%c0_189, %c0_190] : memref<8x32xf32, #tpu.memory_space<vmem>>, vector<8x32xf32>
    tpu.vector_store %arg14[%c0_189, %c0_190], %634 {strides = array<i32>} : memref<8x32xf32, #tpu.memory_space<vmem>>, vector<8x32xf32>,
    %c0_191 = arith.constant 0 : index
    %c0_192 = arith.constant 0 : index
    %647 = vector.load %arg15[%c0_191, %c0_192] : memref<8x32xf32, #tpu.memory_space<vmem>>, vector<8x32xf32>
    tpu.vector_store %arg15[%c0_191, %c0_192], %635 {strides = array<i32>} : memref<8x32xf32, #tpu.memory_space<vmem>>, vector<8x32xf32>,
    %c0_193 = arith.constant 0 : index
    %c0_194 = arith.constant 0 : index
    %648 = vector.load %arg16[%c0_193, %c0_194] : memref<8x32xf32, #tpu.memory_space<vmem>>, vector<8x32xf32>
    tpu.vector_store %arg16[%c0_193, %c0_194], %636 {strides = array<i32>} : memref<8x32xf32, #tpu.memory_space<vmem>>, vector<8x32xf32>,
    %c0_195 = arith.constant 0 : index
    %c0_196 = arith.constant 0 : index
    %649 = vector.load %arg17[%c0_195, %c0_196] : memref<8x32xf32, #tpu.memory_space<vmem>>, vector<8x32xf32>
    tpu.vector_store %arg17[%c0_195, %c0_196], %637 {strides = array<i32>} : memref<8x32xf32, #tpu.memory_space<vmem>>, vector<8x32xf32>,
    return
  }
  func.func @transform_0(%arg0: i32, %arg1: i32) -> (i32, i32, i32) {
    %c0_i32 = arith.constant 0 : i32
    %c0_i32_0 = arith.constant 0 : i32
    return %arg1, %arg0, %c0_i32 : i32, i32, i32
  }
  func.func @transform_1(%arg0: i32, %arg1: i32) -> (i32, i32, i32) {
    %c0_i32 = arith.constant 0 : i32
    %0 = arith.subi %c0_i32, %arg1 : i32
    %c0_i32_0 = arith.constant 0 : i32
    %c0_i32_1 = arith.constant 0 : i32
    return %0, %arg0, %c0_i32_0 : i32, i32, i32
  }
  func.func @transform_2(%arg0: i32, %arg1: i32) -> (i32, i32) {
    %c0_i32 = arith.constant 0 : i32
    %c0_i32_0 = arith.constant 0 : i32
    %c0_i32_1 = arith.constant 0 : i32
    return %c0_i32, %c0_i32_0 : i32, i32
  }
  func.func @transform_3(%arg0: i32, %arg1: i32) -> (i32, i32) {
    %c0_i32 = arith.constant 0 : i32
    %c0_i32_0 = arith.constant 0 : i32
    %c0_i32_1 = arith.constant 0 : i32
    return %c0_i32, %c0_i32_0 : i32, i32
  }
  func.func @transform_4(%arg0: i32, %arg1: i32) -> (i32, i32) {
    %c0_i32 = arith.constant 0 : i32
    %c0_i32_0 = arith.constant 0 : i32
    %c0_i32_1 = arith.constant 0 : i32
    return %c0_i32, %c0_i32_0 : i32, i32
  }
  func.func @transform_5(%arg0: i32, %arg1: i32) -> (i32, i32) {
    %c0_i32 = arith.constant 0 : i32
    %c0_i32_0 = arith.constant 0 : i32
    %c0_i32_1 = arith.constant 0 : i32
    return %c0_i32, %c0_i32_0 : i32, i32
  }
  func.func @transform_6(%arg0: i32, %arg1: i32) -> (i32, i32) {
    %c0_i32 = arith.constant 0 : i32
    %c0_i32_0 = arith.constant 0 : i32
    %c0_i32_1 = arith.constant 0 : i32
    return %c0_i32, %c0_i32_0 : i32, i32
  }
  func.func @transform_7(%arg0: i32, %arg1: i32) -> (i32, i32) {
    %c0_i32 = arith.constant 0 : i32
    %c0_i32_0 = arith.constant 0 : i32
    %c0_i32_1 = arith.constant 0 : i32
    return %c0_i32, %c0_i32_0 : i32, i32
  }
  func.func @transform_8(%arg0: i32, %arg1: i32) -> (i32, i32, i32) {
    %c0_i32 = arith.constant 0 : i32
    %c0_i32_0 = arith.constant 0 : i32
    return %arg1, %arg0, %c0_i32 : i32, i32, i32
  }
  func.func @transform_9(%arg0: i32, %arg1: i32) -> (i32, i32, i32) {
    %c0_i32 = arith.constant 0 : i32
    %0 = arith.subi %c0_i32, %arg1 : i32
    %c0_i32_0 = arith.constant 0 : i32
    %c0_i32_1 = arith.constant 0 : i32
    return %0, %arg0, %c0_i32_0 : i32, i32, i32
  }
}

</mosaic_0001>

<llo_original>
// kernel: lstm_sequence_forward.1
$region0: #{lstm_sequence_forward.1}
  #allocation0 [shape = 'u32[]', space=smem, size = 0x4, offset = 0x4, fixed_abs, tag = 'smem constant byte address 0x4 - core index']
  #allocation1 [shape = 'u32[144,128]{1,0:T(1,128)}', space=vmem, size = 0x12000, scoped, tag = 'internal scratch']
  #allocation2 [shape = 'f32[8,8,128]{2,1,0:T(8,128)}', space=vmem, size = 0x8000, scoped, tag = 'scratch operand']
  #allocation3 [shape = 'f32[8,8,128]{2,1,0:T(8,128)}', space=vmem, size = 0x8000, scoped, tag = 'scratch operand']
  #allocation4 [shape = 'f32[8,32]{1,0:T(8,128)}', space=vmem, size = 0x1000, scoped, tag = 'scratch operand']
  #allocation5 [shape = 'f32[8,32]{1,0:T(8,128)}', space=vmem, size = 0x1000, scoped, tag = 'scratch operand']
  #allocation6 [shape = 'f32[8,32]{1,0:T(8,128)}', space=vmem, size = 0x1000, scoped, tag = 'scratch operand']
  #allocation7 [shape = 'f32[8,32]{1,0:T(8,128)}', space=vmem, size = 0x1000, scoped, tag = 'scratch operand']
  %s0 = inlined_call_operand.vmem [shape: f32[8,8,16], index: 0, kind: input, shape index: {}, may-alias: {0,1}]
  %s1 = inlined_call_operand.vmem [shape: f32[8,8,16], index: 1, kind: input, shape index: {}, may-alias: {0,1}]
  %s2 = inlined_call_operand.vmem [shape: f32[16,128], index: 2, kind: input, shape index: {}]
  %s3 = inlined_call_operand.vmem [shape: f32[1,128], index: 3, kind: input, shape index: {}]
  %s4 = inlined_call_operand.vmem [shape: f32[32,128], index: 4, kind: input, shape index: {}]
  %s5 = inlined_call_operand.vmem [shape: f32[16,128], index: 5, kind: input, shape index: {}]
  %s6 = inlined_call_operand.vmem [shape: f32[1,128], index: 6, kind: input, shape index: {}]
  %s7 = inlined_call_operand.vmem [shape: f32[32,128], index: 7, kind: input, shape index: {}]
  %s8 = inlined_call_operand.vmem [shape: f32[8,8,32], index: 8, kind: output, shape index: {0}]
  %s9 = inlined_call_operand.vmem [shape: f32[8,8,32], index: 9, kind: output, shape index: {1}]
  %10 = xla_tuple %s8, %s9
  %s11 = sld [smem:[#allocation0]]
  $region54: #{lstm_sequence_forward.1} parent=0
    _
  %s13 = ssub.s32 1, %s11
  %s14 = scalar_select 0, %s13, %s11
  // Predicated region
  $region2: #{lstm_sequence_forward.1} parent=0 // pred_check
    _
  $region3: #{lstm_sequence_forward.1} parent=0 // pred_check_branch
    %16 = sbr.rel (0) target = $region5
  $region4: #{lstm_sequence_forward.1} parent=0 // pred_region
    _
  $region5: #{lstm_sequence_forward.1} parent=0 // pred_fallthru
    _
  // Predicated region
  $region6: #{lstm_sequence_forward.1} parent=0 // pred_check
    _
  $region7: #{lstm_sequence_forward.1} parent=0 // pred_check_branch
    %18 = sbr.rel (0) target = $region9
  $region8: #{lstm_sequence_forward.1} parent=0 // pred_region
    %s19 = ssub.s32 0, 0
    %s20 = smul.u32 8, %s19
    %p21 = scmp.lt.s32.totalorder %s20, 7
    %s22 = scalar_select %p21, %s20, 7
    %s23 = smul.addr %s22, 8
    %s24 = scalar_lea.vmem %s1, %s23
    %s25 = ssub.s32 0, 0
    %s26 = smul.u32 8, %s25
  $region9: #{lstm_sequence_forward.1} parent=0 // pred_fallthru
    _
  // Predicated region
  $region10: #{lstm_sequence_forward.1} parent=0 // pred_check
    _
  $region11: #{lstm_sequence_forward.1} parent=0 // pred_check_branch
    %28 = sbr.rel (0) target = $region13
  $region12: #{lstm_sequence_forward.1} parent=0 // pred_region
    _
  $region13: #{lstm_sequence_forward.1} parent=0 // pred_fallthru
    _
  // Predicated region
  $region14: #{lstm_sequence_forward.1} parent=0 // pred_check
    _
  $region15: #{lstm_sequence_forward.1} parent=0 // pred_check_branch
    %30 = sbr.rel (0) target = $region17
  $region16: #{lstm_sequence_forward.1} parent=0 // pred_region
    _
  $region17: #{lstm_sequence_forward.1} parent=0 // pred_fallthru
    _
  // Predicated region
  $region18: #{lstm_sequence_forward.1} parent=0 // pred_check
    _
  $region19: #{lstm_sequence_forward.1} parent=0 // pred_check_branch
    %32 = sbr.rel (0) target = $region21
  $region20: #{lstm_sequence_forward.1} parent=0 // pred_region
    _
  $region21: #{lstm_sequence_forward.1} parent=0 // pred_fallthru
    _
  // Predicated region
  $region22: #{lstm_sequence_forward.1} parent=0 // pred_check
    _
  $region23: #{lstm_sequence_forward.1} parent=0 // pred_check_branch
    %34 = sbr.rel (0) target = $region25
  $region24: #{lstm_sequence_forward.1} parent=0 // pred_region
    _
  $region25: #{lstm_sequence_forward.1} parent=0 // pred_fallthru
    _
  // Predicated region
  $region26: #{lstm_sequence_forward.1} parent=0 // pred_check
    _
  $region27: #{lstm_sequence_forward.1} parent=0 // pred_check_branch
    %36 = sbr.rel (0) target = $region29
  $region28: #{lstm_sequence_forward.1} parent=0 // pred_region
    _
  $region29: #{lstm_sequence_forward.1} parent=0 // pred_fallthru
    _
  // Predicated region
  $region30: #{lstm_sequence_forward.1} parent=0 // pred_check
    _
  $region31: #{lstm_sequence_forward.1} parent=0 // pred_check_branch
    %38 = sbr.rel (0) target = $region33
  $region32: #{lstm_sequence_forward.1} parent=0 // pred_region
    _
  $region33: #{lstm_sequence_forward.1} parent=0 // pred_fallthru
    _
  %s39 = ssub.s32 0, 0
  %s40 = smul.u32 8, %s39
  %p41 = scmp.lt.s32.totalorder %s40, 7
  %s42 = scalar_select %p41, %s40, 7
  %s43 = smul.addr %s42, 8
  %s44 = scalar_lea.vmem %s1, %s43
  %s45 = ssub.s32 0, 0
  %s46 = smul.u32 8, %s45
  %p47 = scmp.lt.s32.totalorder %s46, 7
  %s48 = scalar_select %p47, %s46, 7
  %s49 = smul.addr %s48, 8
  %s50 = scalar_lea.vmem %s9, %s49
  %s51 = ssub.s32 0, 0
  %s52 = smul.u32 8, %s51
  %p53 = scmp.lt.s32.totalorder %s52, 7
  %s54 = scalar_select %p53, %s52, 7
  %s55 = smul.addr %s54, 8
  %s56 = scalar_lea.vmem %s1, %s55
  %s57 = ssub.s32 0, 0
  %s58 = smul.u32 8, %s57
  %s59 = ssub.s32 0, 0
  %s60 = smul.u32 8, %s59
  %p61 = scmp.lt.s32.totalorder %s60, 7
  %s62 = scalar_select %p61, %s60, 7
  %s63 = smul.addr %s62, 8
  %s64 = scalar_lea.vmem %s9, %s63
  %s65 = ssub.s32 0, 0
  %s66 = smul.u32 8, %s65
  %p67 = scmp.eq.s32.totalorder 0, 0
  // Predicated region
  $region34: #{lstm_sequence_forward.1} parent=0 // pred_check
    %p68 = pneg %p67
  $region35: #{lstm_sequence_forward.1} parent=0 // pred_check_branch
    %70 = sbr.rel (%p68) target = $region37
  $region36: #{lstm_sequence_forward.1} parent=0 // pred_region
    %vm71 = vcmask 261120
    %72 = vst.msk [vmem:[#allocation4] sm:$0xff] %vm71, 0.0
    %73 = vst.msk [vmem:[#allocation5] sm:$0xff] %vm71, 0.0
    %74 = vst.msk [vmem:[#allocation6] sm:$0xff] %vm71, 0.0
    %75 = vst.msk [vmem:[#allocation7] sm:$0xff] %vm71, 0.0
  $region37: #{lstm_sequence_forward.1} parent=0 // pred_fallthru
    _
  %v76 = vld [vmem:[%s0] sm:$0xff]
  %v77 = vld [vmem:[%s0 + $0x8] sm:$0xff]
  %v78 = vld [vmem:[%s0 + $0x10] sm:$0xff]
  %v79 = vld [vmem:[%s0 + $0x18] sm:$0xff]
  %v80 = vld [vmem:[%s0 + $0x20] sm:$0xff]
  %v81 = vld [vmem:[%s0 + $0x28] sm:$0xff]
  %v82 = vld [vmem:[%s0 + $0x30] sm:$0xff]
  %v83 = vld [vmem:[%s0 + $0x38] sm:$0xff]
  %v84 = vld [vmem:[%s56] sm:$0xff]
  %v85 = vld [vmem:[%s56 + $0x8] sm:$0xff]
  %v86 = vld [vmem:[%s56 + $0x10] sm:$0xff]
  %v87 = vld [vmem:[%s56 + $0x18] sm:$0xff]
  %v88 = vld [vmem:[%s56 + $0x20] sm:$0xff]
  %v89 = vld [vmem:[%s56 + $0x28] sm:$0xff]
  %v90 = vld [vmem:[%s56 + $0x30] sm:$0xff]
  %v91 = vld [vmem:[%s56 + $0x38] sm:$0xff]
  %v92 = vld [vmem:[%s2] sm:$0xff]
  %v93 = vld [vmem:[%s2 + $0x8] sm:$0xff]
  %v94 = vld [vmem:[%s3] sm:$0x1]
  %v96 = vlaneseq
  %v97 = vshrl.u32 %v96, 7
  %v98 = vsub.s32 0, %v97
  %v99 = vrot.slane %v94, %v98
  %vm101 = vcmask 130048
  %v103 = vsel %vm101, %v76, 0
  %v106 = vsel %vm101, %v77, 0
  %v109 = vsel %vm101, %v78, 0
  %v112 = vsel %vm101, %v79, 0
  %v115 = vsel %vm101, %v80, 0
  %v118 = vsel %vm101, %v81, 0
  %v121 = vsel %vm101, %v82, 0
  %v124 = vsel %vm101, %v83, 0
  %126 = vmatprep.subr.mxu0 0.0
  %127 = vmatpush1.msra.mxu0 %v92
  %128 = vmatprep.subr.mxu0 0.0
  %129 = vmatpush1.msra.mxu0 %v93
  %130 = vmatprep.subr.mxu0 0.0
  %131 = vmatpush1.msra.mxu0 0.0
  %132 = vmatprep.subr.mxu0 0.0
  %133 = vmatpush1.msra.mxu0 0.0
  %134 = vmatprep.subr.mxu0 0.0
  %135 = vmatpush1.msra.mxu0 0.0
  %136 = vmatprep.subr.mxu0 0.0
  %137 = vmatpush1.msra.mxu0 0.0
  %138 = vmatprep.subr.mxu0 0.0
  %139 = vmatpush1.msra.mxu0 0.0
  %140 = vmatprep.subr.mxu0 0.0
  %141 = vmatpush1.msra.mxu0 0.0
  %142 = vmatprep.subr.mxu0 0.0
  %143 = vmatpush1.msra.mxu0 0.0
  %144 = vmatprep.subr.mxu0 0.0
  %145 = vmatpush1.msra.mxu0 0.0
  %146 = vmatprep.subr.mxu0 0.0
  %147 = vmatpush1.msra.mxu0 0.0
  %148 = vmatprep.subr.mxu0 0.0
  %149 = vmatpush1.msra.mxu0 0.0
  %150 = vmatprep.subr.mxu0 0.0
  %151 = vmatpush1.msra.mxu0 0.0
  %152 = vmatprep.subr.mxu0 0.0
  %153 = vmatpush1.msra.mxu0 0.0
  %154 = vmatprep.subr.mxu0 0.0
  %155 = vmatpush1.msra.mxu0 0.0
  %156 = vmatprep.subr.mxu0 0.0
  %157 = vmatpush1.msra.mxu0 0.0
  %158 = vmatprep.subr.mxu0 0.0
  %159 = vmatpush1.msra.mxu0 0.0
  %160 = vmatprep.subr.mxu0 0.0
  %161 = vmatpush1.msra.mxu0 0.0
  %162 = vmatprep.subr.mxu0 0.0
  %163 = vmatpush1.msra.mxu0 0.0
  %164 = vmatprep.subr.mxu0 0.0
  %165 = vmatpush1.msra.mxu0 0.0
  %166 = vmatprep.subr.mxu0 0.0
  %167 = vmatpush1.msra.mxu0 0.0
  %168 = vmatprep.subr.mxu0 0.0
  %169 = vmatpush1.msra.mxu0 0.0
  %170 = vmatprep.subr.mxu0 0.0
  %171 = vmatpush1.msra.mxu0 0.0
  %172 = vmatprep.subr.mxu0 0.0
  %173 = vmatpush1.msra.mxu0 0.0
  %174 = vmatprep.subr.mxu0 0.0
  %175 = vmatpush1.msra.mxu0 0.0
  %176 = vmatprep.subr.mxu0 0.0
  %177 = vmatpush1.msra.mxu0 0.0
  %178 = vmatprep.subr.mxu0 0.0
  %179 = vmatpush1.msra.mxu0 0.0
  %180 = vmatprep.subr.mxu0 0.0
  %181 = vmatpush1.msra.mxu0 0.0
  %182 = vmatprep.subr.mxu0 0.0
  %183 = vmatpush1.msra.mxu0 0.0
  %184 = vmatprep.subr.mxu0 0.0
  %185 = vmatpush1.msra.mxu0 0.0
  %186 = vmatprep.subr.mxu0 0.0
  %187 = vmatpush1.msra.mxu0 0.0
  %188 = vmatprep.subr.mxu0 0.0
  %189 = vmatpush1.msra.mxu0 0.0
  %190 = vmatprep.mubr.f32.mxu0 0.0
  %191 = vmatmul.mubr.f32.gmra.mrb[0].mxu0 %v103
  %v192 = vpop.f32.mrb[0].mxu0
  %v193 = vadd.f32 %v99, %v192
  %v194 = vpop.f32.mrb[0].mxu0
  %195 = vmatprep.mubr.f32.mxu0 0.0
  %196 = vmatmul.mubr.f32.gmra.mrb[0].mxu0 %v106
  %v197 = vpop.f32.mrb[0].mxu0
  %v198 = vadd.f32 %v99, %v197
  %v199 = vpop.f32.mrb[0].mxu0
  %200 = vmatprep.mubr.f32.mxu0 0.0
  %201 = vmatmul.mubr.f32.gmra.mrb[0].mxu0 %v109
  %v202 = vpop.f32.mrb[0].mxu0
  %v203 = vadd.f32 %v99, %v202
  %v204 = vpop.f32.mrb[0].mxu0
  %205 = vmatprep.mubr.f32.mxu0 0.0
  %206 = vmatmul.mubr.f32.gmra.mrb[0].mxu0 %v112
  %v207 = vpop.f32.mrb[0].mxu0
  %v208 = vadd.f32 %v99, %v207
  %v209 = vpop.f32.mrb[0].mxu0
  %210 = vmatprep.mubr.f32.mxu0 0.0
  %211 = vmatmul.mubr.f32.gmra.mrb[0].mxu0 %v115
  %v212 = vpop.f32.mrb[0].mxu0
  %v213 = vadd.f32 %v99, %v212
  %v214 = vpop.f32.mrb[0].mxu0
  %215 = vmatprep.mubr.f32.mxu0 0.0
  %216 = vmatmul.mubr.f32.gmra.mrb[0].mxu0 %v118
  %v217 = vpop.f32.mrb[0].mxu0
  %v218 = vadd.f32 %v99, %v217
  %v219 = vpop.f32.mrb[0].mxu0
  %220 = vmatprep.mubr.f32.mxu0 0.0
  %221 = vmatmul.mubr.f32.gmra.mrb[0].mxu0 %v121
  %v222 = vpop.f32.mrb[0].mxu0
  %v223 = vadd.f32 %v99, %v222
  %v224 = vpop.f32.mrb[0].mxu0
  %225 = vmatprep.mubr.f32.mxu0 0.0
  %226 = vmatmul.mubr.f32.gmra.mrb[0].mxu0 %v124
  %v227 = vpop.f32.mrb[0].mxu0
  %v228 = vadd.f32 %v99, %v227
  %v229 = vpop.f32.mrb[0].mxu0
  %230 = vdwg.mxu0
  %231 = vst [vmem:[#allocation2] sm:$0xff] %v193
  %232 = vst [vmem:[#allocation2 + $0x8] sm:$0xff] %v198
  %233 = vst [vmem:[#allocation2 + $0x10] sm:$0xff] %v203
  %234 = vst [vmem:[#allocation2 + $0x18] sm:$0xff] %v208
  %235 = vst [vmem:[#allocation2 + $0x20] sm:$0xff] %v213
  %236 = vst [vmem:[#allocation2 + $0x28] sm:$0xff] %v218
  %237 = vst [vmem:[#allocation2 + $0x30] sm:$0xff] %v223
  %238 = vst [vmem:[#allocation2 + $0x38] sm:$0xff] %v228
  %v239 = vld [vmem:[%s5] sm:$0xff]
  %v240 = vld [vmem:[%s5 + $0x8] sm:$0xff]
  %v241 = vld [vmem:[%s6] sm:$0x1]
  %v243 = vlaneseq
  %v244 = vshrl.u32 %v243, 7
  %v245 = vsub.s32 0, %v244
  %v246 = vrot.slane %v241, %v245
  %v249 = vsel %vm101, %v84, 0
  %v252 = vsel %vm101, %v85, 0
  %v255 = vsel %vm101, %v86, 0
  %v258 = vsel %vm101, %v87, 0
  %v261 = vsel %vm101, %v88, 0
  %v264 = vsel %vm101, %v89, 0
  %v267 = vsel %vm101, %v90, 0
  %v270 = vsel %vm101, %v91, 0
  %272 = vmatprep.subr.mxu0 0.0
  %273 = vmatpush1.msra.mxu0 %v239
  %274 = vmatprep.subr.mxu0 0.0
  %275 = vmatpush1.msra.mxu0 %v240
  %276 = vmatprep.subr.mxu0 0.0
  %277 = vmatpush1.msra.mxu0 0.0
  %278 = vmatprep.subr.mxu0 0.0
  %279 = vmatpush1.msra.mxu0 0.0
  %280 = vmatprep.subr.mxu0 0.0
  %281 = vmatpush1.msra.mxu0 0.0
  %282 = vmatprep.subr.mxu0 0.0
  %283 = vmatpush1.msra.mxu0 0.0
  %284 = vmatprep.subr.mxu0 0.0
  %285 = vmatpush1.msra.mxu0 0.0
  %286 = vmatprep.subr.mxu0 0.0
  %287 = vmatpush1.msra.mxu0 0.0
  %288 = vmatprep.subr.mxu0 0.0
  %289 = vmatpush1.msra.mxu0 0.0
  %290 = vmatprep.subr.mxu0 0.0
  %291 = vmatpush1.msra.mxu0 0.0
  %292 = vmatprep.subr.mxu0 0.0
  %293 = vmatpush1.msra.mxu0 0.0
  %294 = vmatprep.subr.mxu0 0.0
  %295 = vmatpush1.msra.mxu0 0.0
  %296 = vmatprep.subr.mxu0 0.0
  %297 = vmatpush1.msra.mxu0 0.0
  %298 = vmatprep.subr.mxu0 0.0
  %299 = vmatpush1.msra.mxu0 0.0
  %300 = vmatprep.subr.mxu0 0.0
  %301 = vmatpush1.msra.mxu0 0.0
  %302 = vmatprep.subr.mxu0 0.0
  %303 = vmatpush1.msra.mxu0 0.0
  %304 = vmatprep.subr.mxu0 0.0
  %305 = vmatpush1.msra.mxu0 0.0
  %306 = vmatprep.subr.mxu0 0.0
  %307 = vmatpush1.msra.mxu0 0.0
  %308 = vmatprep.subr.mxu0 0.0
  %309 = vmatpush1.msra.mxu0 0.0
  %310 = vmatprep.subr.mxu0 0.0
  %311 = vmatpush1.msra.mxu0 0.0
  %312 = vmatprep.subr.mxu0 0.0
  %313 = vmatpush1.msra.mxu0 0.0
  %314 = vmatprep.subr.mxu0 0.0
  %315 = vmatpush1.msra.mxu0 0.0
  %316 = vmatprep.subr.mxu0 0.0
  %317 = vmatpush1.msra.mxu0 0.0
  %318 = vmatprep.subr.mxu0 0.0
  %319 = vmatpush1.msra.mxu0 0.0
  %320 = vmatprep.subr.mxu0 0.0
  %321 = vmatpush1.msra.mxu0 0.0
  %322 = vmatprep.subr.mxu0 0.0
  %323 = vmatpush1.msra.mxu0 0.0
  %324 = vmatprep.subr.mxu0 0.0
  %325 = vmatpush1.msra.mxu0 0.0
  %326 = vmatprep.subr.mxu0 0.0
  %327 = vmatpush1.msra.mxu0 0.0
  %328 = vmatprep.subr.mxu0 0.0
  %329 = vmatpush1.msra.mxu0 0.0
  %330 = vmatprep.subr.mxu0 0.0
  %331 = vmatpush1.msra.mxu0 0.0
  %332 = vmatprep.subr.mxu0 0.0
  %333 = vmatpush1.msra.mxu0 0.0
  %334 = vmatprep.subr.mxu0 0.0
  %335 = vmatpush1.msra.mxu0 0.0
  %336 = vmatprep.mubr.f32.mxu0 0.0
  %337 = vmatmul.mubr.f32.gmra.mrb[0].mxu0 %v249
  %v338 = vpop.f32.mrb[0].mxu0
  %v339 = vadd.f32 %v246, %v338
  %v340 = vpop.f32.mrb[0].mxu0
  %341 = vmatprep.mubr.f32.mxu0 0.0
  %342 = vmatmul.mubr.f32.gmra.mrb[0].mxu0 %v252
  %v343 = vpop.f32.mrb[0].mxu0
  %v344 = vadd.f32 %v246, %v343
  %v345 = vpop.f32.mrb[0].mxu0
  %346 = vmatprep.mubr.f32.mxu0 0.0
  %347 = vmatmul.mubr.f32.gmra.mrb[0].mxu0 %v255
  %v348 = vpop.f32.mrb[0].mxu0
  %v349 = vadd.f32 %v246, %v348
  %v350 = vpop.f32.mrb[0].mxu0
  %351 = vmatprep.mubr.f32.mxu0 0.0
  %352 = vmatmul.mubr.f32.gmra.mrb[0].mxu0 %v258
  %v353 = vpop.f32.mrb[0].mxu0
  %v354 = vadd.f32 %v246, %v353
  %v355 = vpop.f32.mrb[0].mxu0
  %356 = vmatprep.mubr.f32.mxu0 0.0
  %357 = vmatmul.mubr.f32.gmra.mrb[0].mxu0 %v261
  %v358 = vpop.f32.mrb[0].mxu0
  %v359 = vadd.f32 %v246, %v358
  %v360 = vpop.f32.mrb[0].mxu0
  %361 = vmatprep.mubr.f32.mxu0 0.0
  %362 = vmatmul.mubr.f32.gmra.mrb[0].mxu0 %v264
  %v363 = vpop.f32.mrb[0].mxu0
  %v364 = vadd.f32 %v246, %v363
  %v365 = vpop.f32.mrb[0].mxu0
  %366 = vmatprep.mubr.f32.mxu0 0.0
  %367 = vmatmul.mubr.f32.gmra.mrb[0].mxu0 %v267
  %v368 = vpop.f32.mrb[0].mxu0
  %v369 = vadd.f32 %v246, %v368
  %v370 = vpop.f32.mrb[0].mxu0
  %371 = vmatprep.mubr.f32.mxu0 0.0
  %372 = vmatmul.mubr.f32.gmra.mrb[0].mxu0 %v270
  %v373 = vpop.f32.mrb[0].mxu0
  %v374 = vadd.f32 %v246, %v373
  %v375 = vpop.f32.mrb[0].mxu0
  %376 = vdwg.mxu0
  %377 = vst [vmem:[#allocation3] sm:$0xff] %v339
  %378 = vst [vmem:[#allocation3 + $0x8] sm:$0xff] %v344
  %379 = vst [vmem:[#allocation3 + $0x10] sm:$0xff] %v349
  %380 = vst [vmem:[#allocation3 + $0x18] sm:$0xff] %v354
  %381 = vst [vmem:[#allocation3 + $0x20] sm:$0xff] %v359
  %382 = vst [vmem:[#allocation3 + $0x28] sm:$0xff] %v364
  %383 = vst [vmem:[#allocation3 + $0x30] sm:$0xff] %v369
  %384 = vst [vmem:[#allocation3 + $0x38] sm:$0xff] %v374
  %v385 = vld [vmem:[%s4] sm:$0xff]
  %v386 = vld [vmem:[%s4 + $0x8] sm:$0xff]
  %v387 = vld [vmem:[%s4 + $0x10] sm:$0xff]
  %v388 = vld [vmem:[%s4 + $0x18] sm:$0xff]
  %v389 = vld [vmem:[%s7] sm:$0xff]
  %v390 = vld [vmem:[%s7 + $0x8] sm:$0xff]
  %v391 = vld [vmem:[%s7 + $0x10] sm:$0xff]
  %v392 = vld [vmem:[%s7 + $0x18] sm:$0xff]
  %s393 = smul.u32 0, 8
  %s394 = ssub.s32 0, 0
  %s395 = smul.u32 %s394, 8
  %v396 = vld [vmem:[#allocation4] sm:$0xff]
  %v397 = vld [vmem:[#allocation5] sm:$0xff]
  %v398 = vld [vmem:[#allocation6] sm:$0xff]
  %v399 = vld [vmem:[#allocation7] sm:$0xff]
  %v400 = vld [vmem:[#allocation2] sm:$0xff]
  %vm401 = vcmask 261120
  %v403 = vsel %vm401, %v396, 0
  %405 = vmatprep.subr.mxu0 0.0
  %406 = vmatpush1.msra.mxu0 %v385
  %407 = vmatprep.subr.mxu0 0.0
  %408 = vmatpush1.msra.mxu0 %v386
  %409 = vmatprep.subr.mxu0 0.0
  %410 = vmatpush1.msra.mxu0 %v387
  %411 = vmatprep.subr.mxu0 0.0
  %412 = vmatpush1.msra.mxu0 %v388
  %413 = vmatprep.subr.mxu0 0.0
  %414 = vmatpush1.msra.mxu0 0.0
  %415 = vmatprep.subr.mxu0 0.0
  %416 = vmatpush1.msra.mxu0 0.0
  %417 = vmatprep.subr.mxu0 0.0
  %418 = vmatpush1.msra.mxu0 0.0
  %419 = vmatprep.subr.mxu0 0.0
  %420 = vmatpush1.msra.mxu0 0.0
  %421 = vmatprep.subr.mxu0 0.0
  %422 = vmatpush1.msra.mxu0 0.0
  %423 = vmatprep.subr.mxu0 0.0
  %424 = vmatpush1.msra.mxu0 0.0
  %425 = vmatprep.subr.mxu0 0.0
  %426 = vmatpush1.msra.mxu0 0.0
  %427 = vmatprep.subr.mxu0 0.0
  %428 = vmatpush1.msra.mxu0 0.0
  %429 = vmatprep.subr.mxu0 0.0
  %430 = vmatpush1.msra.mxu0 0.0
  %431 = vmatprep.subr.mxu0 0.0
  %432 = vmatpush1.msra.mxu0 0.0
  %433 = vmatprep.subr.mxu0 0.0
  %434 = vmatpush1.msra.mxu0 0.0
  %435 = vmatprep.subr.mxu0 0.0
  %436 = vmatpush1.msra.mxu0 0.0
  %437 = vmatprep.subr.mxu0 0.0
  %438 = vmatpush1.msra.mxu0 0.0
  %439 = vmatprep.subr.mxu0 0.0
  %440 = vmatpush1.msra.mxu0 0.0
  %441 = vmatprep.subr.mxu0 0.0
  %442 = vmatpush1.msra.mxu0 0.0
  %443 = vmatprep.subr.mxu0 0.0
  %444 = vmatpush1.msra.mxu0 0.0
  %445 = vmatprep.subr.mxu0 0.0
  %446 = vmatpush1.msra.mxu0 0.0
  %447 = vmatprep.subr.mxu0 0.0
  %448 = vmatpush1.msra.mxu0 0.0
  %449 = vmatprep.subr.mxu0 0.0
  %450 = vmatpush1.msra.mxu0 0.0
  %451 = vmatprep.subr.mxu0 0.0
  %452 = vmatpush1.msra.mxu0 0.0
  %453 = vmatprep.subr.mxu0 0.0
  %454 = vmatpush1.msra.mxu0 0.0
  %455 = vmatprep.subr.mxu0 0.0
  %456 = vmatpush1.msra.mxu0 0.0
  %457 = vmatprep.subr.mxu0 0.0
  %458 = vmatpush1.msra.mxu0 0.0
  %459 = vmatprep.subr.mxu0 0.0
  %460 = vmatpush1.msra.mxu0 0.0
  %461 = vmatprep.subr.mxu0 0.0
  %462 = vmatpush1.msra.mxu0 0.0
  %463 = vmatprep.subr.mxu0 0.0
  %464 = vmatpush1.msra.mxu0 0.0
  %465 = vmatprep.subr.mxu0 0.0
  %466 = vmatpush1.msra.mxu0 0.0
  %467 = vmatprep.subr.mxu0 0.0
  %468 = vmatpush1.msra.mxu0 0.0
  %469 = vmatprep.mubr.f32.mxu0 0.0
  %470 = vmatmul.mubr.f32.gmra.mrb[0].mxu0 %v403
  %v471 = vpop.f32.mrb[0].mxu0
  %v472 = vadd.f32 0.0, %v471
  %v473 = vpop.f32.mrb[0].mxu0
  %474 = vdwg.mxu0
  %v475 = vadd.f32 %v400, %v472
  %s476 = scalar_lea.vmem [#allocation3], 56
  %v477 = vld [vmem:[%s476] sm:$0xff]
  %v479 = vsel %vm401, %v398, 0
  %481 = vmatprep.subr.mxu0 0.0
  %482 = vmatpush1.msra.mxu0 %v389
  %483 = vmatprep.subr.mxu0 0.0
  %484 = vmatpush1.msra.mxu0 %v390
  %485 = vmatprep.subr.mxu0 0.0
  %486 = vmatpush1.msra.mxu0 %v391
  %487 = vmatprep.subr.mxu0 0.0
  %488 = vmatpush1.msra.mxu0 %v392
  %489 = vmatprep.subr.mxu0 0.0
  %490 = vmatpush1.msra.mxu0 0.0
  %491 = vmatprep.subr.mxu0 0.0
  %492 = vmatpush1.msra.mxu0 0.0
  %493 = vmatprep.subr.mxu0 0.0
  %494 = vmatpush1.msra.mxu0 0.0
  %495 = vmatprep.subr.mxu0 0.0
  %496 = vmatpush1.msra.mxu0 0.0
  %497 = vmatprep.subr.mxu0 0.0
  %498 = vmatpush1.msra.mxu0 0.0
  %499 = vmatprep.subr.mxu0 0.0
  %500 = vmatpush1.msra.mxu0 0.0
  %501 = vmatprep.subr.mxu0 0.0
  %502 = vmatpush1.msra.mxu0 0.0
  %503 = vmatprep.subr.mxu0 0.0
  %504 = vmatpush1.msra.mxu0 0.0
  %505 = vmatprep.subr.mxu0 0.0
  %506 = vmatpush1.msra.mxu0 0.0
  %507 = vmatprep.subr.mxu0 0.0
  %508 = vmatpush1.msra.mxu0 0.0
  %509 = vmatprep.subr.mxu0 0.0
  %510 = vmatpush1.msra.mxu0 0.0
  %511 = vmatprep.subr.mxu0 0.0
  %512 = vmatpush1.msra.mxu0 0.0
  %513 = vmatprep.subr.mxu0 0.0
  %514 = vmatpush1.msra.mxu0 0.0
  %515 = vmatprep.subr.mxu0 0.0
  %516 = vmatpush1.msra.mxu0 0.0
  %517 = vmatprep.subr.mxu0 0.0
  %518 = vmatpush1.msra.mxu0 0.0
  %519 = vmatprep.subr.mxu0 0.0
  %520 = vmatpush1.msra.mxu0 0.0
  %521 = vmatprep.subr.mxu0 0.0
  %522 = vmatpush1.msra.mxu0 0.0
  %523 = vmatprep.subr.mxu0 0.0
  %524 = vmatpush1.msra.mxu0 0.0
  %525 = vmatprep.subr.mxu0 0.0
  %526 = vmatpush1.msra.mxu0 0.0
  %527 = vmatprep.subr.mxu0 0.0
  %528 = vmatpush1.msra.mxu0 0.0
  %529 = vmatprep.subr.mxu0 0.0
  %530 = vmatpush1.msra.mxu0 0.0
  %531 = vmatprep.subr.mxu0 0.0
  %532 = vmatpush1.msra.mxu0 0.0
  %533 = vmatprep.subr.mxu0 0.0
  %534 = vmatpush1.msra.mxu0 0.0
  %535 = vmatprep.subr.mxu0 0.0
  %536 = vmatpush1.msra.mxu0 0.0
  %537 = vmatprep.subr.mxu0 0.0
  %538 = vmatpush1.msra.mxu0 0.0
  %539 = vmatprep.subr.mxu0 0.0
  %540 = vmatpush1.msra.mxu0 0.0
  %541 = vmatprep.subr.mxu0 0.0
  %542 = vmatpush1.msra.mxu0 0.0
  %543 = vmatprep.subr.mxu0 0.0
  %544 = vmatpush1.msra.mxu0 0.0
  %545 = vmatprep.mubr.f32.mxu0 0.0
  %546 = vmatmul.mubr.f32.gmra.mrb[0].mxu0 %v479
  %v547 = vpop.f32.mrb[0].mxu0
  %v548 = vadd.f32 0.0, %v547
  %v549 = vpop.f32.mrb[0].mxu0
  %550 = vdwg.mxu0
  %v551 = vadd.f32 %v477, %v548
  %v552 = vxor.u32 %v475, 2147483648
  %v553 = vmul.f32 %v552, 1.442695
  %v554 = vpow.pop %v553
  %v555 = vadd.f32 %v554, 1.0
  %v556 = vrcp.pop %v555
  %v557 = vmul.f32 1.0, %v556
  %v558 = vtanh.pop %v475
  %560 = vrot.lane.b32.xlu0 %v397, 32
  %v561 = vpop.permute.xlu0 %560
  %v563 = vmul.f32 %v557, %v561
  %565 = vrot.lane.b32.xlu0 %v558, 64
  %v566 = vpop.permute.xlu0 %565
  %v568 = vmul.f32 %v557, %v566
  %570 = vrot.lane.b32.xlu0 %v568, 32
  %v571 = vpop.permute.xlu0 %570
  %v573 = vadd.f32 %v563, %v571
  %v574 = vtanh.pop %v573
  %576 = vrot.lane.b32.xlu0 %v574, 64
  %v577 = vpop.permute.xlu0 %576
  %v579 = vmul.f32 %v557, %v577
  %v580 = vxor.u32 %v551, 2147483648
  %v581 = vmul.f32 %v580, 1.442695
  %v582 = vpow.pop %v581
  %v583 = vadd.f32 %v582, 1.0
  %v584 = vrcp.pop %v583
  %v585 = vmul.f32 1.0, %v584
  %v586 = vtanh.pop %v551
  %588 = vrot.lane.b32.xlu0 %v399, 32
  %v589 = vpop.permute.xlu0 %588
  %v591 = vmul.f32 %v585, %v589
  %593 = vrot.lane.b32.xlu0 %v586, 64
  %v594 = vpop.permute.xlu0 %593
  %v596 = vmul.f32 %v585, %v594
  %598 = vrot.lane.b32.xlu0 %v596, 32
  %v599 = vpop.permute.xlu0 %598
  %v601 = vadd.f32 %v591, %v599
  %v602 = vtanh.pop %v601
  %604 = vrot.lane.b32.xlu0 %v602, 64
  %v605 = vpop.permute.xlu0 %604
  %v607 = vmul.f32 %v585, %v605
  %p608 = scmp.lt.s32.totalorder %s393, 8
  %s609 = sadd.s32 %s395, 7
  %p610 = scmp.lt.s32.totalorder %s609, 8
  %s611 = scalar_select %p608, 1, 0
  %v612 = vstv %s611
  %vm613 = vcmp.eq.s32.totalorder %v612, 1
  %614 = vrot.lane.b32.xlu0 %v396, 96
  %v615 = vpop.permute.xlu0 %614
  %v617 = vsel %vm613, %v579, %v615
  %v618 = vsel %vm613, %v573, %v561
  %s619 = scalar_select %p610, 1, 0
  %v620 = vstv %s619
  %vm621 = vcmp.eq.s32.totalorder %v620, 1
  %622 = vrot.lane.b32.xlu0 %v398, 96
  %v623 = vpop.permute.xlu0 %622
  %v625 = vsel %vm621, %v607, %v623
  %v626 = vsel %vm621, %v601, %v589
  %628 = vrot.lane.b32.xlu0 %v617, 32
  %v629 = vpop.permute.xlu0 %628
  %631 = vst.msk [vmem:[%s8] sm:$0xff] %vm401, %v629
  %633 = vrot.lane.b32.xlu0 %v625, 32
  %v634 = vpop.permute.xlu0 %633
  %s636 = scalar_lea.vmem %s64, 56
  %637 = vst.msk [vmem:[%s636] sm:$0xff] %vm401, %v634
  %s638 = scalar_lea.vmem [#allocation2], 8
  %v639 = vld [vmem:[%s638] sm:$0xff]
  %v640 = vsel %vm401, %v629, 0
  %642 = vmatprep.subr.mxu0 0.0
  %643 = vmatpush1.msra.mxu0 %v385
  %644 = vmatprep.subr.mxu0 0.0
  %645 = vmatpush1.msra.mxu0 %v386
  %646 = vmatprep.subr.mxu0 0.0
  %647 = vmatpush1.msra.mxu0 %v387
  %648 = vmatprep.subr.mxu0 0.0
  %649 = vmatpush1.msra.mxu0 %v388
  %650 = vmatprep.subr.mxu0 0.0
  %651 = vmatpush1.msra.mxu0 0.0
  %652 = vmatprep.subr.mxu0 0.0
  %653 = vmatpush1.msra.mxu0 0.0
  %654 = vmatprep.subr.mxu0 0.0
  %655 = vmatpush1.msra.mxu0 0.0
  %656 = vmatprep.subr.mxu0 0.0
  %657 = vmatpush1.msra.mxu0 0.0
  %658 = vmatprep.subr.mxu0 0.0
  %659 = vmatpush1.msra.mxu0 0.0
  %660 = vmatprep.subr.mxu0 0.0
  %661 = vmatpush1.msra.mxu0 0.0
  %662 = vmatprep.subr.mxu0 0.0
  %663 = vmatpush1.msra.mxu0 0.0
  %664 = vmatprep.subr.mxu0 0.0
  %665 = vmatpush1.msra.mxu0 0.0
  %666 = vmatprep.subr.mxu0 0.0
  %667 = vmatpush1.msra.mxu0 0.0
  %668 = vmatprep.subr.mxu0 0.0
  %669 = vmatpush1.msra.mxu0 0.0
  %670 = vmatprep.subr.mxu0 0.0
  %671 = vmatpush1.msra.mxu0 0.0
  %672 = vmatprep.subr.mxu0 0.0
  %673 = vmatpush1.msra.mxu0 0.0
  %674 = vmatprep.subr.mxu0 0.0
  %675 = vmatpush1.msra.mxu0 0.0
  %676 = vmatprep.subr.mxu0 0.0
  %677 = vmatpush1.msra.mxu0 0.0
  %678 = vmatprep.subr.mxu0 0.0
  %679 = vmatpush1.msra.mxu0 0.0
  %680 = vmatprep.subr.mxu0 0.0
  %681 = vmatpush1.msra.mxu0 0.0
  %682 = vmatprep.subr.mxu0 0.0
  %683 = vmatpush1.msra.mxu0 0.0
  %684 = vmatprep.subr.mxu0 0.0
  %685 = vmatpush1.msra.mxu0 0.0
  %686 = vmatprep.subr.mxu0 0.0
  %687 = vmatpush1.msra.mxu0 0.0
  %688 = vmatprep.subr.mxu0 0.0
  %689 = vmatpush1.msra.mxu0 0.0
  %690 = vmatprep.subr.mxu0 0.0
  %691 = vmatpush1.msra.mxu0 0.0
  %692 = vmatprep.subr.mxu0 0.0
  %693 = vmatpush1.msra.mxu0 0.0
  %694 = vmatprep.subr.mxu0 0.0
  %695 = vmatpush1.msra.mxu0 0.0
  %696 = vmatprep.subr.mxu0 0.0
  %697 = vmatpush1.msra.mxu0 0.0
  %698 = vmatprep.subr.mxu0 0.0
  %699 = vmatpush1.msra.mxu0 0.0
  %700 = vmatprep.subr.mxu0 0.0
  %701 = vmatpush1.msra.mxu0 0.0
  %702 = vmatprep.subr.mxu0 0.0
  %703 = vmatpush1.msra.mxu0 0.0
  %704 = vmatprep.subr.mxu0 0.0
  %705 = vmatpush1.msra.mxu0 0.0
  %706 = vmatprep.mubr.f32.mxu0 0.0
  %707 = vmatmul.mubr.f32.gmra.mrb[0].mxu0 %v640
  %v708 = vpop.f32.mrb[0].mxu0
  %v709 = vadd.f32 0.0, %v708
  %v710 = vpop.f32.mrb[0].mxu0
  %711 = vdwg.mxu0
  %v712 = vadd.f32 %v639, %v709
  %s713 = scalar_lea.vmem [#allocation3], 48
  %v714 = vld [vmem:[%s713] sm:$0xff]
  %v715 = vsel %vm401, %v634, 0
  %717 = vmatprep.subr.mxu0 0.0
  %718 = vmatpush1.msra.mxu0 %v389
  %719 = vmatprep.subr.mxu0 0.0
  %720 = vmatpush1.msra.mxu0 %v390
  %721 = vmatprep.subr.mxu0 0.0
  %722 = vmatpush1.msra.mxu0 %v391
  %723 = vmatprep.subr.mxu0 0.0
  %724 = vmatpush1.msra.mxu0 %v392
  %725 = vmatprep.subr.mxu0 0.0
  %726 = vmatpush1.msra.mxu0 0.0
  %727 = vmatprep.subr.mxu0 0.0
  %728 = vmatpush1.msra.mxu0 0.0
  %729 = vmatprep.subr.mxu0 0.0
  %730 = vmatpush1.msra.mxu0 0.0
  %731 = vmatprep.subr.mxu0 0.0
  %732 = vmatpush1.msra.mxu0 0.0
  %733 = vmatprep.subr.mxu0 0.0
  %734 = vmatpush1.msra.mxu0 0.0
  %735 = vmatprep.subr.mxu0 0.0
  %736 = vmatpush1.msra.mxu0 0.0
  %737 = vmatprep.subr.mxu0 0.0
  %738 = vmatpush1.msra.mxu0 0.0
  %739 = vmatprep.subr.mxu0 0.0
  %740 = vmatpush1.msra.mxu0 0.0
  %741 = vmatprep.subr.mxu0 0.0
  %742 = vmatpush1.msra.mxu0 0.0
  %743 = vmatprep.subr.mxu0 0.0
  %744 = vmatpush1.msra.mxu0 0.0
  %745 = vmatprep.subr.mxu0 0.0
  %746 = vmatpush1.msra.mxu0 0.0
  %747 = vmatprep.subr.mxu0 0.0
  %748 = vmatpush1.msra.mxu0 0.0
  %749 = vmatprep.subr.mxu0 0.0
  %750 = vmatpush1.msra.mxu0 0.0
  %751 = vmatprep.subr.mxu0 0.0
  %752 = vmatpush1.msra.mxu0 0.0
  %753 = vmatprep.subr.mxu0 0.0
  %754 = vmatpush1.msra.mxu0 0.0
  %755 = vmatprep.subr.mxu0 0.0
  %756 = vmatpush1.msra.mxu0 0.0
  %757 = vmatprep.subr.mxu0 0.0
  %758 = vmatpush1.msra.mxu0 0.0
  %759 = vmatprep.subr.mxu0 0.0
  %760 = vmatpush1.msra.mxu0 0.0
  %761 = vmatprep.subr.mxu0 0.0
  %762 = vmatpush1.msra.mxu0 0.0
  %763 = vmatprep.subr.mxu0 0.0
  %764 = vmatpush1.msra.mxu0 0.0
  %765 = vmatprep.subr.mxu0 0.0
  %766 = vmatpush1.msra.mxu0 0.0
  %767 = vmatprep.subr.mxu0 0.0
  %768 = vmatpush1.msra.mxu0 0.0
  %769 = vmatprep.subr.mxu0 0.0
  %770 = vmatpush1.msra.mxu0 0.0
  %771 = vmatprep.subr.mxu0 0.0
  %772 = vmatpush1.msra.mxu0 0.0
  %773 = vmatprep.subr.mxu0 0.0
  %774 = vmatpush1.msra.mxu0 0.0
  %775 = vmatprep.subr.mxu0 0.0
  %776 = vmatpush1.msra.mxu0 0.0
  %777 = vmatprep.subr.mxu0 0.0
  %778 = vmatpush1.msra.mxu0 0.0
  %779 = vmatprep.subr.mxu0 0.0
  %780 = vmatpush1.msra.mxu0 0.0
  %781 = vmatprep.mubr.f32.mxu0 0.0
  %782 = vmatmul.mubr.f32.gmra.mrb[0].mxu0 %v715
  %v783 = vpop.f32.mrb[0].mxu0
  %v784 = vadd.f32 0.0, %v783
  %v785 = vpop.f32.mrb[0].mxu0
  %786 = vdwg.mxu0
  %v787 = vadd.f32 %v714, %v784
  %v788 = vxor.u32 %v712, 2147483648
  %v789 = vmul.f32 %v788, 1.442695
  %v790 = vpow.pop %v789
  %v791 = vadd.f32 %v790, 1.0
  %v792 = vrcp.pop %v791
  %v793 = vmul.f32 1.0, %v792
  %v794 = vtanh.pop %v712
  %v795 = vmul.f32 %v793, %v618
  %797 = vrot.lane.b32.xlu0 %v794, 64
  %v798 = vpop.permute.xlu0 %797
  %v800 = vmul.f32 %v793, %v798
  %802 = vrot.lane.b32.xlu0 %v800, 32
  %v803 = vpop.permute.xlu0 %802
  %v805 = vadd.f32 %v795, %v803
  %v806 = vtanh.pop %v805
  %808 = vrot.lane.b32.xlu0 %v806, 64
  %v809 = vpop.permute.xlu0 %808
  %v811 = vmul.f32 %v793, %v809
  %v812 = vxor.u32 %v787, 2147483648
  %v813 = vmul.f32 %v812, 1.442695
  %v814 = vpow.pop %v813
  %v815 = vadd.f32 %v814, 1.0
  %v816 = vrcp.pop %v815
  %v817 = vmul.f32 1.0, %v816
  %v818 = vtanh.pop %v787
  %v819 = vmul.f32 %v817, %v626
  %821 = vrot.lane.b32.xlu0 %v818, 64
  %v822 = vpop.permute.xlu0 %821
  %v824 = vmul.f32 %v817, %v822
  %826 = vrot.lane.b32.xlu0 %v824, 32
  %v827 = vpop.permute.xlu0 %826
  %v829 = vadd.f32 %v819, %v827
  %v830 = vtanh.pop %v829
  %832 = vrot.lane.b32.xlu0 %v830, 64
  %v833 = vpop.permute.xlu0 %832
  %v835 = vmul.f32 %v817, %v833
  %s836 = sadd.s32 %s393, 1
  %p837 = scmp.lt.s32.totalorder %s836, 8
  %s838 = sadd.s32 %s395, 6
  %p839 = scmp.lt.s32.totalorder %s838, 8
  %s840 = scalar_select %p837, 1, 0
  %v841 = vstv %s840
  %vm842 = vcmp.eq.s32.totalorder %v841, 1
  %v843 = vsel %vm842, %v811, %v617
  %v844 = vsel %vm842, %v805, %v618
  %s845 = scalar_select %p839, 1, 0
  %v846 = vstv %s845
  %vm847 = vcmp.eq.s32.totalorder %v846, 1
  %v848 = vsel %vm847, %v835, %v625
  %v849 = vsel %vm847, %v829, %v626
  %851 = vrot.lane.b32.xlu0 %v843, 32
  %v852 = vpop.permute.xlu0 %851
  %s854 = scalar_lea.vmem %s8, 8
  %855 = vst.msk [vmem:[%s854] sm:$0xff] %vm401, %v852
  %857 = vrot.lane.b32.xlu0 %v848, 32
  %v858 = vpop.permute.xlu0 %857
  %s860 = scalar_lea.vmem %s64, 48
  %861 = vst.msk [vmem:[%s860] sm:$0xff] %vm401, %v858
  %s862 = scalar_lea.vmem [#allocation2], 16
  %v863 = vld [vmem:[%s862] sm:$0xff]
  %v864 = vsel %vm401, %v852, 0
  %866 = vmatprep.subr.mxu0 0.0
  %867 = vmatpush1.msra.mxu0 %v385
  %868 = vmatprep.subr.mxu0 0.0
  %869 = vmatpush1.msra.mxu0 %v386
  %870 = vmatprep.subr.mxu0 0.0
  %871 = vmatpush1.msra.mxu0 %v387
  %872 = vmatprep.subr.mxu0 0.0
  %873 = vmatpush1.msra.mxu0 %v388
  %874 = vmatprep.subr.mxu0 0.0
  %875 = vmatpush1.msra.mxu0 0.0
  %876 = vmatprep.subr.mxu0 0.0
  %877 = vmatpush1.msra.mxu0 0.0
  %878 = vmatprep.subr.mxu0 0.0
  %879 = vmatpush1.msra.mxu0 0.0
  %880 = vmatprep.subr.mxu0 0.0
  %881 = vmatpush1.msra.mxu0 0.0
  %882 = vmatprep.subr.mxu0 0.0
  %883 = vmatpush1.msra.mxu0 0.0
  %884 = vmatprep.subr.mxu0 0.0
  %885 = vmatpush1.msra.mxu0 0.0
  %886 = vmatprep.subr.mxu0 0.0
  %887 = vmatpush1.msra.mxu0 0.0
  %888 = vmatprep.subr.mxu0 0.0
  %889 = vmatpush1.msra.mxu0 0.0
  %890 = vmatprep.subr.mxu0 0.0
  %891 = vmatpush1.msra.mxu0 0.0
  %892 = vmatprep.subr.mxu0 0.0
  %893 = vmatpush1.msra.mxu0 0.0
  %894 = vmatprep.subr.mxu0 0.0
  %895 = vmatpush1.msra.mxu0 0.0
  %896 = vmatprep.subr.mxu0 0.0
  %897 = vmatpush1.msra.mxu0 0.0
  %898 = vmatprep.subr.mxu0 0.0
  %899 = vmatpush1.msra.mxu0 0.0
  %900 = vmatprep.subr.mxu0 0.0
  %901 = vmatpush1.msra.mxu0 0.0
  %902 = vmatprep.subr.mxu0 0.0
  %903 = vmatpush1.msra.mxu0 0.0
  %904 = vmatprep.subr.mxu0 0.0
  %905 = vmatpush1.msra.mxu0 0.0
  %906 = vmatprep.subr.mxu0 0.0
  %907 = vmatpush1.msra.mxu0 0.0
  %908 = vmatprep.subr.mxu0 0.0
  %909 = vmatpush1.msra.mxu0 0.0
  %910 = vmatprep.subr.mxu0 0.0
  %911 = vmatpush1.msra.mxu0 0.0
  %912 = vmatprep.subr.mxu0 0.0
  %913 = vmatpush1.msra.mxu0 0.0
  %914 = vmatprep.subr.mxu0 0.0
  %915 = vmatpush1.msra.mxu0 0.0
  %916 = vmatprep.subr.mxu0 0.0
  %917 = vmatpush1.msra.mxu0 0.0
  %918 = vmatprep.subr.mxu0 0.0
  %919 = vmatpush1.msra.mxu0 0.0
  %920 = vmatprep.subr.mxu0 0.0
  %921 = vmatpush1.msra.mxu0 0.0
  %922 = vmatprep.subr.mxu0 0.0
  %923 = vmatpush1.msra.mxu0 0.0
  %924 = vmatprep.subr.mxu0 0.0
  %925 = vmatpush1.msra.mxu0 0.0
  %926 = vmatprep.subr.mxu0 0.0
  %927 = vmatpush1.msra.mxu0 0.0
  %928 = vmatprep.subr.mxu0 0.0
  %929 = vmatpush1.msra.mxu0 0.0
  %930 = vmatprep.mubr.f32.mxu0 0.0
  %931 = vmatmul.mubr.f32.gmra.mrb[0].mxu0 %v864
  %v932 = vpop.f32.mrb[0].mxu0
  %v933 = vadd.f32 0.0, %v932
  %v934 = vpop.f32.mrb[0].mxu0
  %935 = vdwg.mxu0
  %v936 = vadd.f32 %v863, %v933
  %s937 = scalar_lea.vmem [#allocation3], 40
  %v938 = vld [vmem:[%s937] sm:$0xff]
  %v939 = vsel %vm401, %v858, 0
  %941 = vmatprep.subr.mxu0 0.0
  %942 = vmatpush1.msra.mxu0 %v389
  %943 = vmatprep.subr.mxu0 0.0
  %944 = vmatpush1.msra.mxu0 %v390
  %945 = vmatprep.subr.mxu0 0.0
  %946 = vmatpush1.msra.mxu0 %v391
  %947 = vmatprep.subr.mxu0 0.0
  %948 = vmatpush1.msra.mxu0 %v392
  %949 = vmatprep.subr.mxu0 0.0
  %950 = vmatpush1.msra.mxu0 0.0
  %951 = vmatprep.subr.mxu0 0.0
  %952 = vmatpush1.msra.mxu0 0.0
  %953 = vmatprep.subr.mxu0 0.0
  %954 = vmatpush1.msra.mxu0 0.0
  %955 = vmatprep.subr.mxu0 0.0
  %956 = vmatpush1.msra.mxu0 0.0
  %957 = vmatprep.subr.mxu0 0.0
  %958 = vmatpush1.msra.mxu0 0.0
  %959 = vmatprep.subr.mxu0 0.0
  %960 = vmatpush1.msra.mxu0 0.0
  %961 = vmatprep.subr.mxu0 0.0
  %962 = vmatpush1.msra.mxu0 0.0
  %963 = vmatprep.subr.mxu0 0.0
  %964 = vmatpush1.msra.mxu0 0.0
  %965 = vmatprep.subr.mxu0 0.0
  %966 = vmatpush1.msra.mxu0 0.0
  %967 = vmatprep.subr.mxu0 0.0
  %968 = vmatpush1.msra.mxu0 0.0
  %969 = vmatprep.subr.mxu0 0.0
  %970 = vmatpush1.msra.mxu0 0.0
  %971 = vmatprep.subr.mxu0 0.0
  %972 = vmatpush1.msra.mxu0 0.0
  %973 = vmatprep.subr.mxu0 0.0
  %974 = vmatpush1.msra.mxu0 0.0
  %975 = vmatprep.subr.mxu0 0.0
  %976 = vmatpush1.msra.mxu0 0.0
  %977 = vmatprep.subr.mxu0 0.0
  %978 = vmatpush1.msra.mxu0 0.0
  %979 = vmatprep.subr.mxu0 0.0
  %980 = vmatpush1.msra.mxu0 0.0
  %981 = vmatprep.subr.mxu0 0.0
  %982 = vmatpush1.msra.mxu0 0.0
  %983 = vmatprep.subr.mxu0 0.0
  %984 = vmatpush1.msra.mxu0 0.0
  %985 = vmatprep.subr.mxu0 0.0
  %986 = vmatpush1.msra.mxu0 0.0
  %987 = vmatprep.subr.mxu0 0.0
  %988 = vmatpush1.msra.mxu0 0.0
  %989 = vmatprep.subr.mxu0 0.0
  %990 = vmatpush1.msra.mxu0 0.0
  %991 = vmatprep.subr.mxu0 0.0
  %992 = vmatpush1.msra.mxu0 0.0
  %993 = vmatprep.subr.mxu0 0.0
  %994 = vmatpush1.msra.mxu0 0.0
  %995 = vmatprep.subr.mxu0 0.0
  %996 = vmatpush1.msra.mxu0 0.0
  %997 = vmatprep.subr.mxu0 0.0
  %998 = vmatpush1.msra.mxu0 0.0
  %999 = vmatprep.subr.mxu0 0.0
  %1000 = vmatpush1.msra.mxu0 0.0
  %1001 = vmatprep.subr.mxu0 0.0
  %1002 = vmatpush1.msra.mxu0 0.0
  %1003 = vmatprep.subr.mxu0 0.0
  %1004 = vmatpush1.msra.mxu0 0.0
  %1005 = vmatprep.mubr.f32.mxu0 0.0
  %1006 = vmatmul.mubr.f32.gmra.mrb[0].mxu0 %v939
  %v1007 = vpop.f32.mrb[0].mxu0
  %v1008 = vadd.f32 0.0, %v1007
  %v1009 = vpop.f32.mrb[0].mxu0
  %1010 = vdwg.mxu0
  %v1011 = vadd.f32 %v938, %v1008
  %v1012 = vxor.u32 %v936, 2147483648
  %v1013 = vmul.f32 %v1012, 1.442695
  %v1014 = vpow.pop %v1013
  %v1015 = vadd.f32 %v1014, 1.0
  %v1016 = vrcp.pop %v1015
  %v1017 = vmul.f32 1.0, %v1016
  %v1018 = vtanh.pop %v936
  %v1019 = vmul.f32 %v1017, %v844
  %1021 = vrot.lane.b32.xlu0 %v1018, 64
  %v1022 = vpop.permute.xlu0 %1021
  %v1024 = vmul.f32 %v1017, %v1022
  %1026 = vrot.lane.b32.xlu0 %v1024, 32
  %v1027 = vpop.permute.xlu0 %1026
  %v1029 = vadd.f32 %v1019, %v1027
  %v1030 = vtanh.pop %v1029
  %1032 = vrot.lane.b32.xlu0 %v1030, 64
  %v1033 = vpop.permute.xlu0 %1032
  %v1035 = vmul.f32 %v1017, %v1033
  %v1036 = vxor.u32 %v1011, 2147483648
  %v1037 = vmul.f32 %v1036, 1.442695
  %v1038 = vpow.pop %v1037
  %v1039 = vadd.f32 %v1038, 1.0
  %v1040 = vrcp.pop %v1039
  %v1041 = vmul.f32 1.0, %v1040
  %v1042 = vtanh.pop %v1011
  %v1043 = vmul.f32 %v1041, %v849
  %1045 = vrot.lane.b32.xlu0 %v1042, 64
  %v1046 = vpop.permute.xlu0 %1045
  %v1048 = vmul.f32 %v1041, %v1046
  %1050 = vrot.lane.b32.xlu0 %v1048, 32
  %v1051 = vpop.permute.xlu0 %1050
  %v1053 = vadd.f32 %v1043, %v1051
  %v1054 = vtanh.pop %v1053
  %1056 = vrot.lane.b32.xlu0 %v1054, 64
  %v1057 = vpop.permute.xlu0 %1056
  %v1059 = vmul.f32 %v1041, %v1057
  %s1060 = sadd.s32 %s393, 2
  %p1061 = scmp.lt.s32.totalorder %s1060, 8
  %s1062 = sadd.s32 %s395, 5
  %p1063 = scmp.lt.s32.totalorder %s1062, 8
  %s1064 = scalar_select %p1061, 1, 0
  %v1065 = vstv %s1064
  %vm1066 = vcmp.eq.s32.totalorder %v1065, 1
  %v1067 = vsel %vm1066, %v1035, %v843
  %v1068 = vsel %vm1066, %v1029, %v844
  %s1069 = scalar_select %p1063, 1, 0
  %v1070 = vstv %s1069
  %vm1071 = vcmp.eq.s32.totalorder %v1070, 1
  %v1072 = vsel %vm1071, %v1059, %v848
  %v1073 = vsel %vm1071, %v1053, %v849
  %1075 = vrot.lane.b32.xlu0 %v1067, 32
  %v1076 = vpop.permute.xlu0 %1075
  %s1078 = scalar_lea.vmem %s8, 16
  %1079 = vst.msk [vmem:[%s1078] sm:$0xff] %vm401, %v1076
  %1081 = vrot.lane.b32.xlu0 %v1072, 32
  %v1082 = vpop.permute.xlu0 %1081
  %s1084 = scalar_lea.vmem %s64, 40
  %1085 = vst.msk [vmem:[%s1084] sm:$0xff] %vm401, %v1082
  %s1086 = scalar_lea.vmem [#allocation2], 24
  %v1087 = vld [vmem:[%s1086] sm:$0xff]
  %v1088 = vsel %vm401, %v1076, 0
  %1090 = vmatprep.subr.mxu0 0.0
  %1091 = vmatpush1.msra.mxu0 %v385
  %1092 = vmatprep.subr.mxu0 0.0
  %1093 = vmatpush1.msra.mxu0 %v386
  %1094 = vmatprep.subr.mxu0 0.0
  %1095 = vmatpush1.msra.mxu0 %v387
  %1096 = vmatprep.subr.mxu0 0.0
  %1097 = vmatpush1.msra.mxu0 %v388
  %1098 = vmatprep.subr.mxu0 0.0
  %1099 = vmatpush1.msra.mxu0 0.0
  %1100 = vmatprep.subr.mxu0 0.0
  %1101 = vmatpush1.msra.mxu0 0.0
  %1102 = vmatprep.subr.mxu0 0.0
  %1103 = vmatpush1.msra.mxu0 0.0
  %1104 = vmatprep.subr.mxu0 0.0
  %1105 = vmatpush1.msra.mxu0 0.0
  %1106 = vmatprep.subr.mxu0 0.0
  %1107 = vmatpush1.msra.mxu0 0.0
  %1108 = vmatprep.subr.mxu0 0.0
  %1109 = vmatpush1.msra.mxu0 0.0
  %1110 = vmatprep.subr.mxu0 0.0
  %1111 = vmatpush1.msra.mxu0 0.0
  %1112 = vmatprep.subr.mxu0 0.0
  %1113 = vmatpush1.msra.mxu0 0.0
  %1114 = vmatprep.subr.mxu0 0.0
  %1115 = vmatpush1.msra.mxu0 0.0
  %1116 = vmatprep.subr.mxu0 0.0
  %1117 = vmatpush1.msra.mxu0 0.0
  %1118 = vmatprep.subr.mxu0 0.0
  %1119 = vmatpush1.msra.mxu0 0.0
  %1120 = vmatprep.subr.mxu0 0.0
  %1121 = vmatpush1.msra.mxu0 0.0
  %1122 = vmatprep.subr.mxu0 0.0
  %1123 = vmatpush1.msra.mxu0 0.0
  %1124 = vmatprep.subr.mxu0 0.0
  %1125 = vmatpush1.msra.mxu0 0.0
  %1126 = vmatprep.subr.mxu0 0.0
  %1127 = vmatpush1.msra.mxu0 0.0
  %1128 = vmatprep.subr.mxu0 0.0
  %1129 = vmatpush1.msra.mxu0 0.0
  %1130 = vmatprep.subr.mxu0 0.0
  %1131 = vmatpush1.msra.mxu0 0.0
  %1132 = vmatprep.subr.mxu0 0.0
  %1133 = vmatpush1.msra.mxu0 0.0
  %1134 = vmatprep.subr.mxu0 0.0
  %1135 = vmatpush1.msra.mxu0 0.0
  %1136 = vmatprep.subr.mxu0 0.0
  %1137 = vmatpush1.msra.mxu0 0.0
  %1138 = vmatprep.subr.mxu0 0.0
  %1139 = vmatpush1.msra.mxu0 0.0
  %1140 = vmatprep.subr.mxu0 0.0
  %1141 = vmatpush1.msra.mxu0 0.0
  %1142 = vmatprep.subr.mxu0 0.0
  %1143 = vmatpush1.msra.mxu0 0.0
  %1144 = vmatprep.subr.mxu0 0.0
  %1145 = vmatpush1.msra.mxu0 0.0
  %1146 = vmatprep.subr.mxu0 0.0
  %1147 = vmatpush1.msra.mxu0 0.0
  %1148 = vmatprep.subr.mxu0 0.0
  %1149 = vmatpush1.msra.mxu0 0.0
  %1150 = vmatprep.subr.mxu0 0.0
  %1151 = vmatpush1.msra.mxu0 0.0
  %1152 = vmatprep.subr.mxu0 0.0
  %1153 = vmatpush1.msra.mxu0 0.0
  %1154 = vmatprep.mubr.f32.mxu0 0.0
  %1155 = vmatmul.mubr.f32.gmra.mrb[0].mxu0 %v1088
  %v1156 = vpop.f32.mrb[0].mxu0
  %v1157 = vadd.f32 0.0, %v1156
  %v1158 = vpop.f32.mrb[0].mxu0
  %1159 = vdwg.mxu0
  %v1160 = vadd.f32 %v1087, %v1157
  %s1161 = scalar_lea.vmem [#allocation3], 32
  %v1162 = vld [vmem:[%s1161] sm:$0xff]
  %v1163 = vsel %vm401, %v1082, 0
  %1165 = vmatprep.subr.mxu0 0.0
  %1166 = vmatpush1.msra.mxu0 %v389
  %1167 = vmatprep.subr.mxu0 0.0
  %1168 = vmatpush1.msra.mxu0 %v390
  %1169 = vmatprep.subr.mxu0 0.0
  %1170 = vmatpush1.msra.mxu0 %v391
  %1171 = vmatprep.subr.mxu0 0.0
  %1172 = vmatpush1.msra.mxu0 %v392
  %1173 = vmatprep.subr.mxu0 0.0
  %1174 = vmatpush1.msra.mxu0 0.0
  %1175 = vmatprep.subr.mxu0 0.0
  %1176 = vmatpush1.msra.mxu0 0.0
  %1177 = vmatprep.subr.mxu0 0.0
  %1178 = vmatpush1.msra.mxu0 0.0
  %1179 = vmatprep.subr.mxu0 0.0
  %1180 = vmatpush1.msra.mxu0 0.0
  %1181 = vmatprep.subr.mxu0 0.0
  %1182 = vmatpush1.msra.mxu0 0.0
  %1183 = vmatprep.subr.mxu0 0.0
  %1184 = vmatpush1.msra.mxu0 0.0
  %1185 = vmatprep.subr.mxu0 0.0
  %1186 = vmatpush1.msra.mxu0 0.0
  %1187 = vmatprep.subr.mxu0 0.0
  %1188 = vmatpush1.msra.mxu0 0.0
  %1189 = vmatprep.subr.mxu0 0.0
  %1190 = vmatpush1.msra.mxu0 0.0
  %1191 = vmatprep.subr.mxu0 0.0
  %1192 = vmatpush1.msra.mxu0 0.0
  %1193 = vmatprep.subr.mxu0 0.0
  %1194 = vmatpush1.msra.mxu0 0.0
  %1195 = vmatprep.subr.mxu0 0.0
  %1196 = vmatpush1.msra.mxu0 0.0
  %1197 = vmatprep.subr.mxu0 0.0
  %1198 = vmatpush1.msra.mxu0 0.0
  %1199 = vmatprep.subr.mxu0 0.0
  %1200 = vmatpush1.msra.mxu0 0.0
  %1201 = vmatprep.subr.mxu0 0.0
  %1202 = vmatpush1.msra.mxu0 0.0
  %1203 = vmatprep.subr.mxu0 0.0
  %1204 = vmatpush1.msra.mxu0 0.0
  %1205 = vmatprep.subr.mxu0 0.0
  %1206 = vmatpush1.msra.mxu0 0.0
  %1207 = vmatprep.subr.mxu0 0.0
  %1208 = vmatpush1.msra.mxu0 0.0
  %1209 = vmatprep.subr.mxu0 0.0
  %1210 = vmatpush1.msra.mxu0 0.0
  %1211 = vmatprep.subr.mxu0 0.0
  %1212 = vmatpush1.msra.mxu0 0.0
  %1213 = vmatprep.subr.mxu0 0.0
  %1214 = vmatpush1.msra.mxu0 0.0
  %1215 = vmatprep.subr.mxu0 0.0
  %1216 = vmatpush1.msra.mxu0 0.0
  %1217 = vmatprep.subr.mxu0 0.0
  %1218 = vmatpush1.msra.mxu0 0.0
  %1219 = vmatprep.subr.mxu0 0.0
  %1220 = vmatpush1.msra.mxu0 0.0
  %1221 = vmatprep.subr.mxu0 0.0
  %1222 = vmatpush1.msra.mxu0 0.0
  %1223 = vmatprep.subr.mxu0 0.0
  %1224 = vmatpush1.msra.mxu0 0.0
  %1225 = vmatprep.subr.mxu0 0.0
  %1226 = vmatpush1.msra.mxu0 0.0
  %1227 = vmatprep.subr.mxu0 0.0
  %1228 = vmatpush1.msra.mxu0 0.0
  %1229 = vmatprep.mubr.f32.mxu0 0.0
  %1230 = vmatmul.mubr.f32.gmra.mrb[0].mxu0 %v1163
  %v1231 = vpop.f32.mrb[0].mxu0
  %v1232 = vadd.f32 0.0, %v1231
  %v1233 = vpop.f32.mrb[0].mxu0
  %1234 = vdwg.mxu0
  %v1235 = vadd.f32 %v1162, %v1232
  %v1236 = vxor.u32 %v1160, 2147483648
  %v1237 = vmul.f32 %v1236, 1.442695
  %v1238 = vpow.pop %v1237
  %v1239 = vadd.f32 %v1238, 1.0
  %v1240 = vrcp.pop %v1239
  %v1241 = vmul.f32 1.0, %v1240
  %v1242 = vtanh.pop %v1160
  %v1243 = vmul.f32 %v1241, %v1068
  %1245 = vrot.lane.b32.xlu0 %v1242, 64
  %v1246 = vpop.permute.xlu0 %1245
  %v1248 = vmul.f32 %v1241, %v1246
  %1250 = vrot.lane.b32.xlu0 %v1248, 32
  %v1251 = vpop.permute.xlu0 %1250
  %v1253 = vadd.f32 %v1243, %v1251
  %v1254 = vtanh.pop %v1253
  %1256 = vrot.lane.b32.xlu0 %v1254, 64
  %v1257 = vpop.permute.xlu0 %1256
  %v1259 = vmul.f32 %v1241, %v1257
  %v1260 = vxor.u32 %v1235, 2147483648
  %v1261 = vmul.f32 %v1260, 1.442695
  %v1262 = vpow.pop %v1261
  %v1263 = vadd.f32 %v1262, 1.0
  %v1264 = vrcp.pop %v1263
  %v1265 = vmul.f32 1.0, %v1264
  %v1266 = vtanh.pop %v1235
  %v1267 = vmul.f32 %v1265, %v1073
  %1269 = vrot.lane.b32.xlu0 %v1266, 64
  %v1270 = vpop.permute.xlu0 %1269
  %v1272 = vmul.f32 %v1265, %v1270
  %1274 = vrot.lane.b32.xlu0 %v1272, 32
  %v1275 = vpop.permute.xlu0 %1274
  %v1277 = vadd.f32 %v1267, %v1275
  %v1278 = vtanh.pop %v1277
  %1280 = vrot.lane.b32.xlu0 %v1278, 64
  %v1281 = vpop.permute.xlu0 %1280
  %v1283 = vmul.f32 %v1265, %v1281
  %s1284 = sadd.s32 %s393, 3
  %p1285 = scmp.lt.s32.totalorder %s1284, 8
  %s1286 = sadd.s32 %s395, 4
  %p1287 = scmp.lt.s32.totalorder %s1286, 8
  %s1288 = scalar_select %p1285, 1, 0
  %v1289 = vstv %s1288
  %vm1290 = vcmp.eq.s32.totalorder %v1289, 1
  %v1291 = vsel %vm1290, %v1259, %v1067
  %v1292 = vsel %vm1290, %v1253, %v1068
  %s1293 = scalar_select %p1287, 1, 0
  %v1294 = vstv %s1293
  %vm1295 = vcmp.eq.s32.totalorder %v1294, 1
  %v1296 = vsel %vm1295, %v1283, %v1072
  %v1297 = vsel %vm1295, %v1277, %v1073
  %1299 = vrot.lane.b32.xlu0 %v1291, 32
  %v1300 = vpop.permute.xlu0 %1299
  %s1302 = scalar_lea.vmem %s8, 24
  %1303 = vst.msk [vmem:[%s1302] sm:$0xff] %vm401, %v1300
  %1305 = vrot.lane.b32.xlu0 %v1296, 32
  %v1306 = vpop.permute.xlu0 %1305
  %s1308 = scalar_lea.vmem %s64, 32
  %1309 = vst.msk [vmem:[%s1308] sm:$0xff] %vm401, %v1306
  %s1310 = scalar_lea.vmem [#allocation2], 32
  %v1311 = vld [vmem:[%s1310] sm:$0xff]
  %v1312 = vsel %vm401, %v1300, 0
  %1314 = vmatprep.subr.mxu0 0.0
  %1315 = vmatpush1.msra.mxu0 %v385
  %1316 = vmatprep.subr.mxu0 0.0
  %1317 = vmatpush1.msra.mxu0 %v386
  %1318 = vmatprep.subr.mxu0 0.0
  %1319 = vmatpush1.msra.mxu0 %v387
  %1320 = vmatprep.subr.mxu0 0.0
  %1321 = vmatpush1.msra.mxu0 %v388
  %1322 = vmatprep.subr.mxu0 0.0
  %1323 = vmatpush1.msra.mxu0 0.0
  %1324 = vmatprep.subr.mxu0 0.0
  %1325 = vmatpush1.msra.mxu0 0.0
  %1326 = vmatprep.subr.mxu0 0.0
  %1327 = vmatpush1.msra.mxu0 0.0
  %1328 = vmatprep.subr.mxu0 0.0
  %1329 = vmatpush1.msra.mxu0 0.0
  %1330 = vmatprep.subr.mxu0 0.0
  %1331 = vmatpush1.msra.mxu0 0.0
  %1332 = vmatprep.subr.mxu0 0.0
  %1333 = vmatpush1.msra.mxu0 0.0
  %1334 = vmatprep.subr.mxu0 0.0
  %1335 = vmatpush1.msra.mxu0 0.0
  %1336 = vmatprep.subr.mxu0 0.0
  %1337 = vmatpush1.msra.mxu0 0.0
  %1338 = vmatprep.subr.mxu0 0.0
  %1339 = vmatpush1.msra.mxu0 0.0
  %1340 = vmatprep.subr.mxu0 0.0
  %1341 = vmatpush1.msra.mxu0 0.0
  %1342 = vmatprep.subr.mxu0 0.0
  %1343 = vmatpush1.msra.mxu0 0.0
  %1344 = vmatprep.subr.mxu0 0.0
  %1345 = vmatpush1.msra.mxu0 0.0
  %1346 = vmatprep.subr.mxu0 0.0
  %1347 = vmatpush1.msra.mxu0 0.0
  %1348 = vmatprep.subr.mxu0 0.0
  %1349 = vmatpush1.msra.mxu0 0.0
  %1350 = vmatprep.subr.mxu0 0.0
  %1351 = vmatpush1.msra.mxu0 0.0
  %1352 = vmatprep.subr.mxu0 0.0
  %1353 = vmatpush1.msra.mxu0 0.0
  %1354 = vmatprep.subr.mxu0 0.0
  %1355 = vmatpush1.msra.mxu0 0.0
  %1356 = vmatprep.subr.mxu0 0.0
  %1357 = vmatpush1.msra.mxu0 0.0
  %1358 = vmatprep.subr.mxu0 0.0
  %1359 = vmatpush1.msra.mxu0 0.0
  %1360 = vmatprep.subr.mxu0 0.0
  %1361 = vmatpush1.msra.mxu0 0.0
  %1362 = vmatprep.subr.mxu0 0.0
  %1363 = vmatpush1.msra.mxu0 0.0
  %1364 = vmatprep.subr.mxu0 0.0
  %1365 = vmatpush1.msra.mxu0 0.0
  %1366 = vmatprep.subr.mxu0 0.0
  %1367 = vmatpush1.msra.mxu0 0.0
  %1368 = vmatprep.subr.mxu0 0.0
  %1369 = vmatpush1.msra.mxu0 0.0
  %1370 = vmatprep.subr.mxu0 0.0
  %1371 = vmatpush1.msra.mxu0 0.0
  %1372 = vmatprep.subr.mxu0 0.0
  %1373 = vmatpush1.msra.mxu0 0.0
  %1374 = vmatprep.subr.mxu0 0.0
  %1375 = vmatpush1.msra.mxu0 0.0
  %1376 = vmatprep.subr.mxu0 0.0
  %1377 = vmatpush1.msra.mxu0 0.0
  %1378 = vmatprep.mubr.f32.mxu0 0.0
  %1379 = vmatmul.mubr.f32.gmra.mrb[0].mxu0 %v1312
  %v1380 = vpop.f32.mrb[0].mxu0
  %v1381 = vadd.f32 0.0, %v1380
  %v1382 = vpop.f32.mrb[0].mxu0
  %1383 = vdwg.mxu0
  %v1384 = vadd.f32 %v1311, %v1381
  %s1385 = scalar_lea.vmem [#allocation3], 24
  %v1386 = vld [vmem:[%s1385] sm:$0xff]
  %v1387 = vsel %vm401, %v1306, 0
  %1389 = vmatprep.subr.mxu0 0.0
  %1390 = vmatpush1.msra.mxu0 %v389
  %1391 = vmatprep.subr.mxu0 0.0
  %1392 = vmatpush1.msra.mxu0 %v390
  %1393 = vmatprep.subr.mxu0 0.0
  %1394 = vmatpush1.msra.mxu0 %v391
  %1395 = vmatprep.subr.mxu0 0.0
  %1396 = vmatpush1.msra.mxu0 %v392
  %1397 = vmatprep.subr.mxu0 0.0
  %1398 = vmatpush1.msra.mxu0 0.0
  %1399 = vmatprep.subr.mxu0 0.0
  %1400 = vmatpush1.msra.mxu0 0.0
  %1401 = vmatprep.subr.mxu0 0.0
  %1402 = vmatpush1.msra.mxu0 0.0
  %1403 = vmatprep.subr.mxu0 0.0
  %1404 = vmatpush1.msra.mxu0 0.0
  %1405 = vmatprep.subr.mxu0 0.0
  %1406 = vmatpush1.msra.mxu0 0.0
  %1407 = vmatprep.subr.mxu0 0.0
  %1408 = vmatpush1.msra.mxu0 0.0
  %1409 = vmatprep.subr.mxu0 0.0
  %1410 = vmatpush1.msra.mxu0 0.0
  %1411 = vmatprep.subr.mxu0 0.0
  %1412 = vmatpush1.msra.mxu0 0.0
  %1413 = vmatprep.subr.mxu0 0.0
  %1414 = vmatpush1.msra.mxu0 0.0
  %1415 = vmatprep.subr.mxu0 0.0
  %1416 = vmatpush1.msra.mxu0 0.0
  %1417 = vmatprep.subr.mxu0 0.0
  %1418 = vmatpush1.msra.mxu0 0.0
  %1419 = vmatprep.subr.mxu0 0.0
  %1420 = vmatpush1.msra.mxu0 0.0
  %1421 = vmatprep.subr.mxu0 0.0
  %1422 = vmatpush1.msra.mxu0 0.0
  %1423 = vmatprep.subr.mxu0 0.0
  %1424 = vmatpush1.msra.mxu0 0.0
  %1425 = vmatprep.subr.mxu0 0.0
  %1426 = vmatpush1.msra.mxu0 0.0
  %1427 = vmatprep.subr.mxu0 0.0
  %1428 = vmatpush1.msra.mxu0 0.0
  %1429 = vmatprep.subr.mxu0 0.0
  %1430 = vmatpush1.msra.mxu0 0.0
  %1431 = vmatprep.subr.mxu0 0.0
  %1432 = vmatpush1.msra.mxu0 0.0
  %1433 = vmatprep.subr.mxu0 0.0
  %1434 = vmatpush1.msra.mxu0 0.0
  %1435 = vmatprep.subr.mxu0 0.0
  %1436 = vmatpush1.msra.mxu0 0.0
  %1437 = vmatprep.subr.mxu0 0.0
  %1438 = vmatpush1.msra.mxu0 0.0
  %1439 = vmatprep.subr.mxu0 0.0
  %1440 = vmatpush1.msra.mxu0 0.0
  %1441 = vmatprep.subr.mxu0 0.0
  %1442 = vmatpush1.msra.mxu0 0.0
  %1443 = vmatprep.subr.mxu0 0.0
  %1444 = vmatpush1.msra.mxu0 0.0
  %1445 = vmatprep.subr.mxu0 0.0
  %1446 = vmatpush1.msra.mxu0 0.0
  %1447 = vmatprep.subr.mxu0 0.0
  %1448 = vmatpush1.msra.mxu0 0.0
  %1449 = vmatprep.subr.mxu0 0.0
  %1450 = vmatpush1.msra.mxu0 0.0
  %1451 = vmatprep.subr.mxu0 0.0
  %1452 = vmatpush1.msra.mxu0 0.0
  %1453 = vmatprep.mubr.f32.mxu0 0.0
  %1454 = vmatmul.mubr.f32.gmra.mrb[0].mxu0 %v1387
  %v1455 = vpop.f32.mrb[0].mxu0
  %v1456 = vadd.f32 0.0, %v1455
  %v1457 = vpop.f32.mrb[0].mxu0
  %1458 = vdwg.mxu0
  %v1459 = vadd.f32 %v1386, %v1456
  %v1460 = vxor.u32 %v1384, 2147483648
  %v1461 = vmul.f32 %v1460, 1.442695
  %v1462 = vpow.pop %v1461
  %v1463 = vadd.f32 %v1462, 1.0
  %v1464 = vrcp.pop %v1463
  %v1465 = vmul.f32 1.0, %v1464
  %v1466 = vtanh.pop %v1384
  %v1467 = vmul.f32 %v1465, %v1292
  %1469 = vrot.lane.b32.xlu0 %v1466, 64
  %v1470 = vpop.permute.xlu0 %1469
  %v1472 = vmul.f32 %v1465, %v1470
  %1474 = vrot.lane.b32.xlu0 %v1472, 32
  %v1475 = vpop.permute.xlu0 %1474
  %v1477 = vadd.f32 %v1467, %v1475
  %v1478 = vtanh.pop %v1477
  %1480 = vrot.lane.b32.xlu0 %v1478, 64
  %v1481 = vpop.permute.xlu0 %1480
  %v1483 = vmul.f32 %v1465, %v1481
  %v1484 = vxor.u32 %v1459, 2147483648
  %v1485 = vmul.f32 %v1484, 1.442695
  %v1486 = vpow.pop %v1485
  %v1487 = vadd.f32 %v1486, 1.0
  %v1488 = vrcp.pop %v1487
  %v1489 = vmul.f32 1.0, %v1488
  %v1490 = vtanh.pop %v1459
  %v1491 = vmul.f32 %v1489, %v1297
  %1493 = vrot.lane.b32.xlu0 %v1490, 64
  %v1494 = vpop.permute.xlu0 %1493
  %v1496 = vmul.f32 %v1489, %v1494
  %1498 = vrot.lane.b32.xlu0 %v1496, 32
  %v1499 = vpop.permute.xlu0 %1498
  %v1501 = vadd.f32 %v1491, %v1499
  %v1502 = vtanh.pop %v1501
  %1504 = vrot.lane.b32.xlu0 %v1502, 64
  %v1505 = vpop.permute.xlu0 %1504
  %v1507 = vmul.f32 %v1489, %v1505
  %s1508 = sadd.s32 %s393, 4
  %p1509 = scmp.lt.s32.totalorder %s1508, 8
  %s1510 = sadd.s32 %s395, 3
  %p1511 = scmp.lt.s32.totalorder %s1510, 8
  %s1512 = scalar_select %p1509, 1, 0
  %v1513 = vstv %s1512
  %vm1514 = vcmp.eq.s32.totalorder %v1513, 1
  %v1515 = vsel %vm1514, %v1483, %v1291
  %v1516 = vsel %vm1514, %v1477, %v1292
  %s1517 = scalar_select %p1511, 1, 0
  %v1518 = vstv %s1517
  %vm1519 = vcmp.eq.s32.totalorder %v1518, 1
  %v1520 = vsel %vm1519, %v1507, %v1296
  %v1521 = vsel %vm1519, %v1501, %v1297
  %1523 = vrot.lane.b32.xlu0 %v1515, 32
  %v1524 = vpop.permute.xlu0 %1523
  %s1526 = scalar_lea.vmem %s8, 32
  %1527 = vst.msk [vmem:[%s1526] sm:$0xff] %vm401, %v1524
  %1529 = vrot.lane.b32.xlu0 %v1520, 32
  %v1530 = vpop.permute.xlu0 %1529
  %s1532 = scalar_lea.vmem %s64, 24
  %1533 = vst.msk [vmem:[%s1532] sm:$0xff] %vm401, %v1530
  %s1534 = scalar_lea.vmem [#allocation2], 40
  %v1535 = vld [vmem:[%s1534] sm:$0xff]
  %v1536 = vsel %vm401, %v1524, 0
  %1538 = vmatprep.subr.mxu0 0.0
  %1539 = vmatpush1.msra.mxu0 %v385
  %1540 = vmatprep.subr.mxu0 0.0
  %1541 = vmatpush1.msra.mxu0 %v386
  %1542 = vmatprep.subr.mxu0 0.0
  %1543 = vmatpush1.msra.mxu0 %v387
  %1544 = vmatprep.subr.mxu0 0.0
  %1545 = vmatpush1.msra.mxu0 %v388
  %1546 = vmatprep.subr.mxu0 0.0
  %1547 = vmatpush1.msra.mxu0 0.0
  %1548 = vmatprep.subr.mxu0 0.0
  %1549 = vmatpush1.msra.mxu0 0.0
  %1550 = vmatprep.subr.mxu0 0.0
  %1551 = vmatpush1.msra.mxu0 0.0
  %1552 = vmatprep.subr.mxu0 0.0
  %1553 = vmatpush1.msra.mxu0 0.0
  %1554 = vmatprep.subr.mxu0 0.0
  %1555 = vmatpush1.msra.mxu0 0.0
  %1556 = vmatprep.subr.mxu0 0.0
  %1557 = vmatpush1.msra.mxu0 0.0
  %1558 = vmatprep.subr.mxu0 0.0
  %1559 = vmatpush1.msra.mxu0 0.0
  %1560 = vmatprep.subr.mxu0 0.0
  %1561 = vmatpush1.msra.mxu0 0.0
  %1562 = vmatprep.subr.mxu0 0.0
  %1563 = vmatpush1.msra.mxu0 0.0
  %1564 = vmatprep.subr.mxu0 0.0
  %1565 = vmatpush1.msra.mxu0 0.0
  %1566 = vmatprep.subr.mxu0 0.0
  %1567 = vmatpush1.msra.mxu0 0.0
  %1568 = vmatprep.subr.mxu0 0.0
  %1569 = vmatpush1.msra.mxu0 0.0
  %1570 = vmatprep.subr.mxu0 0.0
  %1571 = vmatpush1.msra.mxu0 0.0
  %1572 = vmatprep.subr.mxu0 0.0
  %1573 = vmatpush1.msra.mxu0 0.0
  %1574 = vmatprep.subr.mxu0 0.0
  %1575 = vmatpush1.msra.mxu0 0.0
  %1576 = vmatprep.subr.mxu0 0.0
  %1577 = vmatpush1.msra.mxu0 0.0
  %1578 = vmatprep.subr.mxu0 0.0
  %1579 = vmatpush1.msra.mxu0 0.0
  %1580 = vmatprep.subr.mxu0 0.0
  %1581 = vmatpush1.msra.mxu0 0.0
  %1582 = vmatprep.subr.mxu0 0.0
  %1583 = vmatpush1.msra.mxu0 0.0
  %1584 = vmatprep.subr.mxu0 0.0
  %1585 = vmatpush1.msra.mxu0 0.0
  %1586 = vmatprep.subr.mxu0 0.0
  %1587 = vmatpush1.msra.mxu0 0.0
  %1588 = vmatprep.subr.mxu0 0.0
  %1589 = vmatpush1.msra.mxu0 0.0
  %1590 = vmatprep.subr.mxu0 0.0
  %1591 = vmatpush1.msra.mxu0 0.0
  %1592 = vmatprep.subr.mxu0 0.0
  %1593 = vmatpush1.msra.mxu0 0.0
  %1594 = vmatprep.subr.mxu0 0.0
  %1595 = vmatpush1.msra.mxu0 0.0
  %1596 = vmatprep.subr.mxu0 0.0
  %1597 = vmatpush1.msra.mxu0 0.0
  %1598 = vmatprep.subr.mxu0 0.0
  %1599 = vmatpush1.msra.mxu0 0.0
  %1600 = vmatprep.subr.mxu0 0.0
  %1601 = vmatpush1.msra.mxu0 0.0
  %1602 = vmatprep.mubr.f32.mxu0 0.0
  %1603 = vmatmul.mubr.f32.gmra.mrb[0].mxu0 %v1536
  %v1604 = vpop.f32.mrb[0].mxu0
  %v1605 = vadd.f32 0.0, %v1604
  %v1606 = vpop.f32.mrb[0].mxu0
  %1607 = vdwg.mxu0
  %v1608 = vadd.f32 %v1535, %v1605
  %s1609 = scalar_lea.vmem [#allocation3], 16
  %v1610 = vld [vmem:[%s1609] sm:$0xff]
  %v1611 = vsel %vm401, %v1530, 0
  %1613 = vmatprep.subr.mxu0 0.0
  %1614 = vmatpush1.msra.mxu0 %v389
  %1615 = vmatprep.subr.mxu0 0.0
  %1616 = vmatpush1.msra.mxu0 %v390
  %1617 = vmatprep.subr.mxu0 0.0
  %1618 = vmatpush1.msra.mxu0 %v391
  %1619 = vmatprep.subr.mxu0 0.0
  %1620 = vmatpush1.msra.mxu0 %v392
  %1621 = vmatprep.subr.mxu0 0.0
  %1622 = vmatpush1.msra.mxu0 0.0
  %1623 = vmatprep.subr.mxu0 0.0
  %1624 = vmatpush1.msra.mxu0 0.0
  %1625 = vmatprep.subr.mxu0 0.0
  %1626 = vmatpush1.msra.mxu0 0.0
  %1627 = vmatprep.subr.mxu0 0.0
  %1628 = vmatpush1.msra.mxu0 0.0
  %1629 = vmatprep.subr.mxu0 0.0
  %1630 = vmatpush1.msra.mxu0 0.0
  %1631 = vmatprep.subr.mxu0 0.0
  %1632 = vmatpush1.msra.mxu0 0.0
  %1633 = vmatprep.subr.mxu0 0.0
  %1634 = vmatpush1.msra.mxu0 0.0
  %1635 = vmatprep.subr.mxu0 0.0
  %1636 = vmatpush1.msra.mxu0 0.0
  %1637 = vmatprep.subr.mxu0 0.0
  %1638 = vmatpush1.msra.mxu0 0.0
  %1639 = vmatprep.subr.mxu0 0.0
  %1640 = vmatpush1.msra.mxu0 0.0
  %1641 = vmatprep.subr.mxu0 0.0
  %1642 = vmatpush1.msra.mxu0 0.0
  %1643 = vmatprep.subr.mxu0 0.0
  %1644 = vmatpush1.msra.mxu0 0.0
  %1645 = vmatprep.subr.mxu0 0.0
  %1646 = vmatpush1.msra.mxu0 0.0
  %1647 = vmatprep.subr.mxu0 0.0
  %1648 = vmatpush1.msra.mxu0 0.0
  %1649 = vmatprep.subr.mxu0 0.0
  %1650 = vmatpush1.msra.mxu0 0.0
  %1651 = vmatprep.subr.mxu0 0.0
  %1652 = vmatpush1.msra.mxu0 0.0
  %1653 = vmatprep.subr.mxu0 0.0
  %1654 = vmatpush1.msra.mxu0 0.0
  %1655 = vmatprep.subr.mxu0 0.0
  %1656 = vmatpush1.msra.mxu0 0.0
  %1657 = vmatprep.subr.mxu0 0.0
  %1658 = vmatpush1.msra.mxu0 0.0
  %1659 = vmatprep.subr.mxu0 0.0
  %1660 = vmatpush1.msra.mxu0 0.0
  %1661 = vmatprep.subr.mxu0 0.0
  %1662 = vmatpush1.msra.mxu0 0.0
  %1663 = vmatprep.subr.mxu0 0.0
  %1664 = vmatpush1.msra.mxu0 0.0
  %1665 = vmatprep.subr.mxu0 0.0
  %1666 = vmatpush1.msra.mxu0 0.0
  %1667 = vmatprep.subr.mxu0 0.0
  %1668 = vmatpush1.msra.mxu0 0.0
  %1669 = vmatprep.subr.mxu0 0.0
  %1670 = vmatpush1.msra.mxu0 0.0
  %1671 = vmatprep.subr.mxu0 0.0
  %1672 = vmatpush1.msra.mxu0 0.0
  %1673 = vmatprep.subr.mxu0 0.0
  %1674 = vmatpush1.msra.mxu0 0.0
  %1675 = vmatprep.subr.mxu0 0.0
  %1676 = vmatpush1.msra.mxu0 0.0
  %1677 = vmatprep.mubr.f32.mxu0 0.0
  %1678 = vmatmul.mubr.f32.gmra.mrb[0].mxu0 %v1611
  %v1679 = vpop.f32.mrb[0].mxu0
  %v1680 = vadd.f32 0.0, %v1679
  %v1681 = vpop.f32.mrb[0].mxu0
  %1682 = vdwg.mxu0
  %v1683 = vadd.f32 %v1610, %v1680
  %v1684 = vxor.u32 %v1608, 2147483648
  %v1685 = vmul.f32 %v1684, 1.442695
  %v1686 = vpow.pop %v1685
  %v1687 = vadd.f32 %v1686, 1.0
  %v1688 = vrcp.pop %v1687
  %v1689 = vmul.f32 1.0, %v1688
  %v1690 = vtanh.pop %v1608
  %v1691 = vmul.f32 %v1689, %v1516
  %1693 = vrot.lane.b32.xlu0 %v1690, 64
  %v1694 = vpop.permute.xlu0 %1693
  %v1696 = vmul.f32 %v1689, %v1694
  %1698 = vrot.lane.b32.xlu0 %v1696, 32
  %v1699 = vpop.permute.xlu0 %1698
  %v1701 = vadd.f32 %v1691, %v1699
  %v1702 = vtanh.pop %v1701
  %1704 = vrot.lane.b32.xlu0 %v1702, 64
  %v1705 = vpop.permute.xlu0 %1704
  %v1707 = vmul.f32 %v1689, %v1705
  %v1708 = vxor.u32 %v1683, 2147483648
  %v1709 = vmul.f32 %v1708, 1.442695
  %v1710 = vpow.pop %v1709
  %v1711 = vadd.f32 %v1710, 1.0
  %v1712 = vrcp.pop %v1711
  %v1713 = vmul.f32 1.0, %v1712
  %v1714 = vtanh.pop %v1683
  %v1715 = vmul.f32 %v1713, %v1521
  %1717 = vrot.lane.b32.xlu0 %v1714, 64
  %v1718 = vpop.permute.xlu0 %1717
  %v1720 = vmul.f32 %v1713, %v1718
  %1722 = vrot.lane.b32.xlu0 %v1720, 32
  %v1723 = vpop.permute.xlu0 %1722
  %v1725 = vadd.f32 %v1715, %v1723
  %v1726 = vtanh.pop %v1725
  %1728 = vrot.lane.b32.xlu0 %v1726, 64
  %v1729 = vpop.permute.xlu0 %1728
  %v1731 = vmul.f32 %v1713, %v1729
  %s1732 = sadd.s32 %s393, 5
  %p1733 = scmp.lt.s32.totalorder %s1732, 8
  %s1734 = sadd.s32 %s395, 2
  %p1735 = scmp.lt.s32.totalorder %s1734, 8
  %s1736 = scalar_select %p1733, 1, 0
  %v1737 = vstv %s1736
  %vm1738 = vcmp.eq.s32.totalorder %v1737, 1
  %v1739 = vsel %vm1738, %v1707, %v1515
  %v1740 = vsel %vm1738, %v1701, %v1516
  %s1741 = scalar_select %p1735, 1, 0
  %v1742 = vstv %s1741
  %vm1743 = vcmp.eq.s32.totalorder %v1742, 1
  %v1744 = vsel %vm1743, %v1731, %v1520
  %v1745 = vsel %vm1743, %v1725, %v1521
  %1747 = vrot.lane.b32.xlu0 %v1739, 32
  %v1748 = vpop.permute.xlu0 %1747
  %s1750 = scalar_lea.vmem %s8, 40
  %1751 = vst.msk [vmem:[%s1750] sm:$0xff] %vm401, %v1748
  %1753 = vrot.lane.b32.xlu0 %v1744, 32
  %v1754 = vpop.permute.xlu0 %1753
  %s1756 = scalar_lea.vmem %s64, 16
  %1757 = vst.msk [vmem:[%s1756] sm:$0xff] %vm401, %v1754
  %s1758 = scalar_lea.vmem [#allocation2], 48
  %v1759 = vld [vmem:[%s1758] sm:$0xff]
  %v1760 = vsel %vm401, %v1748, 0
  %1762 = vmatprep.subr.mxu0 0.0
  %1763 = vmatpush1.msra.mxu0 %v385
  %1764 = vmatprep.subr.mxu0 0.0
  %1765 = vmatpush1.msra.mxu0 %v386
  %1766 = vmatprep.subr.mxu0 0.0
  %1767 = vmatpush1.msra.mxu0 %v387
  %1768 = vmatprep.subr.mxu0 0.0
  %1769 = vmatpush1.msra.mxu0 %v388
  %1770 = vmatprep.subr.mxu0 0.0
  %1771 = vmatpush1.msra.mxu0 0.0
  %1772 = vmatprep.subr.mxu0 0.0
  %1773 = vmatpush1.msra.mxu0 0.0
  %1774 = vmatprep.subr.mxu0 0.0
  %1775 = vmatpush1.msra.mxu0 0.0
  %1776 = vmatprep.subr.mxu0 0.0
  %1777 = vmatpush1.msra.mxu0 0.0
  %1778 = vmatprep.subr.mxu0 0.0
  %1779 = vmatpush1.msra.mxu0 0.0
  %1780 = vmatprep.subr.mxu0 0.0
  %1781 = vmatpush1.msra.mxu0 0.0
  %1782 = vmatprep.subr.mxu0 0.0
  %1783 = vmatpush1.msra.mxu0 0.0
  %1784 = vmatprep.subr.mxu0 0.0
  %1785 = vmatpush1.msra.mxu0 0.0
  %1786 = vmatprep.subr.mxu0 0.0
  %1787 = vmatpush1.msra.mxu0 0.0
  %1788 = vmatprep.subr.mxu0 0.0
  %1789 = vmatpush1.msra.mxu0 0.0
  %1790 = vmatprep.subr.mxu0 0.0
  %1791 = vmatpush1.msra.mxu0 0.0
  %1792 = vmatprep.subr.mxu0 0.0
  %1793 = vmatpush1.msra.mxu0 0.0
  %1794 = vmatprep.subr.mxu0 0.0
  %1795 = vmatpush1.msra.mxu0 0.0
  %1796 = vmatprep.subr.mxu0 0.0
  %1797 = vmatpush1.msra.mxu0 0.0
  %1798 = vmatprep.subr.mxu0 0.0
  %1799 = vmatpush1.msra.mxu0 0.0
  %1800 = vmatprep.subr.mxu0 0.0
  %1801 = vmatpush1.msra.mxu0 0.0
  %1802 = vmatprep.subr.mxu0 0.0
  %1803 = vmatpush1.msra.mxu0 0.0
  %1804 = vmatprep.subr.mxu0 0.0
  %1805 = vmatpush1.msra.mxu0 0.0
  %1806 = vmatprep.subr.mxu0 0.0
  %1807 = vmatpush1.msra.mxu0 0.0
  %1808 = vmatprep.subr.mxu0 0.0
  %1809 = vmatpush1.msra.mxu0 0.0
  %1810 = vmatprep.subr.mxu0 0.0
  %1811 = vmatpush1.msra.mxu0 0.0
  %1812 = vmatprep.subr.mxu0 0.0
  %1813 = vmatpush1.msra.mxu0 0.0
  %1814 = vmatprep.subr.mxu0 0.0
  %1815 = vmatpush1.msra.mxu0 0.0
  %1816 = vmatprep.subr.mxu0 0.0
  %1817 = vmatpush1.msra.mxu0 0.0
  %1818 = vmatprep.subr.mxu0 0.0
  %1819 = vmatpush1.msra.mxu0 0.0
  %1820 = vmatprep.subr.mxu0 0.0
  %1821 = vmatpush1.msra.mxu0 0.0
  %1822 = vmatprep.subr.mxu0 0.0
  %1823 = vmatpush1.msra.mxu0 0.0
  %1824 = vmatprep.subr.mxu0 0.0
  %1825 = vmatpush1.msra.mxu0 0.0
  %1826 = vmatprep.mubr.f32.mxu0 0.0
  %1827 = vmatmul.mubr.f32.gmra.mrb[0].mxu0 %v1760
  %v1828 = vpop.f32.mrb[0].mxu0
  %v1829 = vadd.f32 0.0, %v1828
  %v1830 = vpop.f32.mrb[0].mxu0
  %1831 = vdwg.mxu0
  %v1832 = vadd.f32 %v1759, %v1829
  %s1833 = scalar_lea.vmem [#allocation3], 8
  %v1834 = vld [vmem:[%s1833] sm:$0xff]
  %v1835 = vsel %vm401, %v1754, 0
  %1837 = vmatprep.subr.mxu0 0.0
  %1838 = vmatpush1.msra.mxu0 %v389
  %1839 = vmatprep.subr.mxu0 0.0
  %1840 = vmatpush1.msra.mxu0 %v390
  %1841 = vmatprep.subr.mxu0 0.0
  %1842 = vmatpush1.msra.mxu0 %v391
  %1843 = vmatprep.subr.mxu0 0.0
  %1844 = vmatpush1.msra.mxu0 %v392
  %1845 = vmatprep.subr.mxu0 0.0
  %1846 = vmatpush1.msra.mxu0 0.0
  %1847 = vmatprep.subr.mxu0 0.0
  %1848 = vmatpush1.msra.mxu0 0.0
  %1849 = vmatprep.subr.mxu0 0.0
  %1850 = vmatpush1.msra.mxu0 0.0
  %1851 = vmatprep.subr.mxu0 0.0
  %1852 = vmatpush1.msra.mxu0 0.0
  %1853 = vmatprep.subr.mxu0 0.0
  %1854 = vmatpush1.msra.mxu0 0.0
  %1855 = vmatprep.subr.mxu0 0.0
  %1856 = vmatpush1.msra.mxu0 0.0
  %1857 = vmatprep.subr.mxu0 0.0
  %1858 = vmatpush1.msra.mxu0 0.0
  %1859 = vmatprep.subr.mxu0 0.0
  %1860 = vmatpush1.msra.mxu0 0.0
  %1861 = vmatprep.subr.mxu0 0.0
  %1862 = vmatpush1.msra.mxu0 0.0
  %1863 = vmatprep.subr.mxu0 0.0
  %1864 = vmatpush1.msra.mxu0 0.0
  %1865 = vmatprep.subr.mxu0 0.0
  %1866 = vmatpush1.msra.mxu0 0.0
  %1867 = vmatprep.subr.mxu0 0.0
  %1868 = vmatpush1.msra.mxu0 0.0
  %1869 = vmatprep.subr.mxu0 0.0
  %1870 = vmatpush1.msra.mxu0 0.0
  %1871 = vmatprep.subr.mxu0 0.0
  %1872 = vmatpush1.msra.mxu0 0.0
  %1873 = vmatprep.subr.mxu0 0.0
  %1874 = vmatpush1.msra.mxu0 0.0
  %1875 = vmatprep.subr.mxu0 0.0
  %1876 = vmatpush1.msra.mxu0 0.0
  %1877 = vmatprep.subr.mxu0 0.0
  %1878 = vmatpush1.msra.mxu0 0.0
  %1879 = vmatprep.subr.mxu0 0.0
  %1880 = vmatpush1.msra.mxu0 0.0
  %1881 = vmatprep.subr.mxu0 0.0
  %1882 = vmatpush1.msra.mxu0 0.0
  %1883 = vmatprep.subr.mxu0 0.0
  %1884 = vmatpush1.msra.mxu0 0.0
  %1885 = vmatprep.subr.mxu0 0.0
  %1886 = vmatpush1.msra.mxu0 0.0
  %1887 = vmatprep.subr.mxu0 0.0
  %1888 = vmatpush1.msra.mxu0 0.0
  %1889 = vmatprep.subr.mxu0 0.0
  %1890 = vmatpush1.msra.mxu0 0.0
  %1891 = vmatprep.subr.mxu0 0.0
  %1892 = vmatpush1.msra.mxu0 0.0
  %1893 = vmatprep.subr.mxu0 0.0
  %1894 = vmatpush1.msra.mxu0 0.0
  %1895 = vmatprep.subr.mxu0 0.0
  %1896 = vmatpush1.msra.mxu0 0.0
  %1897 = vmatprep.subr.mxu0 0.0
  %1898 = vmatpush1.msra.mxu0 0.0
  %1899 = vmatprep.subr.mxu0 0.0
  %1900 = vmatpush1.msra.mxu0 0.0
  %1901 = vmatprep.mubr.f32.mxu0 0.0
  %1902 = vmatmul.mubr.f32.gmra.mrb[0].mxu0 %v1835
  %v1903 = vpop.f32.mrb[0].mxu0
  %v1904 = vadd.f32 0.0, %v1903
  %v1905 = vpop.f32.mrb[0].mxu0
  %1906 = vdwg.mxu0
  %v1907 = vadd.f32 %v1834, %v1904
  %v1908 = vxor.u32 %v1832, 2147483648
  %v1909 = vmul.f32 %v1908, 1.442695
  %v1910 = vpow.pop %v1909
  %v1911 = vadd.f32 %v1910, 1.0
  %v1912 = vrcp.pop %v1911
  %v1913 = vmul.f32 1.0, %v1912
  %v1914 = vtanh.pop %v1832
  %v1915 = vmul.f32 %v1913, %v1740
  %1917 = vrot.lane.b32.xlu0 %v1914, 64
  %v1918 = vpop.permute.xlu0 %1917
  %v1920 = vmul.f32 %v1913, %v1918
  %1922 = vrot.lane.b32.xlu0 %v1920, 32
  %v1923 = vpop.permute.xlu0 %1922
  %v1925 = vadd.f32 %v1915, %v1923
  %v1926 = vtanh.pop %v1925
  %1928 = vrot.lane.b32.xlu0 %v1926, 64
  %v1929 = vpop.permute.xlu0 %1928
  %v1931 = vmul.f32 %v1913, %v1929
  %v1932 = vxor.u32 %v1907, 2147483648
  %v1933 = vmul.f32 %v1932, 1.442695
  %v1934 = vpow.pop %v1933
  %v1935 = vadd.f32 %v1934, 1.0
  %v1936 = vrcp.pop %v1935
  %v1937 = vmul.f32 1.0, %v1936
  %v1938 = vtanh.pop %v1907
  %v1939 = vmul.f32 %v1937, %v1745
  %1941 = vrot.lane.b32.xlu0 %v1938, 64
  %v1942 = vpop.permute.xlu0 %1941
  %v1944 = vmul.f32 %v1937, %v1942
  %1946 = vrot.lane.b32.xlu0 %v1944, 32
  %v1947 = vpop.permute.xlu0 %1946
  %v1949 = vadd.f32 %v1939, %v1947
  %v1950 = vtanh.pop %v1949
  %1952 = vrot.lane.b32.xlu0 %v1950, 64
  %v1953 = vpop.permute.xlu0 %1952
  %v1955 = vmul.f32 %v1937, %v1953
  %s1956 = sadd.s32 %s393, 6
  %p1957 = scmp.lt.s32.totalorder %s1956, 8
  %s1958 = sadd.s32 %s395, 1
  %p1959 = scmp.lt.s32.totalorder %s1958, 8
  %s1960 = scalar_select %p1957, 1, 0
  %v1961 = vstv %s1960
  %vm1962 = vcmp.eq.s32.totalorder %v1961, 1
  %v1963 = vsel %vm1962, %v1931, %v1739
  %v1964 = vsel %vm1962, %v1925, %v1740
  %s1965 = scalar_select %p1959, 1, 0
  %v1966 = vstv %s1965
  %vm1967 = vcmp.eq.s32.totalorder %v1966, 1
  %v1968 = vsel %vm1967, %v1955, %v1744
  %v1969 = vsel %vm1967, %v1949, %v1745
  %1971 = vrot.lane.b32.xlu0 %v1963, 32
  %v1972 = vpop.permute.xlu0 %1971
  %s1974 = scalar_lea.vmem %s8, 48
  %1975 = vst.msk [vmem:[%s1974] sm:$0xff] %vm401, %v1972
  %1977 = vrot.lane.b32.xlu0 %v1968, 32
  %v1978 = vpop.permute.xlu0 %1977
  %s1980 = scalar_lea.vmem %s64, 8
  %1981 = vst.msk [vmem:[%s1980] sm:$0xff] %vm401, %v1978
  %s1982 = scalar_lea.vmem [#allocation2], 56
  %v1983 = vld [vmem:[%s1982] sm:$0xff]
  %v1984 = vsel %vm401, %v1972, 0
  %1986 = vmatprep.subr.mxu0 0.0
  %1987 = vmatpush1.msra.mxu0 %v385
  %1988 = vmatprep.subr.mxu0 0.0
  %1989 = vmatpush1.msra.mxu0 %v386
  %1990 = vmatprep.subr.mxu0 0.0
  %1991 = vmatpush1.msra.mxu0 %v387
  %1992 = vmatprep.subr.mxu0 0.0
  %1993 = vmatpush1.msra.mxu0 %v388
  %1994 = vmatprep.subr.mxu0 0.0
  %1995 = vmatpush1.msra.mxu0 0.0
  %1996 = vmatprep.subr.mxu0 0.0
  %1997 = vmatpush1.msra.mxu0 0.0
  %1998 = vmatprep.subr.mxu0 0.0
  %1999 = vmatpush1.msra.mxu0 0.0
  %2000 = vmatprep.subr.mxu0 0.0
  %2001 = vmatpush1.msra.mxu0 0.0
  %2002 = vmatprep.subr.mxu0 0.0
  %2003 = vmatpush1.msra.mxu0 0.0
  %2004 = vmatprep.subr.mxu0 0.0
  %2005 = vmatpush1.msra.mxu0 0.0
  %2006 = vmatprep.subr.mxu0 0.0
  %2007 = vmatpush1.msra.mxu0 0.0
  %2008 = vmatprep.subr.mxu0 0.0
  %2009 = vmatpush1.msra.mxu0 0.0
  %2010 = vmatprep.subr.mxu0 0.0
  %2011 = vmatpush1.msra.mxu0 0.0
  %2012 = vmatprep.subr.mxu0 0.0
  %2013 = vmatpush1.msra.mxu0 0.0
  %2014 = vmatprep.subr.mxu0 0.0
  %2015 = vmatpush1.msra.mxu0 0.0
  %2016 = vmatprep.subr.mxu0 0.0
  %2017 = vmatpush1.msra.mxu0 0.0
  %2018 = vmatprep.subr.mxu0 0.0
  %2019 = vmatpush1.msra.mxu0 0.0
  %2020 = vmatprep.subr.mxu0 0.0
  %2021 = vmatpush1.msra.mxu0 0.0
  %2022 = vmatprep.subr.mxu0 0.0
  %2023 = vmatpush1.msra.mxu0 0.0
  %2024 = vmatprep.subr.mxu0 0.0
  %2025 = vmatpush1.msra.mxu0 0.0
  %2026 = vmatprep.subr.mxu0 0.0
  %2027 = vmatpush1.msra.mxu0 0.0
  %2028 = vmatprep.subr.mxu0 0.0
  %2029 = vmatpush1.msra.mxu0 0.0
  %2030 = vmatprep.subr.mxu0 0.0
  %2031 = vmatpush1.msra.mxu0 0.0
  %2032 = vmatprep.subr.mxu0 0.0
  %2033 = vmatpush1.msra.mxu0 0.0
  %2034 = vmatprep.subr.mxu0 0.0
  %2035 = vmatpush1.msra.mxu0 0.0
  %2036 = vmatprep.subr.mxu0 0.0
  %2037 = vmatpush1.msra.mxu0 0.0
  %2038 = vmatprep.subr.mxu0 0.0
  %2039 = vmatpush1.msra.mxu0 0.0
  %2040 = vmatprep.subr.mxu0 0.0
  %2041 = vmatpush1.msra.mxu0 0.0
  %2042 = vmatprep.subr.mxu0 0.0
  %2043 = vmatpush1.msra.mxu0 0.0
  %2044 = vmatprep.subr.mxu0 0.0
  %2045 = vmatpush1.msra.mxu0 0.0
  %2046 = vmatprep.subr.mxu0 0.0
  %2047 = vmatpush1.msra.mxu0 0.0
  %2048 = vmatprep.subr.mxu0 0.0
  %2049 = vmatpush1.msra.mxu0 0.0
  %2050 = vmatprep.mubr.f32.mxu0 0.0
  %2051 = vmatmul.mubr.f32.gmra.mrb[0].mxu0 %v1984
  %v2052 = vpop.f32.mrb[0].mxu0
  %v2053 = vadd.f32 0.0, %v2052
  %v2054 = vpop.f32.mrb[0].mxu0
  %2055 = vdwg.mxu0
  %v2056 = vadd.f32 %v1983, %v2053
  %v2057 = vld [vmem:[#allocation3] sm:$0xff]
  %v2058 = vsel %vm401, %v1978, 0
  %2060 = vmatprep.subr.mxu0 0.0
  %2061 = vmatpush1.msra.mxu0 %v389
  %2062 = vmatprep.subr.mxu0 0.0
  %2063 = vmatpush1.msra.mxu0 %v390
  %2064 = vmatprep.subr.mxu0 0.0
  %2065 = vmatpush1.msra.mxu0 %v391
  %2066 = vmatprep.subr.mxu0 0.0
  %2067 = vmatpush1.msra.mxu0 %v392
  %2068 = vmatprep.subr.mxu0 0.0
  %2069 = vmatpush1.msra.mxu0 0.0
  %2070 = vmatprep.subr.mxu0 0.0
  %2071 = vmatpush1.msra.mxu0 0.0
  %2072 = vmatprep.subr.mxu0 0.0
  %2073 = vmatpush1.msra.mxu0 0.0
  %2074 = vmatprep.subr.mxu0 0.0
  %2075 = vmatpush1.msra.mxu0 0.0
  %2076 = vmatprep.subr.mxu0 0.0
  %2077 = vmatpush1.msra.mxu0 0.0
  %2078 = vmatprep.subr.mxu0 0.0
  %2079 = vmatpush1.msra.mxu0 0.0
  %2080 = vmatprep.subr.mxu0 0.0
  %2081 = vmatpush1.msra.mxu0 0.0
  %2082 = vmatprep.subr.mxu0 0.0
  %2083 = vmatpush1.msra.mxu0 0.0
  %2084 = vmatprep.subr.mxu0 0.0
  %2085 = vmatpush1.msra.mxu0 0.0
  %2086 = vmatprep.subr.mxu0 0.0
  %2087 = vmatpush1.msra.mxu0 0.0
  %2088 = vmatprep.subr.mxu0 0.0
  %2089 = vmatpush1.msra.mxu0 0.0
  %2090 = vmatprep.subr.mxu0 0.0
  %2091 = vmatpush1.msra.mxu0 0.0
  %2092 = vmatprep.subr.mxu0 0.0
  %2093 = vmatpush1.msra.mxu0 0.0
  %2094 = vmatprep.subr.mxu0 0.0
  %2095 = vmatpush1.msra.mxu0 0.0
  %2096 = vmatprep.subr.mxu0 0.0
  %2097 = vmatpush1.msra.mxu0 0.0
  %2098 = vmatprep.subr.mxu0 0.0
  %2099 = vmatpush1.msra.mxu0 0.0
  %2100 = vmatprep.subr.mxu0 0.0
  %2101 = vmatpush1.msra.mxu0 0.0
  %2102 = vmatprep.subr.mxu0 0.0
  %2103 = vmatpush1.msra.mxu0 0.0
  %2104 = vmatprep.subr.mxu0 0.0
  %2105 = vmatpush1.msra.mxu0 0.0
  %2106 = vmatprep.subr.mxu0 0.0
  %2107 = vmatpush1.msra.mxu0 0.0
  %2108 = vmatprep.subr.mxu0 0.0
  %2109 = vmatpush1.msra.mxu0 0.0
  %2110 = vmatprep.subr.mxu0 0.0
  %2111 = vmatpush1.msra.mxu0 0.0
  %2112 = vmatprep.subr.mxu0 0.0
  %2113 = vmatpush1.msra.mxu0 0.0
  %2114 = vmatprep.subr.mxu0 0.0
  %2115 = vmatpush1.msra.mxu0 0.0
  %2116 = vmatprep.subr.mxu0 0.0
  %2117 = vmatpush1.msra.mxu0 0.0
  %2118 = vmatprep.subr.mxu0 0.0
  %2119 = vmatpush1.msra.mxu0 0.0
  %2120 = vmatprep.subr.mxu0 0.0
  %2121 = vmatpush1.msra.mxu0 0.0
  %2122 = vmatprep.subr.mxu0 0.0
  %2123 = vmatpush1.msra.mxu0 0.0
  %2124 = vmatprep.mubr.f32.mxu0 0.0
  %2125 = vmatmul.mubr.f32.gmra.mrb[0].mxu0 %v2058
  %v2126 = vpop.f32.mrb[0].mxu0
  %v2127 = vadd.f32 0.0, %v2126
  %v2128 = vpop.f32.mrb[0].mxu0
  %2129 = vdwg.mxu0
  %v2130 = vadd.f32 %v2057, %v2127
  %v2131 = vxor.u32 %v2056, 2147483648
  %v2132 = vmul.f32 %v2131, 1.442695
  %v2133 = vpow.pop %v2132
  %v2134 = vadd.f32 %v2133, 1.0
  %v2135 = vrcp.pop %v2134
  %v2136 = vmul.f32 1.0, %v2135
  %v2137 = vtanh.pop %v2056
  %v2138 = vmul.f32 %v2136, %v1964
  %2140 = vrot.lane.b32.xlu0 %v2137, 64
  %v2141 = vpop.permute.xlu0 %2140
  %v2143 = vmul.f32 %v2136, %v2141
  %2145 = vrot.lane.b32.xlu0 %v2143, 32
  %v2146 = vpop.permute.xlu0 %2145
  %v2148 = vadd.f32 %v2138, %v2146
  %v2149 = vtanh.pop %v2148
  %2151 = vrot.lane.b32.xlu0 %v2149, 64
  %v2152 = vpop.permute.xlu0 %2151
  %v2154 = vmul.f32 %v2136, %v2152
  %v2155 = vxor.u32 %v2130, 2147483648
  %v2156 = vmul.f32 %v2155, 1.442695
  %v2157 = vpow.pop %v2156
  %v2158 = vadd.f32 %v2157, 1.0
  %v2159 = vrcp.pop %v2158
  %v2160 = vmul.f32 1.0, %v2159
  %v2161 = vtanh.pop %v2130
  %v2162 = vmul.f32 %v2160, %v1969
  %2164 = vrot.lane.b32.xlu0 %v2161, 64
  %v2165 = vpop.permute.xlu0 %2164
  %v2167 = vmul.f32 %v2160, %v2165
  %2169 = vrot.lane.b32.xlu0 %v2167, 32
  %v2170 = vpop.permute.xlu0 %2169
  %v2172 = vadd.f32 %v2162, %v2170
  %v2173 = vtanh.pop %v2172
  %2175 = vrot.lane.b32.xlu0 %v2173, 64
  %v2176 = vpop.permute.xlu0 %2175
  %v2178 = vmul.f32 %v2160, %v2176
  %s2179 = sadd.s32 %s393, 7
  %p2180 = scmp.lt.s32.totalorder %s2179, 8
  %p2181 = scmp.lt.s32.totalorder %s395, 8
  %s2182 = scalar_select %p2180, 1, 0
  %v2183 = vstv %s2182
  %vm2184 = vcmp.eq.s32.totalorder %v2183, 1
  %v2185 = vsel %vm2184, %v2154, %v1963
  %v2186 = vsel %vm2184, %v2148, %v1964
  %s2187 = scalar_select %p2181, 1, 0
  %v2188 = vstv %s2187
  %vm2189 = vcmp.eq.s32.totalorder %v2188, 1
  %v2190 = vsel %vm2189, %v2178, %v1968
  %v2191 = vsel %vm2189, %v2172, %v1969
  %2193 = vrot.lane.b32.xlu0 %v2185, 32
  %v2194 = vpop.permute.xlu0 %2193
  %s2196 = scalar_lea.vmem %s8, 56
  %2197 = vst.msk [vmem:[%s2196] sm:$0xff] %vm401, %v2194
  %2199 = vrot.lane.b32.xlu0 %v2190, 32
  %v2200 = vpop.permute.xlu0 %2199
  %2202 = vst.msk [vmem:[%s64] sm:$0xff] %vm401, %v2200
  %2203 = vst.msk [vmem:[#allocation4] sm:$0xff] %vm401, %v2194
  %2205 = vrot.lane.b32.xlu0 %v2186, 96
  %v2206 = vpop.permute.xlu0 %2205
  %2208 = vst.msk [vmem:[#allocation5] sm:$0xff] %vm401, %v2206
  %2209 = vst.msk [vmem:[#allocation6] sm:$0xff] %vm401, %v2200
  %2211 = vrot.lane.b32.xlu0 %v2191, 96
  %v2212 = vpop.permute.xlu0 %2211
  %2214 = vst.msk [vmem:[#allocation7] sm:$0xff] %vm401, %v2212
  %s2215 = ssub.s32 0, 0
  %s2216 = smul.u32 8, %s2215
  %p2217 = scmp.lt.s32.totalorder %s2216, 7
  %s2218 = scalar_select %p2217, %s2216, 7
  %s2219 = smul.addr %s2218, 8
  %s2220 = scalar_lea.vmem %s9, %s2219
  // Predicated region
  $region38: #{lstm_sequence_forward.1} parent=0 // pred_check
    _
  $region39: #{lstm_sequence_forward.1} parent=0 // pred_check_branch
    %2222 = sbr.rel (0) target = $region41
  $region40: #{lstm_sequence_forward.1} parent=0 // pred_region
    _
  $region41: #{lstm_sequence_forward.1} parent=0 // pred_fallthru
    _
  // Predicated region
  $region42: #{lstm_sequence_forward.1} parent=0 // pred_check
    _
  $region43: #{lstm_sequence_forward.1} parent=0 // pred_check_branch
    %2224 = sbr.rel (0) target = $region45
  $region44: #{lstm_sequence_forward.1} parent=0 // pred_region
    %s2225 = ssub.s32 0, 0
    %s2226 = smul.u32 8, %s2225
  $region45: #{lstm_sequence_forward.1} parent=0 // pred_fallthru
    _
  // Predicated region
  $region46: #{lstm_sequence_forward.1} parent=0 // pred_check
    _
  $region47: #{lstm_sequence_forward.1} parent=0 // pred_check_branch
    %2228 = sbr.rel (0) target = $region49
  $region48: #{lstm_sequence_forward.1} parent=0 // pred_region
    _
  $region49: #{lstm_sequence_forward.1} parent=0 // pred_fallthru
    _
  // Predicated region
  $region50: #{lstm_sequence_forward.1} parent=0 // pred_check
    _
  $region51: #{lstm_sequence_forward.1} parent=0 // pred_check_branch
    %2230 = sbr.rel (0) target = $region53
  $region52: #{lstm_sequence_forward.1} parent=0 // pred_region
    %s2231 = ssub.s32 0, 0
    %s2232 = smul.u32 8, %s2231
    %p2233 = scmp.lt.s32.totalorder %s2232, 7
    %s2234 = scalar_select %p2233, %s2232, 7
    %s2235 = smul.addr %s2234, 8
    %s2236 = scalar_lea.vmem %s9, %s2235
  $region53: #{lstm_sequence_forward.1} parent=0 // pred_fallthru
    _

</llo_original>
